<compile_context>
chip_gen: v7x
topology: tpu7x:2x2x1
jax: 0.10.0
libtpu: 0.0.40
codegen_flags: <defaults>
</compile_context>

<pallas_src>
import functools

import jax
import jax.numpy as jnp
from jax import lax
from jax.experimental import pallas as pl
from jax.experimental.pallas import tpu as pltpu


# ----------------------------------------------------------------------------
# Glue: 1-D bilinear (align_corners=True) interpolation matrix
# ----------------------------------------------------------------------------
def _bilinear_matrix(in_size: int, out_size: int) -> jnp.ndarray:
    """(out_size, in_size) matrix A s.t. y = A @ x is 1-D bilinear resize with
    align_corners=True (PyTorch F.interpolate semantics)."""
    if in_size == 1:
        return jnp.ones((out_size, 1), jnp.float32)
    coords = jnp.arange(out_size, dtype=jnp.float32) * (in_size - 1) / (out_size - 1)
    lo = jnp.clip(jnp.floor(coords).astype(jnp.int32), 0, in_size - 2)
    frac = coords - lo.astype(jnp.float32)
    rows = jnp.arange(out_size)
    A = jnp.zeros((out_size, in_size), jnp.float32)
    A = A.at[rows, lo].add(1.0 - frac)
    A = A.at[rows, lo + 1].add(frac)
    return A


# ----------------------------------------------------------------------------
# Fused kernel: bilinear upsample + 3x3 conv (stride 1, pad 1), per batch elem
# ----------------------------------------------------------------------------
def _fused_upsample_conv_kernel(x_ref, bt_ref, w_ref, mask_ref, o_ref, *, wout):
    """x_ref   : (1, Cin, H*W)         NCHW input, spatial flattened (lanes)
       bt_ref  : (H*W, Hout*Wout)      kron(Ay, Ax)^T -- full bilinear operator
       w_ref   : (9, Cout, Cin)        sampled weights, tap-major (ky*3 + kx)
       mask_ref: (9, 1, Hout*Wout)     0/1 boundary masks per tap (pad=1)
       o_ref   : (1, Cout, Hout*Wout)  NCHW output, spatial flattened (lanes)
    """
    hw = bt_ref.shape[1]
    cout = w_ref.shape[1]

    # ---- bilinear upsample of all channels: one lane-dense MXU matmul ----
    up = jnp.dot(x_ref[0], bt_ref[...],
                 preferred_element_type=jnp.float32)          # (Cin, HW)

    # ---- 3x3 conv: 9 taps = lane roll (XLU) * mask (VPU) -> matmul (MXU) ----
    acc = jnp.zeros((cout, hw), jnp.float32)                  # ~8 vregs, no spill
    for dy in (-1, 0, 1):
        for dx in (-1, 0, 1):
            t = (dy + 1) * 3 + (dx + 1)
            if dy == 0 and dx == 0:
                patch = up                                    # center tap: as-is
            else:
                shift = (-(dy * wout + dx)) % hw              # static lane roll
                patch = pltpu.roll(up, shift=shift, axis=1) * mask_ref[t]
            # (Cout, Cin) @ (Cin, Hout*Wout), f32 accumulation on the MXU.
            acc = acc + jnp.dot(w_ref[t], patch,
                                preferred_element_type=jnp.float32)
    o_ref[0] = acc.astype(o_ref.dtype)


# ----------------------------------------------------------------------------
# Wrapper
# ----------------------------------------------------------------------------
def bbb_upsample_conv(x, qw_mean, qw_log_sigma, eps, scale_factor=2):
    """x: (N, Cin, H, W) float32 NCHW.  qw_mean / qw_log_sigma / eps in torch
    layout (Cout, Cin, 3, 3).  Returns (out NCHW (N, Cout, H*s, W*s), kl).

    NOTE: `eps` must be a fresh N(0,1) draw per forward call to match the
    PyTorch module's per-forward weight sampling.
    """
    N, Cin, H, W = x.shape
    Cout = qw_mean.shape[0]
    assert qw_mean.shape == (Cout, Cin, 3, 3)
    Hout, Wout = H * scale_factor, W * scale_factor
    hw_in, hw_out = H * W, Hout * Wout

    # Full 2-D bilinear operator: up_flat = x_flat @ kron(Ay, Ax)^T (exact
    # align_corners=True).  Fine at small spatial sizes; see scaling note above.
    Ay = _bilinear_matrix(H, Hout)                            # (Hout, H)
    Ax = _bilinear_matrix(W, Wout)                            # (Wout, W)
    BT = jnp.kron(Ay, Ax).T.astype(jnp.float32)               # (H*W, Hout*Wout)

    # Sample weights ONCE (hoisted out of the kernel; 9*Cin*Cout elements).
    w = qw_mean + jnp.exp(qw_log_sigma) * eps                 # (Cout, Cin, 3, 3)
    w_taps = jnp.transpose(w, (2, 3, 0, 1)).reshape(9, Cout, Cin)

    # Precompute per-tap boundary masks for the padding=1 conv (static).
    yy, xx = jnp.meshgrid(jnp.arange(Hout), jnp.arange(Wout), indexing="ij")
    masks = []
    for dy in (-1, 0, 1):
        for dx in (-1, 0, 1):
            valid = ((yy + dy >= 0) & (yy + dy < Hout) &
                     (xx + dx >= 0) & (xx + dx < Wout))
            masks.append(valid.reshape(-1))
    tap_mask = jnp.stack(masks).astype(jnp.float32).reshape(9, 1, hw_out)

    x_flat = x.reshape(N, Cin, hw_in).astype(jnp.float32)     # free reshape

    kernel = functools.partial(_fused_upsample_conv_kernel, wout=Wout)
    out_flat = pl.pallas_call(
        kernel,
        out_shape=jax.ShapeDtypeStruct((N, Cout, hw_out), jnp.float32),
        grid=(N,),
        in_specs=[
            pl.BlockSpec((1, Cin, hw_in), lambda n: (n, 0, 0)),
            pl.BlockSpec((hw_in, hw_out), lambda n: (0, 0)),
            pl.BlockSpec((9, Cout, Cin), lambda n: (0, 0, 0)),
            pl.BlockSpec((9, 1, hw_out), lambda n: (0, 0, 0)),
        ],
        out_specs=pl.BlockSpec((1, Cout, hw_out), lambda n: (n, 0, 0)),
        compiler_params=pltpu.CompilerParams(
            dimension_semantics=("parallel",)),
    )(x_flat, BT, w_taps, tap_mask)
    out = out_flat.reshape(N, Cout, Hout, Wout)               # free reshape

    # Closed-form KL( N(mu, sigma) || N(0,1) ) summed over weights: tiny, plain
    # jnp (a dedicated pallas_call launch costs more than the math itself).
    kl = jnp.sum(-qw_log_sigma
                 + 0.5 * (jnp.exp(2.0 * qw_log_sigma) + qw_mean * qw_mean)
                 - 0.5)
    return out, kl


# ----------------------------------------------------------------------------
if __name__ == "__main__":
    key = jax.random.PRNGKey(0)
    k1, k2, k3, k4 = jax.random.split(key, 4)

    N, Cin, H, W = 2, 4, 16, 16     # in_size=4
    Cout = 8                        # out_size=8
    x = jax.random.normal(k1, (N, Cin, H, W), jnp.float32)

    # Deterministic synthetic BBBConv2d parameters (torch layout Cout,Cin,KH,KW)
    qw_mean = 0.1 * jax.random.normal(k2, (Cout, Cin, 3, 3), jnp.float32)
    qw_log_sigma = (jnp.full((Cout, Cin, 3, 3), -3.0, jnp.float32)
                    + 0.01 * jax.random.normal(k3, (Cout, Cin, 3, 3), jnp.float32))
    # One draw of eps (a real training loop would pass a fresh draw per forward)
    eps = jax.random.normal(k4, (Cout, Cin, 3, 3), jnp.float32)

    out, kl = bbb_upsample_conv(x, qw_mean, qw_log_sigma, eps, scale_factor=2)
    out, kl = jax.block_until_ready((out, kl))

    assert out.shape == (N, Cout, 2 * H, 2 * W)
    assert out.dtype == jnp.float32
    assert bool(jnp.isfinite(out).all()) and bool(jnp.isfinite(kl))

    # Cross-check against a pure-JAX reference (same math via XLA ops).
    Ay = _bilinear_matrix(H, 2 * H)
    Ax = _bilinear_matrix(W, 2 * W)
    up_ref = jnp.einsum("yh,nchw,xw->ncyx", Ay, x, Ax,
                        precision=lax.Precision.HIGHEST)
    w_sampled = qw_mean + jnp.exp(qw_log_sigma) * eps
    out_ref = lax.conv_general_dilated(
        up_ref, w_sampled, window_strides=(1, 1), padding=((1, 1), (1, 1)),
        dimension_numbers=("NCHW", "OIHW", "NCHW"),
        precision=lax.Precision.HIGHEST)
    assert bool(jnp.allclose(out, out_ref, atol=1e-2, rtol=1e-2))

    print("KERNEL_OK")
</pallas_src>

<mosaic_0001>
module attributes {stable_mosaic.version = 11 : i64} {
  func.func @_fused_upsample_conv_kernel(%arg0: i32, %arg1: memref<1x4x256xf32, #tpu.memory_space<vmem>>, %arg2: memref<256x1024xf32, #tpu.memory_space<vmem>>, %arg3: memref<9x8x4xf32, #tpu.memory_space<vmem>>, %arg4: memref<9x1x1024xf32, #tpu.memory_space<vmem>>, %arg5: memref<1x8x1024xf32, #tpu.memory_space<vmem>>) attributes {dimension_semantics = [#tpu.dimension_semantics<parallel>], iteration_bounds = array<i64: 2>, scalar_prefetch = 0 : i64, scratch_operands = 0 : i64, tpu.core_type = #tpu.core_type<tc>, window_params = [{transform_indices = @transform_0, window_bounds = array<i64: 1, 4, 256>}, {pipeline_mode = #tpu.pipeline_mode<synchronous>, transform_indices = @transform_1, window_bounds = array<i64: 256, 1024>}, {pipeline_mode = #tpu.pipeline_mode<synchronous>, transform_indices = @transform_2, window_bounds = array<i64: 9, 8, 4>}, {pipeline_mode = #tpu.pipeline_mode<synchronous>, transform_indices = @transform_3, window_bounds = array<i64: 9, 1, 1024>}, {transform_indices = @transform_4, window_bounds = array<i64: 1, 8, 1024>}]} {
    %c0 = arith.constant 0 : index
    %c0_0 = arith.constant 0 : index
    %c0_1 = arith.constant 0 : index
    %0 = vector.load %arg1[%c0, %c0_0, %c0_1] : memref<1x4x256xf32, #tpu.memory_space<vmem>>, vector<1x4x256xf32>
    %1 = vector.shape_cast %0 : vector<1x4x256xf32> to vector<4x256xf32>
    %c0_2 = arith.constant 0 : index
    %c0_3 = arith.constant 0 : index
    %2 = vector.load %arg2[%c0_2, %c0_3] : memref<256x1024xf32, #tpu.memory_space<vmem>>, vector<256x1024xf32>
    %cst = arith.constant dense<0.000000e+00> : vector<4x1024xf32>
    %3 = tpu.matmul %1, %2, %cst {dimension_numbers = #tpu.dot_dimension_numbers<[1], [0], [0], [1], [0, 0, 1, 1], [], []>} : vector<4x256xf32>, vector<256x1024xf32>, vector<4x1024xf32> -> vector<4x1024xf32>
    %cst_4 = arith.constant 0.000000e+00 : f32
    %4 = vector.broadcast %cst_4 : f32 to vector<8x1024xf32>
    %c33_i32 = arith.constant 33 : i32
    %5 = tpu.dynamic_rotate %3 by %c33_i32 dim 1 : vector<4x1024xf32>, i32 -> vector<4x1024xf32>
    %c0_5 = arith.constant 0 : index
    %c0_6 = arith.constant 0 : index
    %c0_7 = arith.constant 0 : index
    %6 = vector.load %arg4[%c0_5, %c0_6, %c0_7] : memref<9x1x1024xf32, #tpu.memory_space<vmem>>, vector<1x1x1024xf32>
    %7 = vector.shape_cast %6 : vector<1x1x1024xf32> to vector<1x1024xf32>
    %8 = vector.broadcast %7 : vector<1x1024xf32> to vector<4x1024xf32>
    %9 = arith.mulf %5, %8 : vector<4x1024xf32>
    %c0_8 = arith.constant 0 : index
    %c0_9 = arith.constant 0 : index
    %c0_10 = arith.constant 0 : index
    %10 = vector.load %arg3[%c0_8, %c0_9, %c0_10] : memref<9x8x4xf32, #tpu.memory_space<vmem>>, vector<1x8x4xf32>
    %11 = vector.shape_cast %10 : vector<1x8x4xf32> to vector<8x4xf32>
    %cst_11 = arith.constant dense<0.000000e+00> : vector<8x1024xf32>
    %12 = tpu.matmul %11, %9, %cst_11 {dimension_numbers = #tpu.dot_dimension_numbers<[1], [0], [0], [1], [0, 0, 1, 1], [], []>} : vector<8x4xf32>, vector<4x1024xf32>, vector<8x1024xf32> -> vector<8x1024xf32>
    %13 = arith.addf %4, %12 : vector<8x1024xf32>
    %c32_i32 = arith.constant 32 : i32
    %14 = tpu.dynamic_rotate %3 by %c32_i32 dim 1 : vector<4x1024xf32>, i32 -> vector<4x1024xf32>
    %c1 = arith.constant 1 : index
    %c0_12 = arith.constant 0 : index
    %c0_13 = arith.constant 0 : index
    %15 = vector.load %arg4[%c1, %c0_12, %c0_13] : memref<9x1x1024xf32, #tpu.memory_space<vmem>>, vector<1x1x1024xf32>
    %16 = vector.shape_cast %15 : vector<1x1x1024xf32> to vector<1x1024xf32>
    %17 = vector.broadcast %16 : vector<1x1024xf32> to vector<4x1024xf32>
    %18 = arith.mulf %14, %17 : vector<4x1024xf32>
    %c1_14 = arith.constant 1 : index
    %c0_15 = arith.constant 0 : index
    %c0_16 = arith.constant 0 : index
    %19 = vector.load %arg3[%c1_14, %c0_15, %c0_16] : memref<9x8x4xf32, #tpu.memory_space<vmem>>, vector<1x8x4xf32>
    %20 = vector.shape_cast %19 : vector<1x8x4xf32> to vector<8x4xf32>
    %cst_17 = arith.constant dense<0.000000e+00> : vector<8x1024xf32>
    %21 = tpu.matmul %20, %18, %cst_17 {dimension_numbers = #tpu.dot_dimension_numbers<[1], [0], [0], [1], [0, 0, 1, 1], [], []>} : vector<8x4xf32>, vector<4x1024xf32>, vector<8x1024xf32> -> vector<8x1024xf32>
    %22 = arith.addf %13, %21 : vector<8x1024xf32>
    %c31_i32 = arith.constant 31 : i32
    %23 = tpu.dynamic_rotate %3 by %c31_i32 dim 1 : vector<4x1024xf32>, i32 -> vector<4x1024xf32>
    %c2 = arith.constant 2 : index
    %c0_18 = arith.constant 0 : index
    %c0_19 = arith.constant 0 : index
    %24 = vector.load %arg4[%c2, %c0_18, %c0_19] : memref<9x1x1024xf32, #tpu.memory_space<vmem>>, vector<1x1x1024xf32>
    %25 = vector.shape_cast %24 : vector<1x1x1024xf32> to vector<1x1024xf32>
    %26 = vector.broadcast %25 : vector<1x1024xf32> to vector<4x1024xf32>
    %27 = arith.mulf %23, %26 : vector<4x1024xf32>
    %c2_20 = arith.constant 2 : index
    %c0_21 = arith.constant 0 : index
    %c0_22 = arith.constant 0 : index
    %28 = vector.load %arg3[%c2_20, %c0_21, %c0_22] : memref<9x8x4xf32, #tpu.memory_space<vmem>>, vector<1x8x4xf32>
    %29 = vector.shape_cast %28 : vector<1x8x4xf32> to vector<8x4xf32>
    %cst_23 = arith.constant dense<0.000000e+00> : vector<8x1024xf32>
    %30 = tpu.matmul %29, %27, %cst_23 {dimension_numbers = #tpu.dot_dimension_numbers<[1], [0], [0], [1], [0, 0, 1, 1], [], []>} : vector<8x4xf32>, vector<4x1024xf32>, vector<8x1024xf32> -> vector<8x1024xf32>
    %31 = arith.addf %22, %30 : vector<8x1024xf32>
    %c1_i32 = arith.constant 1 : i32
    %32 = tpu.dynamic_rotate %3 by %c1_i32 dim 1 : vector<4x1024xf32>, i32 -> vector<4x1024xf32>
    %c3 = arith.constant 3 : index
    %c0_24 = arith.constant 0 : index
    %c0_25 = arith.constant 0 : index
    %33 = vector.load %arg4[%c3, %c0_24, %c0_25] : memref<9x1x1024xf32, #tpu.memory_space<vmem>>, vector<1x1x1024xf32>
    %34 = vector.shape_cast %33 : vector<1x1x1024xf32> to vector<1x1024xf32>
    %35 = vector.broadcast %34 : vector<1x1024xf32> to vector<4x1024xf32>
    %36 = arith.mulf %32, %35 : vector<4x1024xf32>
    %c3_26 = arith.constant 3 : index
    %c0_27 = arith.constant 0 : index
    %c0_28 = arith.constant 0 : index
    %37 = vector.load %arg3[%c3_26, %c0_27, %c0_28] : memref<9x8x4xf32, #tpu.memory_space<vmem>>, vector<1x8x4xf32>
    %38 = vector.shape_cast %37 : vector<1x8x4xf32> to vector<8x4xf32>
    %cst_29 = arith.constant dense<0.000000e+00> : vector<8x1024xf32>
    %39 = tpu.matmul %38, %36, %cst_29 {dimension_numbers = #tpu.dot_dimension_numbers<[1], [0], [0], [1], [0, 0, 1, 1], [], []>} : vector<8x4xf32>, vector<4x1024xf32>, vector<8x1024xf32> -> vector<8x1024xf32>
    %40 = arith.addf %31, %39 : vector<8x1024xf32>
    %c4 = arith.constant 4 : index
    %c0_30 = arith.constant 0 : index
    %c0_31 = arith.constant 0 : index
    %41 = vector.load %arg3[%c4, %c0_30, %c0_31] : memref<9x8x4xf32, #tpu.memory_space<vmem>>, vector<1x8x4xf32>
    %42 = vector.shape_cast %41 : vector<1x8x4xf32> to vector<8x4xf32>
    %cst_32 = arith.constant dense<0.000000e+00> : vector<8x1024xf32>
    %43 = tpu.matmul %42, %3, %cst_32 {dimension_numbers = #tpu.dot_dimension_numbers<[1], [0], [0], [1], [0, 0, 1, 1], [], []>} : vector<8x4xf32>, vector<4x1024xf32>, vector<8x1024xf32> -> vector<8x1024xf32>
    %44 = arith.addf %40, %43 : vector<8x1024xf32>
    %c1023_i32 = arith.constant 1023 : i32
    %45 = tpu.dynamic_rotate %3 by %c1023_i32 dim 1 : vector<4x1024xf32>, i32 -> vector<4x1024xf32>
    %c5 = arith.constant 5 : index
    %c0_33 = arith.constant 0 : index
    %c0_34 = arith.constant 0 : index
    %46 = vector.load %arg4[%c5, %c0_33, %c0_34] : memref<9x1x1024xf32, #tpu.memory_space<vmem>>, vector<1x1x1024xf32>
    %47 = vector.shape_cast %46 : vector<1x1x1024xf32> to vector<1x1024xf32>
    %48 = vector.broadcast %47 : vector<1x1024xf32> to vector<4x1024xf32>
    %49 = arith.mulf %45, %48 : vector<4x1024xf32>
    %c5_35 = arith.constant 5 : index
    %c0_36 = arith.constant 0 : index
    %c0_37 = arith.constant 0 : index
    %50 = vector.load %arg3[%c5_35, %c0_36, %c0_37] : memref<9x8x4xf32, #tpu.memory_space<vmem>>, vector<1x8x4xf32>
    %51 = vector.shape_cast %50 : vector<1x8x4xf32> to vector<8x4xf32>
    %cst_38 = arith.constant dense<0.000000e+00> : vector<8x1024xf32>
    %52 = tpu.matmul %51, %49, %cst_38 {dimension_numbers = #tpu.dot_dimension_numbers<[1], [0], [0], [1], [0, 0, 1, 1], [], []>} : vector<8x4xf32>, vector<4x1024xf32>, vector<8x1024xf32> -> vector<8x1024xf32>
    %53 = arith.addf %44, %52 : vector<8x1024xf32>
    %c993_i32 = arith.constant 993 : i32
    %54 = tpu.dynamic_rotate %3 by %c993_i32 dim 1 : vector<4x1024xf32>, i32 -> vector<4x1024xf32>
    %c6 = arith.constant 6 : index
    %c0_39 = arith.constant 0 : index
    %c0_40 = arith.constant 0 : index
    %55 = vector.load %arg4[%c6, %c0_39, %c0_40] : memref<9x1x1024xf32, #tpu.memory_space<vmem>>, vector<1x1x1024xf32>
    %56 = vector.shape_cast %55 : vector<1x1x1024xf32> to vector<1x1024xf32>
    %57 = vector.broadcast %56 : vector<1x1024xf32> to vector<4x1024xf32>
    %58 = arith.mulf %54, %57 : vector<4x1024xf32>
    %c6_41 = arith.constant 6 : index
    %c0_42 = arith.constant 0 : index
    %c0_43 = arith.constant 0 : index
    %59 = vector.load %arg3[%c6_41, %c0_42, %c0_43] : memref<9x8x4xf32, #tpu.memory_space<vmem>>, vector<1x8x4xf32>
    %60 = vector.shape_cast %59 : vector<1x8x4xf32> to vector<8x4xf32>
    %cst_44 = arith.constant dense<0.000000e+00> : vector<8x1024xf32>
    %61 = tpu.matmul %60, %58, %cst_44 {dimension_numbers = #tpu.dot_dimension_numbers<[1], [0], [0], [1], [0, 0, 1, 1], [], []>} : vector<8x4xf32>, vector<4x1024xf32>, vector<8x1024xf32> -> vector<8x1024xf32>
    %62 = arith.addf %53, %61 : vector<8x1024xf32>
    %c992_i32 = arith.constant 992 : i32
    %63 = tpu.dynamic_rotate %3 by %c992_i32 dim 1 : vector<4x1024xf32>, i32 -> vector<4x1024xf32>
    %c7 = arith.constant 7 : index
    %c0_45 = arith.constant 0 : index
    %c0_46 = arith.constant 0 : index
    %64 = vector.load %arg4[%c7, %c0_45, %c0_46] : memref<9x1x1024xf32, #tpu.memory_space<vmem>>, vector<1x1x1024xf32>
    %65 = vector.shape_cast %64 : vector<1x1x1024xf32> to vector<1x1024xf32>
    %66 = vector.broadcast %65 : vector<1x1024xf32> to vector<4x1024xf32>
    %67 = arith.mulf %63, %66 : vector<4x1024xf32>
    %c7_47 = arith.constant 7 : index
    %c0_48 = arith.constant 0 : index
    %c0_49 = arith.constant 0 : index
    %68 = vector.load %arg3[%c7_47, %c0_48, %c0_49] : memref<9x8x4xf32, #tpu.memory_space<vmem>>, vector<1x8x4xf32>
    %69 = vector.shape_cast %68 : vector<1x8x4xf32> to vector<8x4xf32>
    %cst_50 = arith.constant dense<0.000000e+00> : vector<8x1024xf32>
    %70 = tpu.matmul %69, %67, %cst_50 {dimension_numbers = #tpu.dot_dimension_numbers<[1], [0], [0], [1], [0, 0, 1, 1], [], []>} : vector<8x4xf32>, vector<4x1024xf32>, vector<8x1024xf32> -> vector<8x1024xf32>
    %71 = arith.addf %62, %70 : vector<8x1024xf32>
    %c991_i32 = arith.constant 991 : i32
    %72 = tpu.dynamic_rotate %3 by %c991_i32 dim 1 : vector<4x1024xf32>, i32 -> vector<4x1024xf32>
    %c8 = arith.constant 8 : index
    %c0_51 = arith.constant 0 : index
    %c0_52 = arith.constant 0 : index
    %73 = vector.load %arg4[%c8, %c0_51, %c0_52] : memref<9x1x1024xf32, #tpu.memory_space<vmem>>, vector<1x1x1024xf32>
    %74 = vector.shape_cast %73 : vector<1x1x1024xf32> to vector<1x1024xf32>
    %75 = vector.broadcast %74 : vector<1x1024xf32> to vector<4x1024xf32>
    %76 = arith.mulf %72, %75 : vector<4x1024xf32>
    %c8_53 = arith.constant 8 : index
    %c0_54 = arith.constant 0 : index
    %c0_55 = arith.constant 0 : index
    %77 = vector.load %arg3[%c8_53, %c0_54, %c0_55] : memref<9x8x4xf32, #tpu.memory_space<vmem>>, vector<1x8x4xf32>
    %78 = vector.shape_cast %77 : vector<1x8x4xf32> to vector<8x4xf32>
    %cst_56 = arith.constant dense<0.000000e+00> : vector<8x1024xf32>
    %79 = tpu.matmul %78, %76, %cst_56 {dimension_numbers = #tpu.dot_dimension_numbers<[1], [0], [0], [1], [0, 0, 1, 1], [], []>} : vector<8x4xf32>, vector<4x1024xf32>, vector<8x1024xf32> -> vector<8x1024xf32>
    %80 = arith.addf %71, %79 : vector<8x1024xf32>
    %c0_57 = arith.constant 0 : index
    %c0_58 = arith.constant 0 : index
    %c0_59 = arith.constant 0 : index
    %81 = vector.load %arg5[%c0_57, %c0_58, %c0_59] : memref<1x8x1024xf32, #tpu.memory_space<vmem>>, vector<1x8x1024xf32>
    %82 = vector.shape_cast %81 : vector<1x8x1024xf32> to vector<8x1024xf32>
    %83 = vector.shape_cast %80 : vector<8x1024xf32> to vector<1x8x1024xf32>
    tpu.vector_store %arg5[%c0_57, %c0_58, %c0_59], %83 {strides = array<i32>} : memref<1x8x1024xf32, #tpu.memory_space<vmem>>, vector<1x8x1024xf32>,
    return
  }
  func.func @transform_0(%arg0: i32) -> (i32, i32, i32) {
    %c0_i32 = arith.constant 0 : i32
    %c0_i32_0 = arith.constant 0 : i32
    %c0_i32_1 = arith.constant 0 : i32
    return %arg0, %c0_i32, %c0_i32_0 : i32, i32, i32
  }
  func.func @transform_1(%arg0: i32) -> (i32, i32) {
    %c0_i32 = arith.constant 0 : i32
    %c0_i32_0 = arith.constant 0 : i32
    %c0_i32_1 = arith.constant 0 : i32
    return %c0_i32, %c0_i32_0 : i32, i32
  }
  func.func @transform_2(%arg0: i32) -> (i32, i32, i32) {
    %c0_i32 = arith.constant 0 : i32
    %c0_i32_0 = arith.constant 0 : i32
    %c0_i32_1 = arith.constant 0 : i32
    %c0_i32_2 = arith.constant 0 : i32
    return %c0_i32, %c0_i32_0, %c0_i32_1 : i32, i32, i32
  }
  func.func @transform_3(%arg0: i32) -> (i32, i32, i32) {
    %c0_i32 = arith.constant 0 : i32
    %c0_i32_0 = arith.constant 0 : i32
    %c0_i32_1 = arith.constant 0 : i32
    %c0_i32_2 = arith.constant 0 : i32
    return %c0_i32, %c0_i32_0, %c0_i32_1 : i32, i32, i32
  }
  func.func @transform_4(%arg0: i32) -> (i32, i32, i32) {
    %c0_i32 = arith.constant 0 : i32
    %c0_i32_0 = arith.constant 0 : i32
    %c0_i32_1 = arith.constant 0 : i32
    return %arg0, %c0_i32, %c0_i32_0 : i32, i32, i32
  }
}

</mosaic_0001>

<llo_original>
// kernel: tpu_custom_call.1
$region0: #{tpu_custom_call.1}
  #allocation0 [shape = 'u32[]', space=smem, size = 0x4, offset = 0x4, fixed_abs, tag = 'smem constant byte address 0x4 - core index']
  #allocation1 [shape = 'u32[144,128]{1,0:T(1,128)}', space=vmem, size = 0x12000, scoped, tag = 'internal scratch']
  %s0 = inlined_call_operand.vmem [shape: f32[2,4,256], index: 0, kind: input, shape index: {}]
  %s1 = inlined_call_operand.hbm [shape: f32[256,1024], index: 1, kind: input, shape index: {}]
  %s2 = inlined_call_operand.vmem [shape: f32[9,8,4], index: 2, kind: input, shape index: {}]
  %s3 = inlined_call_operand.vmem [shape: f32[9,1,1024], index: 3, kind: input, shape index: {}]
  %s4 = inlined_call_operand.hbm [shape: f32[2,8,1024], index: 4, kind: output, shape index: {}]
  %s5 = sld [smem:[#allocation0]]
  $region53: #{tpu_custom_call.1} parent=0
    _
  %s7 = ssub.s32 1, %s5
  %s8 = scalar_select 0, %s7, %s5
  $region1: #{tpu_custom_call.1} parent=0
    #allocation2 [shape = 'u8[1048576]{0}', space=vmem, size = 0x100000, scoped, tag = 'input window, operand 1, single buffered']
    #allocation3 [shape = 's32[2]{0}', space=sflag, size = 0x8, scoped, tag = 'scoped memory for tpu_custom_call.1']
    #allocation4 [shape = 's32[2]{0}', space=sflag, size = 0x8, scoped, tag = 'scoped memory for tpu_custom_call.1']
    #allocation5 [shape = 'u8[65536]{0}', space=vmem, size = 0x10000, scoped, tag = 'output window, operand 0']
    %9 = vsyncpa [#allocation3], 0
    %10 = vsyncpa [#allocation4], 0
    %s11 = scalar_lea.sflag [#allocation4], 1
    %12 = vsyncpa %s11, 0
    loop: start=0, step=1, limit=4
    $region2: #{tpu_custom_call.1} parent=1 // loop_pre_header
      _
    $region3: #{tpu_custom_call.1} parent=1 // loop_header
      %s14 = sphi 0, %s18
      %p15 = scmp.ge.s32.totalorder %s14, 4
      %s24 = sphi 0, %s26
      %s27 = sphi 0, %s24
      %s28 = sphi 0, %s27
      %s44 = sphi 0, %s28
      %s48 = sphi 0, %s48
      %s50 = sphi 0, %s48
      %s51 = sphi 0, %s50
      %s65 = sphi 0, %s51
      %s69 = sphi 0, %s69
      %s71 = sphi 0, %s69
      %s72 = sphi 0, %s71
      %s86 = sphi 0, %s72
      %s90 = sphi 0, %s90
      %s92 = sphi 0, %s90
      %s93 = sphi 0, %s92
      %s107 = sphi 0, %s93
      %s113 = sphi 0, %s115
      %s116 = sphi 0, %s113
      %s117 = sphi 0, %s116
      %s133 = sphi 0, %s117
    $region4: #{tpu_custom_call.1} parent=1 // loop_header_branch
      %17 = sbr.rel (%p15) target = $region8
    $region5: #{tpu_custom_call.1} parent=1 // loop_body
      %s19 = ssub.s32 %s14, 1
      %s20 = ssub.s32 %s14, 2
      %s21 = sadd.s32 %s14, 1
      %s22 = ssub.s32 %s14, %s21
      %p23 = scmp.eq.s32.totalorder %s22, 0
      %s25 = sadd.s32 %s24, 1
      %s26 = scalar_select %p23, %s24, %s25
      %p29 = pneg %p23
      %p30 = scmp.eq.s32.totalorder %s14, 1
      %p31 = por %p29, %p30
      %p32 = scmp.ne.s32.totalorder %s24, %s27
      %p33 = scmp.eq.s32.totalorder %s14, 0
      %p34 = por %p32, %p33
      %p35 = scmp.ne.s32.totalorder %s24, %s27
      %p36 = scmp.eq.s32.totalorder %s19, 1
      %p37 = por %p35, %p36
      %p38 = scmp.ne.s32.totalorder %s27, %s28
      %p39 = scmp.eq.s32.totalorder %s19, 0
      %p40 = por %p38, %p39
      %p41 = scmp.ne.s32.totalorder %s27, %s28
      %p42 = scmp.eq.s32.totalorder %s20, 1
      %p43 = por %p41, %p42
      %p45 = scmp.ne.s32.totalorder %s28, %s44
      %p46 = scmp.eq.s32.totalorder %s20, 0
      %p47 = por %p45, %p46
      %s49 = sadd.s32 %s48, 1
      %p52 = scmp.eq.s32.totalorder %s14, 1
      %p53 = scmp.ne.s32.totalorder %s48, %s50
      %p54 = scmp.eq.s32.totalorder %s14, 0
      %p55 = por %p53, %p54
      %p56 = scmp.ne.s32.totalorder %s48, %s50
      %p57 = scmp.eq.s32.totalorder %s19, 1
      %p58 = por %p56, %p57
      %p59 = scmp.ne.s32.totalorder %s50, %s51
      %p60 = scmp.eq.s32.totalorder %s19, 0
      %p61 = por %p59, %p60
      %p62 = scmp.ne.s32.totalorder %s50, %s51
      %p63 = scmp.eq.s32.totalorder %s20, 1
      %p64 = por %p62, %p63
      %p66 = scmp.ne.s32.totalorder %s51, %s65
      %p67 = scmp.eq.s32.totalorder %s20, 0
      %p68 = por %p66, %p67
      %s70 = sadd.s32 %s69, 1
      %p73 = scmp.eq.s32.totalorder %s14, 1
      %p74 = scmp.ne.s32.totalorder %s69, %s71
      %p75 = scmp.eq.s32.totalorder %s14, 0
      %p76 = por %p74, %p75
      %p77 = scmp.ne.s32.totalorder %s69, %s71
      %p78 = scmp.eq.s32.totalorder %s19, 1
      %p79 = por %p77, %p78
      %p80 = scmp.ne.s32.totalorder %s71, %s72
      %p81 = scmp.eq.s32.totalorder %s19, 0
      %p82 = por %p80, %p81
      %p83 = scmp.ne.s32.totalorder %s71, %s72
      %p84 = scmp.eq.s32.totalorder %s20, 1
      %p85 = por %p83, %p84
      %p87 = scmp.ne.s32.totalorder %s72, %s86
      %p88 = scmp.eq.s32.totalorder %s20, 0
      %p89 = por %p87, %p88
      %s91 = sadd.s32 %s90, 1
      %p94 = scmp.eq.s32.totalorder %s14, 1
      %p95 = scmp.ne.s32.totalorder %s90, %s92
      %p96 = scmp.eq.s32.totalorder %s14, 0
      %p97 = por %p95, %p96
      %p98 = scmp.ne.s32.totalorder %s90, %s92
      %p99 = scmp.eq.s32.totalorder %s19, 1
      %p100 = por %p98, %p99
      %p101 = scmp.ne.s32.totalorder %s92, %s93
      %p102 = scmp.eq.s32.totalorder %s19, 0
      %p103 = por %p101, %p102
      %p104 = scmp.ne.s32.totalorder %s92, %s93
      %p105 = scmp.eq.s32.totalorder %s20, 1
      %p106 = por %p104, %p105
      %p108 = scmp.ne.s32.totalorder %s93, %s107
      %p109 = scmp.eq.s32.totalorder %s20, 0
      %p110 = por %p108, %p109
      %s111 = ssub.s32 %s14, %s21
      %p112 = scmp.eq.s32.totalorder %s111, 0
      %s114 = sadd.s32 %s113, 1
      %s115 = scalar_select %p112, %s113, %s114
      %p118 = pneg %p112
      %p119 = scmp.eq.s32.totalorder %s14, 1
      %p120 = por %p118, %p119
      %p121 = scmp.ne.s32.totalorder %s113, %s116
      %p122 = scmp.eq.s32.totalorder %s14, 0
      %p123 = por %p121, %p122
      %p124 = scmp.ne.s32.totalorder %s113, %s116
      %p125 = scmp.eq.s32.totalorder %s19, 1
      %p126 = por %p124, %p125
      %p127 = scmp.ne.s32.totalorder %s116, %s117
      %p128 = scmp.eq.s32.totalorder %s19, 0
      %p129 = por %p127, %p128
      %p130 = scmp.ne.s32.totalorder %s116, %s117
      %p131 = scmp.eq.s32.totalorder %s20, 1
      %p132 = por %p130, %p131
      %p134 = scmp.ne.s32.totalorder %s117, %s133
      %p135 = scmp.eq.s32.totalorder %s20, 0
      %p136 = por %p134, %p135
      %p137 = scmp.le.s32.totalorder 1, %s14
      %p138 = scmp.lt.s32.totalorder %s14, 3
      %p139 = pnand %p137, %p138
      %p140 = pneg %p139
      // Predicated region
      $region9: #{tpu_custom_call.1} parent=5 // pred_check
        _
      $region10: #{tpu_custom_call.1} parent=5 // pred_check_branch
        %142 = sbr.rel (%p139) target = $region12
      $region11: #{tpu_custom_call.1} parent=5 // pred_region
        %s143 = ssub.s32 %s14, 1
        // Predicated region
        $region13: #{tpu_custom_call.1} parent=11 // pred_check
          %p144 = pneg %p61
        $region14: #{tpu_custom_call.1} parent=11 // pred_check_branch
          %146 = sbr.rel (%p144) target = $region16
        $region15: #{tpu_custom_call.1} parent=11 // pred_region
          %s148 = ssub.s32 32768, 32768
          %149 = vsyncadd [#allocation3], %s148
          %s150 = sshll.u32 [#allocation2], 4
          %s151 = int_to_ptr.vmem [resolvable:$true] %s150
          %156 = dma.hbm_to_vmem [thread:$0]  %s1, 32768, %s151, [#allocation3], 1024, 1024, 64
        $region16: #{tpu_custom_call.1} parent=11 // pred_fallthru
          _
        // Predicated region
        $region17: #{tpu_custom_call.1} parent=11 // pred_check
          %p157 = pneg %p82
        $region18: #{tpu_custom_call.1} parent=11 // pred_check_branch
          %159 = sbr.rel (%p157) target = $region20
        $region19: #{tpu_custom_call.1} parent=11 // pred_region
          _
        $region20: #{tpu_custom_call.1} parent=11 // pred_fallthru
          _
        // Predicated region
        $region21: #{tpu_custom_call.1} parent=11 // pred_check
          %p160 = pneg %p103
        $region22: #{tpu_custom_call.1} parent=11 // pred_check_branch
          %162 = sbr.rel (%p160) target = $region24
        $region23: #{tpu_custom_call.1} parent=11 // pred_region
          _
        $region24: #{tpu_custom_call.1} parent=11 // pred_fallthru
          _
      $region12: #{tpu_custom_call.1} parent=5 // pred_fallthru
        _
      %p163 = scmp.lt.s32.totalorder %s14, 2
      // Predicated region
      $region25: #{tpu_custom_call.1} parent=5 // pred_check
        %p164 = pneg %p163
      $region26: #{tpu_custom_call.1} parent=5 // pred_check_branch
        %166 = sbr.rel (%p164) target = $region28
      $region27: #{tpu_custom_call.1} parent=5 // pred_region
        // Predicated region
        $region29: #{tpu_custom_call.1} parent=27 // pred_check
          %p167 = pneg %p34
        $region30: #{tpu_custom_call.1} parent=27 // pred_check_branch
          %169 = sbr.rel (%p167) target = $region32
        $region31: #{tpu_custom_call.1} parent=27 // pred_region
          %p170 = scmp.lt.s32.totalorder %s14, 1
          %s171 = scalar_select %p170, %s14, 1
          %s172 = smul.addr %s171, 2
          %s173 = smul.addr %s172, 4
          %s174 = scalar_lea.vmem %s0, %s173
        $region32: #{tpu_custom_call.1} parent=27 // pred_fallthru
          _
      $region28: #{tpu_custom_call.1} parent=5 // pred_fallthru
        _
      %p175 = scmp.le.s32.totalorder 1, %s14
      %p176 = scmp.lt.s32.totalorder %s14, 3
      %p177 = pnand %p175, %p176
      %p178 = pneg %p177
      // Predicated region
      $region33: #{tpu_custom_call.1} parent=5 // pred_check
        _
      $region34: #{tpu_custom_call.1} parent=5 // pred_check_branch
        %180 = sbr.rel (%p177) target = $region36
      $region35: #{tpu_custom_call.1} parent=5 // pred_region
        %s181 = ssub.s32 %s14, 1
        // Predicated region
        $region37: #{tpu_custom_call.1} parent=35 // pred_check
          %p182 = pneg %p61
        $region38: #{tpu_custom_call.1} parent=35 // pred_check_branch
          %184 = sbr.rel (%p182) target = $region40
        $region39: #{tpu_custom_call.1} parent=35 // pred_region
          %185 = dma.done [#allocation3], 32768
        $region40: #{tpu_custom_call.1} parent=35 // pred_fallthru
          _
        %p186 = scmp.lt.s32.totalorder %s19, 1
        %s187 = scalar_select %p186, %s19, 1
        %s188 = smul.addr %s187, 2
        %s189 = smul.addr %s188, 4
        %s190 = scalar_lea.vmem %s0, %s189
        %p191 = pneg %p40
        %p192 = pneg %p37
        %p193 = pneg %p61
        %p194 = pneg %p58
        %p195 = pneg %p82
        %p196 = pneg %p79
        %p197 = pneg %p103
        %p198 = pneg %p100
        %p199 = pneg %p129
        %p200 = pneg %p126
        %s201 = sand.u32 %s116, 1
        %s202 = scalar_lea.sflag [#allocation4], %s201
        %s203 = sand.u32 %s116, 1
        %s204 = smul.addr %s203, 64
        %s205 = scalar_lea.vmem [#allocation5], %s204
        %p206 = scmp.lt.s32.totalorder %s19, 1
        %s207 = scalar_select %p206, %s19, 1
        %s208 = smul.addr %s207, 2
        %s209 = smul.addr %s208, 4
        %s210 = scalar_lea.vmem %s0, %s209
        %v211 = vld [vmem:[%s210] sm:$0xff]
        %v212 = vld [vmem:[#allocation2] sm:$0xff]
        %v213 = vld [vmem:[#allocation2 + $0x8] sm:$0xff]
        %v214 = vld [vmem:[#allocation2 + $0x10] sm:$0xff]
        %v215 = vld [vmem:[#allocation2 + $0x18] sm:$0xff]
        %v216 = vld [vmem:[#allocation2 + $0x20] sm:$0xff]
        %v217 = vld [vmem:[#allocation2 + $0x28] sm:$0xff]
        %v218 = vld [vmem:[#allocation2 + $0x30] sm:$0xff]
        %v219 = vld [vmem:[#allocation2 + $0x38] sm:$0xff]
        %v220 = vld [vmem:[#allocation2 + $0x40] sm:$0xff]
        %v221 = vld [vmem:[#allocation2 + $0x48] sm:$0xff]
        %v222 = vld [vmem:[#allocation2 + $0x50] sm:$0xff]
        %v223 = vld [vmem:[#allocation2 + $0x58] sm:$0xff]
        %v224 = vld [vmem:[#allocation2 + $0x60] sm:$0xff]
        %v225 = vld [vmem:[#allocation2 + $0x68] sm:$0xff]
        %v226 = vld [vmem:[#allocation2 + $0x70] sm:$0xff]
        %v227 = vld [vmem:[#allocation2 + $0x78] sm:$0xff]
        %v228 = vld [vmem:[#allocation2 + $0x80] sm:$0xff]
        %v229 = vld [vmem:[#allocation2 + $0x88] sm:$0xff]
        %v230 = vld [vmem:[#allocation2 + $0x90] sm:$0xff]
        %v231 = vld [vmem:[#allocation2 + $0x98] sm:$0xff]
        %v232 = vld [vmem:[#allocation2 + $0xa0] sm:$0xff]
        %v233 = vld [vmem:[#allocation2 + $0xa8] sm:$0xff]
        %v234 = vld [vmem:[#allocation2 + $0xb0] sm:$0xff]
        %v235 = vld [vmem:[#allocation2 + $0xb8] sm:$0xff]
        %v236 = vld [vmem:[#allocation2 + $0xc0] sm:$0xff]
        %v237 = vld [vmem:[#allocation2 + $0xc8] sm:$0xff]
        %v238 = vld [vmem:[#allocation2 + $0xd0] sm:$0xff]
        %v239 = vld [vmem:[#allocation2 + $0xd8] sm:$0xff]
        %v240 = vld [vmem:[#allocation2 + $0xe0] sm:$0xff]
        %v241 = vld [vmem:[#allocation2 + $0xe8] sm:$0xff]
        %v242 = vld [vmem:[#allocation2 + $0xf0] sm:$0xff]
        %v243 = vld [vmem:[#allocation2 + $0xf8] sm:$0xff]
        %v244 = vld [vmem:[#allocation2 + $0x100] sm:$0xff]
        %v245 = vld [vmem:[#allocation2 + $0x108] sm:$0xff]
        %v246 = vld [vmem:[#allocation2 + $0x110] sm:$0xff]
        %v247 = vld [vmem:[#allocation2 + $0x118] sm:$0xff]
        %v248 = vld [vmem:[#allocation2 + $0x120] sm:$0xff]
        %v249 = vld [vmem:[#allocation2 + $0x128] sm:$0xff]
        %v250 = vld [vmem:[#allocation2 + $0x130] sm:$0xff]
        %v251 = vld [vmem:[#allocation2 + $0x138] sm:$0xff]
        %v252 = vld [vmem:[#allocation2 + $0x140] sm:$0xff]
        %v253 = vld [vmem:[#allocation2 + $0x148] sm:$0xff]
        %v254 = vld [vmem:[#allocation2 + $0x150] sm:$0xff]
        %v255 = vld [vmem:[#allocation2 + $0x158] sm:$0xff]
        %v256 = vld [vmem:[#allocation2 + $0x160] sm:$0xff]
        %v257 = vld [vmem:[#allocation2 + $0x168] sm:$0xff]
        %v258 = vld [vmem:[#allocation2 + $0x170] sm:$0xff]
        %v259 = vld [vmem:[#allocation2 + $0x178] sm:$0xff]
        %v260 = vld [vmem:[#allocation2 + $0x180] sm:$0xff]
        %v261 = vld [vmem:[#allocation2 + $0x188] sm:$0xff]
        %v262 = vld [vmem:[#allocation2 + $0x190] sm:$0xff]
        %v263 = vld [vmem:[#allocation2 + $0x198] sm:$0xff]
        %v264 = vld [vmem:[#allocation2 + $0x1a0] sm:$0xff]
        %v265 = vld [vmem:[#allocation2 + $0x1a8] sm:$0xff]
        %v266 = vld [vmem:[#allocation2 + $0x1b0] sm:$0xff]
        %v267 = vld [vmem:[#allocation2 + $0x1b8] sm:$0xff]
        %v268 = vld [vmem:[#allocation2 + $0x1c0] sm:$0xff]
        %v269 = vld [vmem:[#allocation2 + $0x1c8] sm:$0xff]
        %v270 = vld [vmem:[#allocation2 + $0x1d0] sm:$0xff]
        %v271 = vld [vmem:[#allocation2 + $0x1d8] sm:$0xff]
        %v272 = vld [vmem:[#allocation2 + $0x1e0] sm:$0xff]
        %v273 = vld [vmem:[#allocation2 + $0x1e8] sm:$0xff]
        %v274 = vld [vmem:[#allocation2 + $0x1f0] sm:$0xff]
        %v275 = vld [vmem:[#allocation2 + $0x1f8] sm:$0xff]
        %v276 = vld [vmem:[#allocation2 + $0x200] sm:$0xff]
        %v277 = vld [vmem:[#allocation2 + $0x208] sm:$0xff]
        %v278 = vld [vmem:[#allocation2 + $0x210] sm:$0xff]
        %v279 = vld [vmem:[#allocation2 + $0x218] sm:$0xff]
        %v280 = vld [vmem:[#allocation2 + $0x220] sm:$0xff]
        %v281 = vld [vmem:[#allocation2 + $0x228] sm:$0xff]
        %v282 = vld [vmem:[#allocation2 + $0x230] sm:$0xff]
        %v283 = vld [vmem:[#allocation2 + $0x238] sm:$0xff]
        %v284 = vld [vmem:[#allocation2 + $0x240] sm:$0xff]
        %v285 = vld [vmem:[#allocation2 + $0x248] sm:$0xff]
        %v286 = vld [vmem:[#allocation2 + $0x250] sm:$0xff]
        %v287 = vld [vmem:[#allocation2 + $0x258] sm:$0xff]
        %v288 = vld [vmem:[#allocation2 + $0x260] sm:$0xff]
        %v289 = vld [vmem:[#allocation2 + $0x268] sm:$0xff]
        %v290 = vld [vmem:[#allocation2 + $0x270] sm:$0xff]
        %v291 = vld [vmem:[#allocation2 + $0x278] sm:$0xff]
        %v292 = vld [vmem:[#allocation2 + $0x280] sm:$0xff]
        %v293 = vld [vmem:[#allocation2 + $0x288] sm:$0xff]
        %v294 = vld [vmem:[#allocation2 + $0x290] sm:$0xff]
        %v295 = vld [vmem:[#allocation2 + $0x298] sm:$0xff]
        %v296 = vld [vmem:[#allocation2 + $0x2a0] sm:$0xff]
        %v297 = vld [vmem:[#allocation2 + $0x2a8] sm:$0xff]
        %v298 = vld [vmem:[#allocation2 + $0x2b0] sm:$0xff]
        %v299 = vld [vmem:[#allocation2 + $0x2b8] sm:$0xff]
        %v300 = vld [vmem:[#allocation2 + $0x2c0] sm:$0xff]
        %v301 = vld [vmem:[#allocation2 + $0x2c8] sm:$0xff]
        %v302 = vld [vmem:[#allocation2 + $0x2d0] sm:$0xff]
        %v303 = vld [vmem:[#allocation2 + $0x2d8] sm:$0xff]
        %v304 = vld [vmem:[#allocation2 + $0x2e0] sm:$0xff]
        %v305 = vld [vmem:[#allocation2 + $0x2e8] sm:$0xff]
        %v306 = vld [vmem:[#allocation2 + $0x2f0] sm:$0xff]
        %v307 = vld [vmem:[#allocation2 + $0x2f8] sm:$0xff]
        %v308 = vld [vmem:[#allocation2 + $0x300] sm:$0xff]
        %v309 = vld [vmem:[#allocation2 + $0x308] sm:$0xff]
        %v310 = vld [vmem:[#allocation2 + $0x310] sm:$0xff]
        %v311 = vld [vmem:[#allocation2 + $0x318] sm:$0xff]
        %v312 = vld [vmem:[#allocation2 + $0x320] sm:$0xff]
        %v313 = vld [vmem:[#allocation2 + $0x328] sm:$0xff]
        %v314 = vld [vmem:[#allocation2 + $0x330] sm:$0xff]
        %v315 = vld [vmem:[#allocation2 + $0x338] sm:$0xff]
        %v316 = vld [vmem:[#allocation2 + $0x340] sm:$0xff]
        %v317 = vld [vmem:[#allocation2 + $0x348] sm:$0xff]
        %v318 = vld [vmem:[#allocation2 + $0x350] sm:$0xff]
        %v319 = vld [vmem:[#allocation2 + $0x358] sm:$0xff]
        %v320 = vld [vmem:[#allocation2 + $0x360] sm:$0xff]
        %v321 = vld [vmem:[#allocation2 + $0x368] sm:$0xff]
        %v322 = vld [vmem:[#allocation2 + $0x370] sm:$0xff]
        %v323 = vld [vmem:[#allocation2 + $0x378] sm:$0xff]
        %v324 = vld [vmem:[#allocation2 + $0x380] sm:$0xff]
        %v325 = vld [vmem:[#allocation2 + $0x388] sm:$0xff]
        %v326 = vld [vmem:[#allocation2 + $0x390] sm:$0xff]
        %v327 = vld [vmem:[#allocation2 + $0x398] sm:$0xff]
        %v328 = vld [vmem:[#allocation2 + $0x3a0] sm:$0xff]
        %v329 = vld [vmem:[#allocation2 + $0x3a8] sm:$0xff]
        %v330 = vld [vmem:[#allocation2 + $0x3b0] sm:$0xff]
        %v331 = vld [vmem:[#allocation2 + $0x3b8] sm:$0xff]
        %v332 = vld [vmem:[#allocation2 + $0x3c0] sm:$0xff]
        %v333 = vld [vmem:[#allocation2 + $0x3c8] sm:$0xff]
        %v334 = vld [vmem:[#allocation2 + $0x3d0] sm:$0xff]
        %v335 = vld [vmem:[#allocation2 + $0x3d8] sm:$0xff]
        %v336 = vld [vmem:[#allocation2 + $0x3e0] sm:$0xff]
        %v337 = vld [vmem:[#allocation2 + $0x3e8] sm:$0xff]
        %v338 = vld [vmem:[#allocation2 + $0x3f0] sm:$0xff]
        %v339 = vld [vmem:[#allocation2 + $0x3f8] sm:$0xff]
        %v340 = vld [vmem:[#allocation2 + $0x400] sm:$0xff]
        %v341 = vld [vmem:[#allocation2 + $0x408] sm:$0xff]
        %v342 = vld [vmem:[#allocation2 + $0x410] sm:$0xff]
        %v343 = vld [vmem:[#allocation2 + $0x418] sm:$0xff]
        %v344 = vld [vmem:[#allocation2 + $0x420] sm:$0xff]
        %v345 = vld [vmem:[#allocation2 + $0x428] sm:$0xff]
        %v346 = vld [vmem:[#allocation2 + $0x430] sm:$0xff]
        %v347 = vld [vmem:[#allocation2 + $0x438] sm:$0xff]
        %v348 = vld [vmem:[#allocation2 + $0x440] sm:$0xff]
        %v349 = vld [vmem:[#allocation2 + $0x448] sm:$0xff]
        %v350 = vld [vmem:[#allocation2 + $0x450] sm:$0xff]
        %v351 = vld [vmem:[#allocation2 + $0x458] sm:$0xff]
        %v352 = vld [vmem:[#allocation2 + $0x460] sm:$0xff]
        %v353 = vld [vmem:[#allocation2 + $0x468] sm:$0xff]
        %v354 = vld [vmem:[#allocation2 + $0x470] sm:$0xff]
        %v355 = vld [vmem:[#allocation2 + $0x478] sm:$0xff]
        %v356 = vld [vmem:[#allocation2 + $0x480] sm:$0xff]
        %v357 = vld [vmem:[#allocation2 + $0x488] sm:$0xff]
        %v358 = vld [vmem:[#allocation2 + $0x490] sm:$0xff]
        %v359 = vld [vmem:[#allocation2 + $0x498] sm:$0xff]
        %v360 = vld [vmem:[#allocation2 + $0x4a0] sm:$0xff]
        %v361 = vld [vmem:[#allocation2 + $0x4a8] sm:$0xff]
        %v362 = vld [vmem:[#allocation2 + $0x4b0] sm:$0xff]
        %v363 = vld [vmem:[#allocation2 + $0x4b8] sm:$0xff]
        %v364 = vld [vmem:[#allocation2 + $0x4c0] sm:$0xff]
        %v365 = vld [vmem:[#allocation2 + $0x4c8] sm:$0xff]
        %v366 = vld [vmem:[#allocation2 + $0x4d0] sm:$0xff]
        %v367 = vld [vmem:[#allocation2 + $0x4d8] sm:$0xff]
        %v368 = vld [vmem:[#allocation2 + $0x4e0] sm:$0xff]
        %v369 = vld [vmem:[#allocation2 + $0x4e8] sm:$0xff]
        %v370 = vld [vmem:[#allocation2 + $0x4f0] sm:$0xff]
        %v371 = vld [vmem:[#allocation2 + $0x4f8] sm:$0xff]
        %v372 = vld [vmem:[#allocation2 + $0x500] sm:$0xff]
        %v373 = vld [vmem:[#allocation2 + $0x508] sm:$0xff]
        %v374 = vld [vmem:[#allocation2 + $0x510] sm:$0xff]
        %v375 = vld [vmem:[#allocation2 + $0x518] sm:$0xff]
        %v376 = vld [vmem:[#allocation2 + $0x520] sm:$0xff]
        %v377 = vld [vmem:[#allocation2 + $0x528] sm:$0xff]
        %v378 = vld [vmem:[#allocation2 + $0x530] sm:$0xff]
        %v379 = vld [vmem:[#allocation2 + $0x538] sm:$0xff]
        %v380 = vld [vmem:[#allocation2 + $0x540] sm:$0xff]
        %v381 = vld [vmem:[#allocation2 + $0x548] sm:$0xff]
        %v382 = vld [vmem:[#allocation2 + $0x550] sm:$0xff]
        %v383 = vld [vmem:[#allocation2 + $0x558] sm:$0xff]
        %v384 = vld [vmem:[#allocation2 + $0x560] sm:$0xff]
        %v385 = vld [vmem:[#allocation2 + $0x568] sm:$0xff]
        %v386 = vld [vmem:[#allocation2 + $0x570] sm:$0xff]
        %v387 = vld [vmem:[#allocation2 + $0x578] sm:$0xff]
        %v388 = vld [vmem:[#allocation2 + $0x580] sm:$0xff]
        %v389 = vld [vmem:[#allocation2 + $0x588] sm:$0xff]
        %v390 = vld [vmem:[#allocation2 + $0x590] sm:$0xff]
        %v391 = vld [vmem:[#allocation2 + $0x598] sm:$0xff]
        %v392 = vld [vmem:[#allocation2 + $0x5a0] sm:$0xff]
        %v393 = vld [vmem:[#allocation2 + $0x5a8] sm:$0xff]
        %v394 = vld [vmem:[#allocation2 + $0x5b0] sm:$0xff]
        %v395 = vld [vmem:[#allocation2 + $0x5b8] sm:$0xff]
        %v396 = vld [vmem:[#allocation2 + $0x5c0] sm:$0xff]
        %v397 = vld [vmem:[#allocation2 + $0x5c8] sm:$0xff]
        %v398 = vld [vmem:[#allocation2 + $0x5d0] sm:$0xff]
        %v399 = vld [vmem:[#allocation2 + $0x5d8] sm:$0xff]
        %v400 = vld [vmem:[#allocation2 + $0x5e0] sm:$0xff]
        %v401 = vld [vmem:[#allocation2 + $0x5e8] sm:$0xff]
        %v402 = vld [vmem:[#allocation2 + $0x5f0] sm:$0xff]
        %v403 = vld [vmem:[#allocation2 + $0x5f8] sm:$0xff]
        %v404 = vld [vmem:[#allocation2 + $0x600] sm:$0xff]
        %v405 = vld [vmem:[#allocation2 + $0x608] sm:$0xff]
        %v406 = vld [vmem:[#allocation2 + $0x610] sm:$0xff]
        %v407 = vld [vmem:[#allocation2 + $0x618] sm:$0xff]
        %v408 = vld [vmem:[#allocation2 + $0x620] sm:$0xff]
        %v409 = vld [vmem:[#allocation2 + $0x628] sm:$0xff]
        %v410 = vld [vmem:[#allocation2 + $0x630] sm:$0xff]
        %v411 = vld [vmem:[#allocation2 + $0x638] sm:$0xff]
        %v412 = vld [vmem:[#allocation2 + $0x640] sm:$0xff]
        %v413 = vld [vmem:[#allocation2 + $0x648] sm:$0xff]
        %v414 = vld [vmem:[#allocation2 + $0x650] sm:$0xff]
        %v415 = vld [vmem:[#allocation2 + $0x658] sm:$0xff]
        %v416 = vld [vmem:[#allocation2 + $0x660] sm:$0xff]
        %v417 = vld [vmem:[#allocation2 + $0x668] sm:$0xff]
        %v418 = vld [vmem:[#allocation2 + $0x670] sm:$0xff]
        %v419 = vld [vmem:[#allocation2 + $0x678] sm:$0xff]
        %v420 = vld [vmem:[#allocation2 + $0x680] sm:$0xff]
        %v421 = vld [vmem:[#allocation2 + $0x688] sm:$0xff]
        %v422 = vld [vmem:[#allocation2 + $0x690] sm:$0xff]
        %v423 = vld [vmem:[#allocation2 + $0x698] sm:$0xff]
        %v424 = vld [vmem:[#allocation2 + $0x6a0] sm:$0xff]
        %v425 = vld [vmem:[#allocation2 + $0x6a8] sm:$0xff]
        %v426 = vld [vmem:[#allocation2 + $0x6b0] sm:$0xff]
        %v427 = vld [vmem:[#allocation2 + $0x6b8] sm:$0xff]
        %v428 = vld [vmem:[#allocation2 + $0x6c0] sm:$0xff]
        %v429 = vld [vmem:[#allocation2 + $0x6c8] sm:$0xff]
        %v430 = vld [vmem:[#allocation2 + $0x6d0] sm:$0xff]
        %v431 = vld [vmem:[#allocation2 + $0x6d8] sm:$0xff]
        %v432 = vld [vmem:[#allocation2 + $0x6e0] sm:$0xff]
        %v433 = vld [vmem:[#allocation2 + $0x6e8] sm:$0xff]
        %v434 = vld [vmem:[#allocation2 + $0x6f0] sm:$0xff]
        %v435 = vld [vmem:[#allocation2 + $0x6f8] sm:$0xff]
        %v436 = vld [vmem:[#allocation2 + $0x700] sm:$0xff]
        %v437 = vld [vmem:[#allocation2 + $0x708] sm:$0xff]
        %v438 = vld [vmem:[#allocation2 + $0x710] sm:$0xff]
        %v439 = vld [vmem:[#allocation2 + $0x718] sm:$0xff]
        %v440 = vld [vmem:[#allocation2 + $0x720] sm:$0xff]
        %v441 = vld [vmem:[#allocation2 + $0x728] sm:$0xff]
        %v442 = vld [vmem:[#allocation2 + $0x730] sm:$0xff]
        %v443 = vld [vmem:[#allocation2 + $0x738] sm:$0xff]
        %v444 = vld [vmem:[#allocation2 + $0x740] sm:$0xff]
        %v445 = vld [vmem:[#allocation2 + $0x748] sm:$0xff]
        %v446 = vld [vmem:[#allocation2 + $0x750] sm:$0xff]
        %v447 = vld [vmem:[#allocation2 + $0x758] sm:$0xff]
        %v448 = vld [vmem:[#allocation2 + $0x760] sm:$0xff]
        %v449 = vld [vmem:[#allocation2 + $0x768] sm:$0xff]
        %v450 = vld [vmem:[#allocation2 + $0x770] sm:$0xff]
        %v451 = vld [vmem:[#allocation2 + $0x778] sm:$0xff]
        %v452 = vld [vmem:[#allocation2 + $0x780] sm:$0xff]
        %v453 = vld [vmem:[#allocation2 + $0x788] sm:$0xff]
        %v454 = vld [vmem:[#allocation2 + $0x790] sm:$0xff]
        %v455 = vld [vmem:[#allocation2 + $0x798] sm:$0xff]
        %v456 = vld [vmem:[#allocation2 + $0x7a0] sm:$0xff]
        %v457 = vld [vmem:[#allocation2 + $0x7a8] sm:$0xff]
        %v458 = vld [vmem:[#allocation2 + $0x7b0] sm:$0xff]
        %v459 = vld [vmem:[#allocation2 + $0x7b8] sm:$0xff]
        %v460 = vld [vmem:[#allocation2 + $0x7c0] sm:$0xff]
        %v461 = vld [vmem:[#allocation2 + $0x7c8] sm:$0xff]
        %v462 = vld [vmem:[#allocation2 + $0x7d0] sm:$0xff]
        %v463 = vld [vmem:[#allocation2 + $0x7d8] sm:$0xff]
        %v464 = vld [vmem:[#allocation2 + $0x7e0] sm:$0xff]
        %v465 = vld [vmem:[#allocation2 + $0x7e8] sm:$0xff]
        %v466 = vld [vmem:[#allocation2 + $0x7f0] sm:$0xff]
        %v467 = vld [vmem:[#allocation2 + $0x7f8] sm:$0xff]
        %v469 = vcombine.high %v211, %v211
        %471 = vmatprep.subr.mxu0 %v213
        %472 = vmatpush1.msra.mxu0 %v212
        %473 = vmatprep.subr.mxu0 %v221
        %474 = vmatpush1.msra.mxu0 %v220
        %475 = vmatprep.subr.mxu0 %v229
        %476 = vmatpush1.msra.mxu0 %v228
        %477 = vmatprep.subr.mxu0 %v237
        %478 = vmatpush1.msra.mxu0 %v236
        %479 = vmatprep.subr.mxu0 %v245
        %480 = vmatpush1.msra.mxu0 %v244
        %481 = vmatprep.subr.mxu0 %v253
        %482 = vmatpush1.msra.mxu0 %v252
        %483 = vmatprep.subr.mxu0 %v261
        %484 = vmatpush1.msra.mxu0 %v260
        %485 = vmatprep.subr.mxu0 %v269
        %486 = vmatpush1.msra.mxu0 %v268
        %487 = vmatprep.subr.mxu0 %v277
        %488 = vmatpush1.msra.mxu0 %v276
        %489 = vmatprep.subr.mxu0 %v285
        %490 = vmatpush1.msra.mxu0 %v284
        %491 = vmatprep.subr.mxu0 %v293
        %492 = vmatpush1.msra.mxu0 %v292
        %493 = vmatprep.subr.mxu0 %v301
        %494 = vmatpush1.msra.mxu0 %v300
        %495 = vmatprep.subr.mxu0 %v309
        %496 = vmatpush1.msra.mxu0 %v308
        %497 = vmatprep.subr.mxu0 %v317
        %498 = vmatpush1.msra.mxu0 %v316
        %499 = vmatprep.subr.mxu0 %v325
        %500 = vmatpush1.msra.mxu0 %v324
        %501 = vmatprep.subr.mxu0 %v333
        %502 = vmatpush1.msra.mxu0 %v332
        %503 = vmatprep.subr.mxu0 %v341
        %504 = vmatpush1.msra.mxu0 %v340
        %505 = vmatprep.subr.mxu0 %v349
        %506 = vmatpush1.msra.mxu0 %v348
        %507 = vmatprep.subr.mxu0 %v357
        %508 = vmatpush1.msra.mxu0 %v356
        %509 = vmatprep.subr.mxu0 %v365
        %510 = vmatpush1.msra.mxu0 %v364
        %511 = vmatprep.subr.mxu0 %v373
        %512 = vmatpush1.msra.mxu0 %v372
        %513 = vmatprep.subr.mxu0 %v381
        %514 = vmatpush1.msra.mxu0 %v380
        %515 = vmatprep.subr.mxu0 %v389
        %516 = vmatpush1.msra.mxu0 %v388
        %517 = vmatprep.subr.mxu0 %v397
        %518 = vmatpush1.msra.mxu0 %v396
        %519 = vmatprep.subr.mxu0 %v405
        %520 = vmatpush1.msra.mxu0 %v404
        %521 = vmatprep.subr.mxu0 %v413
        %522 = vmatpush1.msra.mxu0 %v412
        %523 = vmatprep.subr.mxu0 %v421
        %524 = vmatpush1.msra.mxu0 %v420
        %525 = vmatprep.subr.mxu0 %v429
        %526 = vmatpush1.msra.mxu0 %v428
        %527 = vmatprep.subr.mxu0 %v437
        %528 = vmatpush1.msra.mxu0 %v436
        %529 = vmatprep.subr.mxu0 %v445
        %530 = vmatpush1.msra.mxu0 %v444
        %531 = vmatprep.subr.mxu0 %v453
        %532 = vmatpush1.msra.mxu0 %v452
        %533 = vmatprep.subr.mxu0 %v461
        %534 = vmatpush1.msra.mxu0 %v460
        %535 = vmatprep.mubr.f32.mxu0 %v469
        %536 = vmatmul.mubr.f32.gmra.mrb[0].mxu0 %v211
        %v537 = vpop.f32.mrb[0].mxu0
        %v538 = vadd.f32 0.0, %v537
        %v539 = vpop.f32.mrb[0].mxu0
        %v540 = vadd.f32 0.0, %v539
        %541 = vdwg.mxu0
        %542 = vmatprep.subr.mxu0 %v215
        %543 = vmatpush1.msra.mxu0 %v214
        %544 = vmatprep.subr.mxu0 %v223
        %545 = vmatpush1.msra.mxu0 %v222
        %546 = vmatprep.subr.mxu0 %v231
        %547 = vmatpush1.msra.mxu0 %v230
        %548 = vmatprep.subr.mxu0 %v239
        %549 = vmatpush1.msra.mxu0 %v238
        %550 = vmatprep.subr.mxu0 %v247
        %551 = vmatpush1.msra.mxu0 %v246
        %552 = vmatprep.subr.mxu0 %v255
        %553 = vmatpush1.msra.mxu0 %v254
        %554 = vmatprep.subr.mxu0 %v263
        %555 = vmatpush1.msra.mxu0 %v262
        %556 = vmatprep.subr.mxu0 %v271
        %557 = vmatpush1.msra.mxu0 %v270
        %558 = vmatprep.subr.mxu0 %v279
        %559 = vmatpush1.msra.mxu0 %v278
        %560 = vmatprep.subr.mxu0 %v287
        %561 = vmatpush1.msra.mxu0 %v286
        %562 = vmatprep.subr.mxu0 %v295
        %563 = vmatpush1.msra.mxu0 %v294
        %564 = vmatprep.subr.mxu0 %v303
        %565 = vmatpush1.msra.mxu0 %v302
        %566 = vmatprep.subr.mxu0 %v311
        %567 = vmatpush1.msra.mxu0 %v310
        %568 = vmatprep.subr.mxu0 %v319
        %569 = vmatpush1.msra.mxu0 %v318
        %570 = vmatprep.subr.mxu0 %v327
        %571 = vmatpush1.msra.mxu0 %v326
        %572 = vmatprep.subr.mxu0 %v335
        %573 = vmatpush1.msra.mxu0 %v334
        %574 = vmatprep.subr.mxu0 %v343
        %575 = vmatpush1.msra.mxu0 %v342
        %576 = vmatprep.subr.mxu0 %v351
        %577 = vmatpush1.msra.mxu0 %v350
        %578 = vmatprep.subr.mxu0 %v359
        %579 = vmatpush1.msra.mxu0 %v358
        %580 = vmatprep.subr.mxu0 %v367
        %581 = vmatpush1.msra.mxu0 %v366
        %582 = vmatprep.subr.mxu0 %v375
        %583 = vmatpush1.msra.mxu0 %v374
        %584 = vmatprep.subr.mxu0 %v383
        %585 = vmatpush1.msra.mxu0 %v382
        %586 = vmatprep.subr.mxu0 %v391
        %587 = vmatpush1.msra.mxu0 %v390
        %588 = vmatprep.subr.mxu0 %v399
        %589 = vmatpush1.msra.mxu0 %v398
        %590 = vmatprep.subr.mxu0 %v407
        %591 = vmatpush1.msra.mxu0 %v406
        %592 = vmatprep.subr.mxu0 %v415
        %593 = vmatpush1.msra.mxu0 %v414
        %594 = vmatprep.subr.mxu0 %v423
        %595 = vmatpush1.msra.mxu0 %v422
        %596 = vmatprep.subr.mxu0 %v431
        %597 = vmatpush1.msra.mxu0 %v430
        %598 = vmatprep.subr.mxu0 %v439
        %599 = vmatpush1.msra.mxu0 %v438
        %600 = vmatprep.subr.mxu0 %v447
        %601 = vmatpush1.msra.mxu0 %v446
        %602 = vmatprep.subr.mxu0 %v455
        %603 = vmatpush1.msra.mxu0 %v454
        %604 = vmatprep.subr.mxu0 %v463
        %605 = vmatpush1.msra.mxu0 %v462
        %606 = vmatprep.mubr.f32.mxu0 %v469
        %607 = vmatmul.mubr.f32.gmra.mrb[0].mxu0 %v211
        %v608 = vpop.f32.mrb[0].mxu0
        %v609 = vadd.f32 0.0, %v608
        %v610 = vpop.f32.mrb[0].mxu0
        %v611 = vadd.f32 0.0, %v610
        %612 = vdwg.mxu0
        %613 = vmatprep.subr.mxu0 %v217
        %614 = vmatpush1.msra.mxu0 %v216
        %615 = vmatprep.subr.mxu0 %v225
        %616 = vmatpush1.msra.mxu0 %v224
        %617 = vmatprep.subr.mxu0 %v233
        %618 = vmatpush1.msra.mxu0 %v232
        %619 = vmatprep.subr.mxu0 %v241
        %620 = vmatpush1.msra.mxu0 %v240
        %621 = vmatprep.subr.mxu0 %v249
        %622 = vmatpush1.msra.mxu0 %v248
        %623 = vmatprep.subr.mxu0 %v257
        %624 = vmatpush1.msra.mxu0 %v256
        %625 = vmatprep.subr.mxu0 %v265
        %626 = vmatpush1.msra.mxu0 %v264
        %627 = vmatprep.subr.mxu0 %v273
        %628 = vmatpush1.msra.mxu0 %v272
        %629 = vmatprep.subr.mxu0 %v281
        %630 = vmatpush1.msra.mxu0 %v280
        %631 = vmatprep.subr.mxu0 %v289
        %632 = vmatpush1.msra.mxu0 %v288
        %633 = vmatprep.subr.mxu0 %v297
        %634 = vmatpush1.msra.mxu0 %v296
        %635 = vmatprep.subr.mxu0 %v305
        %636 = vmatpush1.msra.mxu0 %v304
        %637 = vmatprep.subr.mxu0 %v313
        %638 = vmatpush1.msra.mxu0 %v312
        %639 = vmatprep.subr.mxu0 %v321
        %640 = vmatpush1.msra.mxu0 %v320
        %641 = vmatprep.subr.mxu0 %v329
        %642 = vmatpush1.msra.mxu0 %v328
        %643 = vmatprep.subr.mxu0 %v337
        %644 = vmatpush1.msra.mxu0 %v336
        %645 = vmatprep.subr.mxu0 %v345
        %646 = vmatpush1.msra.mxu0 %v344
        %647 = vmatprep.subr.mxu0 %v353
        %648 = vmatpush1.msra.mxu0 %v352
        %649 = vmatprep.subr.mxu0 %v361
        %650 = vmatpush1.msra.mxu0 %v360
        %651 = vmatprep.subr.mxu0 %v369
        %652 = vmatpush1.msra.mxu0 %v368
        %653 = vmatprep.subr.mxu0 %v377
        %654 = vmatpush1.msra.mxu0 %v376
        %655 = vmatprep.subr.mxu0 %v385
        %656 = vmatpush1.msra.mxu0 %v384
        %657 = vmatprep.subr.mxu0 %v393
        %658 = vmatpush1.msra.mxu0 %v392
        %659 = vmatprep.subr.mxu0 %v401
        %660 = vmatpush1.msra.mxu0 %v400
        %661 = vmatprep.subr.mxu0 %v409
        %662 = vmatpush1.msra.mxu0 %v408
        %663 = vmatprep.subr.mxu0 %v417
        %664 = vmatpush1.msra.mxu0 %v416
        %665 = vmatprep.subr.mxu0 %v425
        %666 = vmatpush1.msra.mxu0 %v424
        %667 = vmatprep.subr.mxu0 %v433
        %668 = vmatpush1.msra.mxu0 %v432
        %669 = vmatprep.subr.mxu0 %v441
        %670 = vmatpush1.msra.mxu0 %v440
        %671 = vmatprep.subr.mxu0 %v449
        %672 = vmatpush1.msra.mxu0 %v448
        %673 = vmatprep.subr.mxu0 %v457
        %674 = vmatpush1.msra.mxu0 %v456
        %675 = vmatprep.subr.mxu0 %v465
        %676 = vmatpush1.msra.mxu0 %v464
        %677 = vmatprep.mubr.f32.mxu0 %v469
        %678 = vmatmul.mubr.f32.gmra.mrb[0].mxu0 %v211
        %v679 = vpop.f32.mrb[0].mxu0
        %v680 = vadd.f32 0.0, %v679
        %v681 = vpop.f32.mrb[0].mxu0
        %v682 = vadd.f32 0.0, %v681
        %683 = vdwg.mxu0
        %684 = vmatprep.subr.mxu0 %v219
        %685 = vmatpush1.msra.mxu0 %v218
        %686 = vmatprep.subr.mxu0 %v227
        %687 = vmatpush1.msra.mxu0 %v226
        %688 = vmatprep.subr.mxu0 %v235
        %689 = vmatpush1.msra.mxu0 %v234
        %690 = vmatprep.subr.mxu0 %v243
        %691 = vmatpush1.msra.mxu0 %v242
        %692 = vmatprep.subr.mxu0 %v251
        %693 = vmatpush1.msra.mxu0 %v250
        %694 = vmatprep.subr.mxu0 %v259
        %695 = vmatpush1.msra.mxu0 %v258
        %696 = vmatprep.subr.mxu0 %v267
        %697 = vmatpush1.msra.mxu0 %v266
        %698 = vmatprep.subr.mxu0 %v275
        %699 = vmatpush1.msra.mxu0 %v274
        %700 = vmatprep.subr.mxu0 %v283
        %701 = vmatpush1.msra.mxu0 %v282
        %702 = vmatprep.subr.mxu0 %v291
        %703 = vmatpush1.msra.mxu0 %v290
        %704 = vmatprep.subr.mxu0 %v299
        %705 = vmatpush1.msra.mxu0 %v298
        %706 = vmatprep.subr.mxu0 %v307
        %707 = vmatpush1.msra.mxu0 %v306
        %708 = vmatprep.subr.mxu0 %v315
        %709 = vmatpush1.msra.mxu0 %v314
        %710 = vmatprep.subr.mxu0 %v323
        %711 = vmatpush1.msra.mxu0 %v322
        %712 = vmatprep.subr.mxu0 %v331
        %713 = vmatpush1.msra.mxu0 %v330
        %714 = vmatprep.subr.mxu0 %v339
        %715 = vmatpush1.msra.mxu0 %v338
        %716 = vmatprep.subr.mxu0 %v347
        %717 = vmatpush1.msra.mxu0 %v346
        %718 = vmatprep.subr.mxu0 %v355
        %719 = vmatpush1.msra.mxu0 %v354
        %720 = vmatprep.subr.mxu0 %v363
        %721 = vmatpush1.msra.mxu0 %v362
        %722 = vmatprep.subr.mxu0 %v371
        %723 = vmatpush1.msra.mxu0 %v370
        %724 = vmatprep.subr.mxu0 %v379
        %725 = vmatpush1.msra.mxu0 %v378
        %726 = vmatprep.subr.mxu0 %v387
        %727 = vmatpush1.msra.mxu0 %v386
        %728 = vmatprep.subr.mxu0 %v395
        %729 = vmatpush1.msra.mxu0 %v394
        %730 = vmatprep.subr.mxu0 %v403
        %731 = vmatpush1.msra.mxu0 %v402
        %732 = vmatprep.subr.mxu0 %v411
        %733 = vmatpush1.msra.mxu0 %v410
        %734 = vmatprep.subr.mxu0 %v419
        %735 = vmatpush1.msra.mxu0 %v418
        %736 = vmatprep.subr.mxu0 %v427
        %737 = vmatpush1.msra.mxu0 %v426
        %738 = vmatprep.subr.mxu0 %v435
        %739 = vmatpush1.msra.mxu0 %v434
        %740 = vmatprep.subr.mxu0 %v443
        %741 = vmatpush1.msra.mxu0 %v442
        %742 = vmatprep.subr.mxu0 %v451
        %743 = vmatpush1.msra.mxu0 %v450
        %744 = vmatprep.subr.mxu0 %v459
        %745 = vmatpush1.msra.mxu0 %v458
        %746 = vmatprep.subr.mxu0 %v467
        %747 = vmatpush1.msra.mxu0 %v466
        %748 = vmatprep.mubr.f32.mxu0 %v469
        %749 = vmatmul.mubr.f32.gmra.mrb[0].mxu0 %v211
        %v750 = vpop.f32.mrb[0].mxu0
        %v751 = vadd.f32 0.0, %v750
        %v752 = vpop.f32.mrb[0].mxu0
        %v753 = vadd.f32 0.0, %v752
        %754 = vdwg.mxu0
        %755 = vrot.lane.b32.xlu0 %v538, 33
        %v756 = vpop.permute.xlu0 %755
        %757 = vrot.lane.b32.xlu0 %v540, 33
        %v758 = vpop.permute.xlu0 %757
        %759 = vrot.lane.b32.xlu0 %v609, 33
        %v760 = vpop.permute.xlu0 %759
        %761 = vrot.lane.b32.xlu0 %v611, 33
        %v762 = vpop.permute.xlu0 %761
        %763 = vrot.lane.b32.xlu0 %v680, 33
        %v764 = vpop.permute.xlu0 %763
        %765 = vrot.lane.b32.xlu0 %v682, 33
        %v766 = vpop.permute.xlu0 %765
        %767 = vrot.lane.b32.xlu0 %v751, 33
        %v768 = vpop.permute.xlu0 %767
        %769 = vrot.lane.b32.xlu0 %v753, 33
        %v770 = vpop.permute.xlu0 %769
        %v771 = vlaneseq
        %v772 = vand.u32 %v771, 127
        %vm773 = vcmp.lt.s32.totalorder %v772, 33
        %v774 = vsel %vm773, %v768, %v770
        %v775 = vsel %vm773, %v766, %v768
        %v776 = vsel %vm773, %v764, %v766
        %v777 = vsel %vm773, %v762, %v764
        %v778 = vsel %vm773, %v760, %v762
        %v779 = vsel %vm773, %v758, %v760
        %v780 = vsel %vm773, %v756, %v758
        %v781 = vsel %vm773, %v770, %v756
        %v782 = vld [vmem:[%s3] sm:$0xff]
        %v784 = vlaneseq
        %v785 = vshrl.u32 %v784, 7
        %v786 = vsub.s32 0, %v785
        %v787 = vrot.slane %v782, %v786
        %v788 = vlaneseq
        %v789 = vshrl.u32 %v788, 7
        %v790 = vsub.s32 1, %v789
        %v791 = vrot.slane %v782, %v790
        %v792 = vlaneseq
        %v793 = vshrl.u32 %v792, 7
        %v794 = vsub.s32 2, %v793
        %v795 = vrot.slane %v782, %v794
        %v796 = vlaneseq
        %v797 = vshrl.u32 %v796, 7
        %v798 = vsub.s32 3, %v797
        %v799 = vrot.slane %v782, %v798
        %v800 = vlaneseq
        %v801 = vshrl.u32 %v800, 7
        %v802 = vsub.s32 4, %v801
        %v803 = vrot.slane %v782, %v802
        %v804 = vlaneseq
        %v805 = vshrl.u32 %v804, 7
        %v806 = vsub.s32 5, %v805
        %v807 = vrot.slane %v782, %v806
        %v808 = vlaneseq
        %v809 = vshrl.u32 %v808, 7
        %v810 = vsub.s32 6, %v809
        %v811 = vrot.slane %v782, %v810
        %v812 = vlaneseq
        %v813 = vshrl.u32 %v812, 7
        %v814 = vsub.s32 7, %v813
        %v815 = vrot.slane %v782, %v814
        %v824 = vmul.f32 %v781, %v787
        %v825 = vmul.f32 %v780, %v791
        %v826 = vmul.f32 %v779, %v795
        %v827 = vmul.f32 %v778, %v799
        %v828 = vmul.f32 %v777, %v803
        %v829 = vmul.f32 %v776, %v807
        %v830 = vmul.f32 %v775, %v811
        %v831 = vmul.f32 %v774, %v815
        %v832 = vld [vmem:[%s2] sm:$0xff]
        %833 = vrot.lane.b32.xlu0 %v538, 32
        %v834 = vpop.permute.xlu0 %833
        %835 = vrot.lane.b32.xlu0 %v540, 32
        %v836 = vpop.permute.xlu0 %835
        %837 = vrot.lane.b32.xlu0 %v609, 32
        %v838 = vpop.permute.xlu0 %837
        %839 = vrot.lane.b32.xlu0 %v611, 32
        %v840 = vpop.permute.xlu0 %839
        %841 = vrot.lane.b32.xlu0 %v680, 32
        %v842 = vpop.permute.xlu0 %841
        %843 = vrot.lane.b32.xlu0 %v682, 32
        %v844 = vpop.permute.xlu0 %843
        %845 = vrot.lane.b32.xlu0 %v751, 32
        %v846 = vpop.permute.xlu0 %845
        %847 = vrot.lane.b32.xlu0 %v753, 32
        %v848 = vpop.permute.xlu0 %847
        %vm849 = vcmp.lt.s32.totalorder %v772, 32
        %v850 = vsel %vm849, %v846, %v848
        %v851 = vsel %vm849, %v844, %v846
        %v852 = vsel %vm849, %v842, %v844
        %v853 = vsel %vm849, %v840, %v842
        %v854 = vsel %vm849, %v838, %v840
        %v855 = vsel %vm849, %v836, %v838
        %v856 = vsel %vm849, %v834, %v836
        %v857 = vsel %vm849, %v848, %v834
        %s858 = scalar_lea.vmem %s3, 8
        %v859 = vld [vmem:[%s858] sm:$0xff]
        %v861 = vlaneseq
        %v862 = vshrl.u32 %v861, 7
        %v863 = vsub.s32 0, %v862
        %v864 = vrot.slane %v859, %v863
        %v865 = vlaneseq
        %v866 = vshrl.u32 %v865, 7
        %v867 = vsub.s32 1, %v866
        %v868 = vrot.slane %v859, %v867
        %v869 = vlaneseq
        %v870 = vshrl.u32 %v869, 7
        %v871 = vsub.s32 2, %v870
        %v872 = vrot.slane %v859, %v871
        %v873 = vlaneseq
        %v874 = vshrl.u32 %v873, 7
        %v875 = vsub.s32 3, %v874
        %v876 = vrot.slane %v859, %v875
        %v877 = vlaneseq
        %v878 = vshrl.u32 %v877, 7
        %v879 = vsub.s32 4, %v878
        %v880 = vrot.slane %v859, %v879
        %v881 = vlaneseq
        %v882 = vshrl.u32 %v881, 7
        %v883 = vsub.s32 5, %v882
        %v884 = vrot.slane %v859, %v883
        %v885 = vlaneseq
        %v886 = vshrl.u32 %v885, 7
        %v887 = vsub.s32 6, %v886
        %v888 = vrot.slane %v859, %v887
        %v889 = vlaneseq
        %v890 = vshrl.u32 %v889, 7
        %v891 = vsub.s32 7, %v890
        %v892 = vrot.slane %v859, %v891
        %v901 = vmul.f32 %v857, %v864
        %v902 = vmul.f32 %v856, %v868
        %v903 = vmul.f32 %v855, %v872
        %v904 = vmul.f32 %v854, %v876
        %v905 = vmul.f32 %v853, %v880
        %v906 = vmul.f32 %v852, %v884
        %v907 = vmul.f32 %v851, %v888
        %v908 = vmul.f32 %v850, %v892
        %s909 = scalar_lea.vmem %s2, 8
        %v910 = vld [vmem:[%s909] sm:$0xff]
        %vm911 = vcmask 31744
        %v913 = vsel %vm911, %v910, 0
        %vm915 = vcmask 1043456
        %v917 = vsel %vm915, %v901, 0
        %v920 = vsel %vm915, %v902, 0
        %v923 = vsel %vm915, %v903, 0
        %v926 = vsel %vm915, %v904, 0
        %v929 = vsel %vm915, %v905, 0
        %v932 = vsel %vm915, %v906, 0
        %v935 = vsel %vm915, %v907, 0
        %v938 = vsel %vm915, %v908, 0
        %940 = vmatprep.subr.mxu0 %v920
        %941 = vmatpush1.msra.mxu0 %v917
        %942 = vmatprep.subr.mxu0 0.0
        %943 = vmatpush1.msra.mxu0 0.0
        %944 = vmatprep.subr.mxu0 0.0
        %945 = vmatpush1.msra.mxu0 0.0
        %946 = vmatprep.subr.mxu0 0.0
        %947 = vmatpush1.msra.mxu0 0.0
        %948 = vmatprep.subr.mxu0 0.0
        %949 = vmatpush1.msra.mxu0 0.0
        %950 = vmatprep.subr.mxu0 0.0
        %951 = vmatpush1.msra.mxu0 0.0
        %952 = vmatprep.subr.mxu0 0.0
        %953 = vmatpush1.msra.mxu0 0.0
        %954 = vmatprep.subr.mxu0 0.0
        %955 = vmatpush1.msra.mxu0 0.0
        %956 = vmatprep.subr.mxu0 0.0
        %957 = vmatpush1.msra.mxu0 0.0
        %958 = vmatprep.subr.mxu0 0.0
        %959 = vmatpush1.msra.mxu0 0.0
        %960 = vmatprep.subr.mxu0 0.0
        %961 = vmatpush1.msra.mxu0 0.0
        %962 = vmatprep.subr.mxu0 0.0
        %963 = vmatpush1.msra.mxu0 0.0
        %964 = vmatprep.subr.mxu0 0.0
        %965 = vmatpush1.msra.mxu0 0.0
        %966 = vmatprep.subr.mxu0 0.0
        %967 = vmatpush1.msra.mxu0 0.0
        %968 = vmatprep.subr.mxu0 0.0
        %969 = vmatpush1.msra.mxu0 0.0
        %970 = vmatprep.subr.mxu0 0.0
        %971 = vmatpush1.msra.mxu0 0.0
        %972 = vmatprep.subr.mxu0 0.0
        %973 = vmatpush1.msra.mxu0 0.0
        %974 = vmatprep.subr.mxu0 0.0
        %975 = vmatpush1.msra.mxu0 0.0
        %976 = vmatprep.subr.mxu0 0.0
        %977 = vmatpush1.msra.mxu0 0.0
        %978 = vmatprep.subr.mxu0 0.0
        %979 = vmatpush1.msra.mxu0 0.0
        %980 = vmatprep.subr.mxu0 0.0
        %981 = vmatpush1.msra.mxu0 0.0
        %982 = vmatprep.subr.mxu0 0.0
        %983 = vmatpush1.msra.mxu0 0.0
        %984 = vmatprep.subr.mxu0 0.0
        %985 = vmatpush1.msra.mxu0 0.0
        %986 = vmatprep.subr.mxu0 0.0
        %987 = vmatpush1.msra.mxu0 0.0
        %988 = vmatprep.subr.mxu0 0.0
        %989 = vmatpush1.msra.mxu0 0.0
        %990 = vmatprep.subr.mxu0 0.0
        %991 = vmatpush1.msra.mxu0 0.0
        %992 = vmatprep.subr.mxu0 0.0
        %993 = vmatpush1.msra.mxu0 0.0
        %994 = vmatprep.subr.mxu0 0.0
        %995 = vmatpush1.msra.mxu0 0.0
        %996 = vmatprep.subr.mxu0 0.0
        %997 = vmatpush1.msra.mxu0 0.0
        %998 = vmatprep.subr.mxu0 0.0
        %999 = vmatpush1.msra.mxu0 0.0
        %1000 = vmatprep.subr.mxu0 0.0
        %1001 = vmatpush1.msra.mxu0 0.0
        %1002 = vmatprep.subr.mxu0 0.0
        %1003 = vmatpush1.msra.mxu0 0.0
        %1004 = vmatprep.mubr.f32.mxu0 0.0
        %1005 = vmatmul.mubr.f32.gmra.mrb[0].mxu0 %v913
        %v1006 = vpop.f32.mrb[0].mxu0
        %v1007 = vadd.f32 0.0, %v1006
        %v1008 = vpop.f32.mrb[0].mxu0
        %v1009 = vadd.f32 0.0, %v1008
        %1010 = vdwg.mxu0
        %1011 = vmatprep.subr.mxu0 %v926
        %1012 = vmatpush1.msra.mxu0 %v923
        %1013 = vmatprep.subr.mxu0 0.0
        %1014 = vmatpush1.msra.mxu0 0.0
        %1015 = vmatprep.subr.mxu0 0.0
        %1016 = vmatpush1.msra.mxu0 0.0
        %1017 = vmatprep.subr.mxu0 0.0
        %1018 = vmatpush1.msra.mxu0 0.0
        %1019 = vmatprep.subr.mxu0 0.0
        %1020 = vmatpush1.msra.mxu0 0.0
        %1021 = vmatprep.subr.mxu0 0.0
        %1022 = vmatpush1.msra.mxu0 0.0
        %1023 = vmatprep.subr.mxu0 0.0
        %1024 = vmatpush1.msra.mxu0 0.0
        %1025 = vmatprep.subr.mxu0 0.0
        %1026 = vmatpush1.msra.mxu0 0.0
        %1027 = vmatprep.subr.mxu0 0.0
        %1028 = vmatpush1.msra.mxu0 0.0
        %1029 = vmatprep.subr.mxu0 0.0
        %1030 = vmatpush1.msra.mxu0 0.0
        %1031 = vmatprep.subr.mxu0 0.0
        %1032 = vmatpush1.msra.mxu0 0.0
        %1033 = vmatprep.subr.mxu0 0.0
        %1034 = vmatpush1.msra.mxu0 0.0
        %1035 = vmatprep.subr.mxu0 0.0
        %1036 = vmatpush1.msra.mxu0 0.0
        %1037 = vmatprep.subr.mxu0 0.0
        %1038 = vmatpush1.msra.mxu0 0.0
        %1039 = vmatprep.subr.mxu0 0.0
        %1040 = vmatpush1.msra.mxu0 0.0
        %1041 = vmatprep.subr.mxu0 0.0
        %1042 = vmatpush1.msra.mxu0 0.0
        %1043 = vmatprep.subr.mxu0 0.0
        %1044 = vmatpush1.msra.mxu0 0.0
        %1045 = vmatprep.subr.mxu0 0.0
        %1046 = vmatpush1.msra.mxu0 0.0
        %1047 = vmatprep.subr.mxu0 0.0
        %1048 = vmatpush1.msra.mxu0 0.0
        %1049 = vmatprep.subr.mxu0 0.0
        %1050 = vmatpush1.msra.mxu0 0.0
        %1051 = vmatprep.subr.mxu0 0.0
        %1052 = vmatpush1.msra.mxu0 0.0
        %1053 = vmatprep.subr.mxu0 0.0
        %1054 = vmatpush1.msra.mxu0 0.0
        %1055 = vmatprep.subr.mxu0 0.0
        %1056 = vmatpush1.msra.mxu0 0.0
        %1057 = vmatprep.subr.mxu0 0.0
        %1058 = vmatpush1.msra.mxu0 0.0
        %1059 = vmatprep.subr.mxu0 0.0
        %1060 = vmatpush1.msra.mxu0 0.0
        %1061 = vmatprep.subr.mxu0 0.0
        %1062 = vmatpush1.msra.mxu0 0.0
        %1063 = vmatprep.subr.mxu0 0.0
        %1064 = vmatpush1.msra.mxu0 0.0
        %1065 = vmatprep.subr.mxu0 0.0
        %1066 = vmatpush1.msra.mxu0 0.0
        %1067 = vmatprep.subr.mxu0 0.0
        %1068 = vmatpush1.msra.mxu0 0.0
        %1069 = vmatprep.subr.mxu0 0.0
        %1070 = vmatpush1.msra.mxu0 0.0
        %1071 = vmatprep.subr.mxu0 0.0
        %1072 = vmatpush1.msra.mxu0 0.0
        %1073 = vmatprep.subr.mxu0 0.0
        %1074 = vmatpush1.msra.mxu0 0.0
        %1075 = vmatprep.mubr.f32.mxu0 0.0
        %1076 = vmatmul.mubr.f32.gmra.mrb[0].mxu0 %v913
        %v1077 = vpop.f32.mrb[0].mxu0
        %v1078 = vadd.f32 0.0, %v1077
        %v1079 = vpop.f32.mrb[0].mxu0
        %v1080 = vadd.f32 0.0, %v1079
        %1081 = vdwg.mxu0
        %1082 = vmatprep.subr.mxu0 %v932
        %1083 = vmatpush1.msra.mxu0 %v929
        %1084 = vmatprep.subr.mxu0 0.0
        %1085 = vmatpush1.msra.mxu0 0.0
        %1086 = vmatprep.subr.mxu0 0.0
        %1087 = vmatpush1.msra.mxu0 0.0
        %1088 = vmatprep.subr.mxu0 0.0
        %1089 = vmatpush1.msra.mxu0 0.0
        %1090 = vmatprep.subr.mxu0 0.0
        %1091 = vmatpush1.msra.mxu0 0.0
        %1092 = vmatprep.subr.mxu0 0.0
        %1093 = vmatpush1.msra.mxu0 0.0
        %1094 = vmatprep.subr.mxu0 0.0
        %1095 = vmatpush1.msra.mxu0 0.0
        %1096 = vmatprep.subr.mxu0 0.0
        %1097 = vmatpush1.msra.mxu0 0.0
        %1098 = vmatprep.subr.mxu0 0.0
        %1099 = vmatpush1.msra.mxu0 0.0
        %1100 = vmatprep.subr.mxu0 0.0
        %1101 = vmatpush1.msra.mxu0 0.0
        %1102 = vmatprep.subr.mxu0 0.0
        %1103 = vmatpush1.msra.mxu0 0.0
        %1104 = vmatprep.subr.mxu0 0.0
        %1105 = vmatpush1.msra.mxu0 0.0
        %1106 = vmatprep.subr.mxu0 0.0
        %1107 = vmatpush1.msra.mxu0 0.0
        %1108 = vmatprep.subr.mxu0 0.0
        %1109 = vmatpush1.msra.mxu0 0.0
        %1110 = vmatprep.subr.mxu0 0.0
        %1111 = vmatpush1.msra.mxu0 0.0
        %1112 = vmatprep.subr.mxu0 0.0
        %1113 = vmatpush1.msra.mxu0 0.0
        %1114 = vmatprep.subr.mxu0 0.0
        %1115 = vmatpush1.msra.mxu0 0.0
        %1116 = vmatprep.subr.mxu0 0.0
        %1117 = vmatpush1.msra.mxu0 0.0
        %1118 = vmatprep.subr.mxu0 0.0
        %1119 = vmatpush1.msra.mxu0 0.0
        %1120 = vmatprep.subr.mxu0 0.0
        %1121 = vmatpush1.msra.mxu0 0.0
        %1122 = vmatprep.subr.mxu0 0.0
        %1123 = vmatpush1.msra.mxu0 0.0
        %1124 = vmatprep.subr.mxu0 0.0
        %1125 = vmatpush1.msra.mxu0 0.0
        %1126 = vmatprep.subr.mxu0 0.0
        %1127 = vmatpush1.msra.mxu0 0.0
        %1128 = vmatprep.subr.mxu0 0.0
        %1129 = vmatpush1.msra.mxu0 0.0
        %1130 = vmatprep.subr.mxu0 0.0
        %1131 = vmatpush1.msra.mxu0 0.0
        %1132 = vmatprep.subr.mxu0 0.0
        %1133 = vmatpush1.msra.mxu0 0.0
        %1134 = vmatprep.subr.mxu0 0.0
        %1135 = vmatpush1.msra.mxu0 0.0
        %1136 = vmatprep.subr.mxu0 0.0
        %1137 = vmatpush1.msra.mxu0 0.0
        %1138 = vmatprep.subr.mxu0 0.0
        %1139 = vmatpush1.msra.mxu0 0.0
        %1140 = vmatprep.subr.mxu0 0.0
        %1141 = vmatpush1.msra.mxu0 0.0
        %1142 = vmatprep.subr.mxu0 0.0
        %1143 = vmatpush1.msra.mxu0 0.0
        %1144 = vmatprep.subr.mxu0 0.0
        %1145 = vmatpush1.msra.mxu0 0.0
        %1146 = vmatprep.mubr.f32.mxu0 0.0
        %1147 = vmatmul.mubr.f32.gmra.mrb[0].mxu0 %v913
        %v1148 = vpop.f32.mrb[0].mxu0
        %v1149 = vadd.f32 0.0, %v1148
        %v1150 = vpop.f32.mrb[0].mxu0
        %v1151 = vadd.f32 0.0, %v1150
        %1152 = vdwg.mxu0
        %1153 = vmatprep.subr.mxu0 %v938
        %1154 = vmatpush1.msra.mxu0 %v935
        %1155 = vmatprep.subr.mxu0 0.0
        %1156 = vmatpush1.msra.mxu0 0.0
        %1157 = vmatprep.subr.mxu0 0.0
        %1158 = vmatpush1.msra.mxu0 0.0
        %1159 = vmatprep.subr.mxu0 0.0
        %1160 = vmatpush1.msra.mxu0 0.0
        %1161 = vmatprep.subr.mxu0 0.0
        %1162 = vmatpush1.msra.mxu0 0.0
        %1163 = vmatprep.subr.mxu0 0.0
        %1164 = vmatpush1.msra.mxu0 0.0
        %1165 = vmatprep.subr.mxu0 0.0
        %1166 = vmatpush1.msra.mxu0 0.0
        %1167 = vmatprep.subr.mxu0 0.0
        %1168 = vmatpush1.msra.mxu0 0.0
        %1169 = vmatprep.subr.mxu0 0.0
        %1170 = vmatpush1.msra.mxu0 0.0
        %1171 = vmatprep.subr.mxu0 0.0
        %1172 = vmatpush1.msra.mxu0 0.0
        %1173 = vmatprep.subr.mxu0 0.0
        %1174 = vmatpush1.msra.mxu0 0.0
        %1175 = vmatprep.subr.mxu0 0.0
        %1176 = vmatpush1.msra.mxu0 0.0
        %1177 = vmatprep.subr.mxu0 0.0
        %1178 = vmatpush1.msra.mxu0 0.0
        %1179 = vmatprep.subr.mxu0 0.0
        %1180 = vmatpush1.msra.mxu0 0.0
        %1181 = vmatprep.subr.mxu0 0.0
        %1182 = vmatpush1.msra.mxu0 0.0
        %1183 = vmatprep.subr.mxu0 0.0
        %1184 = vmatpush1.msra.mxu0 0.0
        %1185 = vmatprep.subr.mxu0 0.0
        %1186 = vmatpush1.msra.mxu0 0.0
        %1187 = vmatprep.subr.mxu0 0.0
        %1188 = vmatpush1.msra.mxu0 0.0
        %1189 = vmatprep.subr.mxu0 0.0
        %1190 = vmatpush1.msra.mxu0 0.0
        %1191 = vmatprep.subr.mxu0 0.0
        %1192 = vmatpush1.msra.mxu0 0.0
        %1193 = vmatprep.subr.mxu0 0.0
        %1194 = vmatpush1.msra.mxu0 0.0
        %1195 = vmatprep.subr.mxu0 0.0
        %1196 = vmatpush1.msra.mxu0 0.0
        %1197 = vmatprep.subr.mxu0 0.0
        %1198 = vmatpush1.msra.mxu0 0.0
        %1199 = vmatprep.subr.mxu0 0.0
        %1200 = vmatpush1.msra.mxu0 0.0
        %1201 = vmatprep.subr.mxu0 0.0
        %1202 = vmatpush1.msra.mxu0 0.0
        %1203 = vmatprep.subr.mxu0 0.0
        %1204 = vmatpush1.msra.mxu0 0.0
        %1205 = vmatprep.subr.mxu0 0.0
        %1206 = vmatpush1.msra.mxu0 0.0
        %1207 = vmatprep.subr.mxu0 0.0
        %1208 = vmatpush1.msra.mxu0 0.0
        %1209 = vmatprep.subr.mxu0 0.0
        %1210 = vmatpush1.msra.mxu0 0.0
        %1211 = vmatprep.subr.mxu0 0.0
        %1212 = vmatpush1.msra.mxu0 0.0
        %1213 = vmatprep.subr.mxu0 0.0
        %1214 = vmatpush1.msra.mxu0 0.0
        %1215 = vmatprep.subr.mxu0 0.0
        %1216 = vmatpush1.msra.mxu0 0.0
        %1217 = vmatprep.mubr.f32.mxu0 0.0
        %1218 = vmatmul.mubr.f32.gmra.mrb[0].mxu0 %v913
        %v1219 = vpop.f32.mrb[0].mxu0
        %v1220 = vadd.f32 0.0, %v1219
        %v1221 = vpop.f32.mrb[0].mxu0
        %v1222 = vadd.f32 0.0, %v1221
        %1223 = vdwg.mxu0
        %v1225 = vsel %vm911, %v832, 0
        %v1228 = vsel %vm915, %v824, 0
        %v1231 = vsel %vm915, %v825, 0
        %v1234 = vsel %vm915, %v826, 0
        %v1237 = vsel %vm915, %v827, 0
        %v1240 = vsel %vm915, %v828, 0
        %v1243 = vsel %vm915, %v829, 0
        %v1246 = vsel %vm915, %v830, 0
        %v1249 = vsel %vm915, %v831, 0
        %1251 = vmatprep.subr.mxu0 %v1231
        %1252 = vmatpush1.msra.mxu0 %v1228
        %1253 = vmatprep.subr.mxu0 0.0
        %1254 = vmatpush1.msra.mxu0 0.0
        %1255 = vmatprep.subr.mxu0 0.0
        %1256 = vmatpush1.msra.mxu0 0.0
        %1257 = vmatprep.subr.mxu0 0.0
        %1258 = vmatpush1.msra.mxu0 0.0
        %1259 = vmatprep.subr.mxu0 0.0
        %1260 = vmatpush1.msra.mxu0 0.0
        %1261 = vmatprep.subr.mxu0 0.0
        %1262 = vmatpush1.msra.mxu0 0.0
        %1263 = vmatprep.subr.mxu0 0.0
        %1264 = vmatpush1.msra.mxu0 0.0
        %1265 = vmatprep.subr.mxu0 0.0
        %1266 = vmatpush1.msra.mxu0 0.0
        %1267 = vmatprep.subr.mxu0 0.0
        %1268 = vmatpush1.msra.mxu0 0.0
        %1269 = vmatprep.subr.mxu0 0.0
        %1270 = vmatpush1.msra.mxu0 0.0
        %1271 = vmatprep.subr.mxu0 0.0
        %1272 = vmatpush1.msra.mxu0 0.0
        %1273 = vmatprep.subr.mxu0 0.0
        %1274 = vmatpush1.msra.mxu0 0.0
        %1275 = vmatprep.subr.mxu0 0.0
        %1276 = vmatpush1.msra.mxu0 0.0
        %1277 = vmatprep.subr.mxu0 0.0
        %1278 = vmatpush1.msra.mxu0 0.0
        %1279 = vmatprep.subr.mxu0 0.0
        %1280 = vmatpush1.msra.mxu0 0.0
        %1281 = vmatprep.subr.mxu0 0.0
        %1282 = vmatpush1.msra.mxu0 0.0
        %1283 = vmatprep.subr.mxu0 0.0
        %1284 = vmatpush1.msra.mxu0 0.0
        %1285 = vmatprep.subr.mxu0 0.0
        %1286 = vmatpush1.msra.mxu0 0.0
        %1287 = vmatprep.subr.mxu0 0.0
        %1288 = vmatpush1.msra.mxu0 0.0
        %1289 = vmatprep.subr.mxu0 0.0
        %1290 = vmatpush1.msra.mxu0 0.0
        %1291 = vmatprep.subr.mxu0 0.0
        %1292 = vmatpush1.msra.mxu0 0.0
        %1293 = vmatprep.subr.mxu0 0.0
        %1294 = vmatpush1.msra.mxu0 0.0
        %1295 = vmatprep.subr.mxu0 0.0
        %1296 = vmatpush1.msra.mxu0 0.0
        %1297 = vmatprep.subr.mxu0 0.0
        %1298 = vmatpush1.msra.mxu0 0.0
        %1299 = vmatprep.subr.mxu0 0.0
        %1300 = vmatpush1.msra.mxu0 0.0
        %1301 = vmatprep.subr.mxu0 0.0
        %1302 = vmatpush1.msra.mxu0 0.0
        %1303 = vmatprep.subr.mxu0 0.0
        %1304 = vmatpush1.msra.mxu0 0.0
        %1305 = vmatprep.subr.mxu0 0.0
        %1306 = vmatpush1.msra.mxu0 0.0
        %1307 = vmatprep.subr.mxu0 0.0
        %1308 = vmatpush1.msra.mxu0 0.0
        %1309 = vmatprep.subr.mxu0 0.0
        %1310 = vmatpush1.msra.mxu0 0.0
        %1311 = vmatprep.subr.mxu0 0.0
        %1312 = vmatpush1.msra.mxu0 0.0
        %1313 = vmatprep.subr.mxu0 0.0
        %1314 = vmatpush1.msra.mxu0 0.0
        %1315 = vmatprep.mubr.f32.mxu0 0.0
        %1316 = vmatmul.mubr.f32.gmra.mrb[0].mxu0 %v1225
        %v1317 = vpop.f32.mrb[0].mxu0
        %v1318 = vadd.f32 %v1007, %v1317
        %v1319 = vpop.f32.mrb[0].mxu0
        %v1320 = vadd.f32 %v1009, %v1319
        %1321 = vdwg.mxu0
        %1322 = vmatprep.subr.mxu0 %v1237
        %1323 = vmatpush1.msra.mxu0 %v1234
        %1324 = vmatprep.subr.mxu0 0.0
        %1325 = vmatpush1.msra.mxu0 0.0
        %1326 = vmatprep.subr.mxu0 0.0
        %1327 = vmatpush1.msra.mxu0 0.0
        %1328 = vmatprep.subr.mxu0 0.0
        %1329 = vmatpush1.msra.mxu0 0.0
        %1330 = vmatprep.subr.mxu0 0.0
        %1331 = vmatpush1.msra.mxu0 0.0
        %1332 = vmatprep.subr.mxu0 0.0
        %1333 = vmatpush1.msra.mxu0 0.0
        %1334 = vmatprep.subr.mxu0 0.0
        %1335 = vmatpush1.msra.mxu0 0.0
        %1336 = vmatprep.subr.mxu0 0.0
        %1337 = vmatpush1.msra.mxu0 0.0
        %1338 = vmatprep.subr.mxu0 0.0
        %1339 = vmatpush1.msra.mxu0 0.0
        %1340 = vmatprep.subr.mxu0 0.0
        %1341 = vmatpush1.msra.mxu0 0.0
        %1342 = vmatprep.subr.mxu0 0.0
        %1343 = vmatpush1.msra.mxu0 0.0
        %1344 = vmatprep.subr.mxu0 0.0
        %1345 = vmatpush1.msra.mxu0 0.0
        %1346 = vmatprep.subr.mxu0 0.0
        %1347 = vmatpush1.msra.mxu0 0.0
        %1348 = vmatprep.subr.mxu0 0.0
        %1349 = vmatpush1.msra.mxu0 0.0
        %1350 = vmatprep.subr.mxu0 0.0
        %1351 = vmatpush1.msra.mxu0 0.0
        %1352 = vmatprep.subr.mxu0 0.0
        %1353 = vmatpush1.msra.mxu0 0.0
        %1354 = vmatprep.subr.mxu0 0.0
        %1355 = vmatpush1.msra.mxu0 0.0
        %1356 = vmatprep.subr.mxu0 0.0
        %1357 = vmatpush1.msra.mxu0 0.0
        %1358 = vmatprep.subr.mxu0 0.0
        %1359 = vmatpush1.msra.mxu0 0.0
        %1360 = vmatprep.subr.mxu0 0.0
        %1361 = vmatpush1.msra.mxu0 0.0
        %1362 = vmatprep.subr.mxu0 0.0
        %1363 = vmatpush1.msra.mxu0 0.0
        %1364 = vmatprep.subr.mxu0 0.0
        %1365 = vmatpush1.msra.mxu0 0.0
        %1366 = vmatprep.subr.mxu0 0.0
        %1367 = vmatpush1.msra.mxu0 0.0
        %1368 = vmatprep.subr.mxu0 0.0
        %1369 = vmatpush1.msra.mxu0 0.0
        %1370 = vmatprep.subr.mxu0 0.0
        %1371 = vmatpush1.msra.mxu0 0.0
        %1372 = vmatprep.subr.mxu0 0.0
        %1373 = vmatpush1.msra.mxu0 0.0
        %1374 = vmatprep.subr.mxu0 0.0
        %1375 = vmatpush1.msra.mxu0 0.0
        %1376 = vmatprep.subr.mxu0 0.0
        %1377 = vmatpush1.msra.mxu0 0.0
        %1378 = vmatprep.subr.mxu0 0.0
        %1379 = vmatpush1.msra.mxu0 0.0
        %1380 = vmatprep.subr.mxu0 0.0
        %1381 = vmatpush1.msra.mxu0 0.0
        %1382 = vmatprep.subr.mxu0 0.0
        %1383 = vmatpush1.msra.mxu0 0.0
        %1384 = vmatprep.subr.mxu0 0.0
        %1385 = vmatpush1.msra.mxu0 0.0
        %1386 = vmatprep.mubr.f32.mxu0 0.0
        %1387 = vmatmul.mubr.f32.gmra.mrb[0].mxu0 %v1225
        %v1388 = vpop.f32.mrb[0].mxu0
        %v1389 = vadd.f32 %v1078, %v1388
        %v1390 = vpop.f32.mrb[0].mxu0
        %v1391 = vadd.f32 %v1080, %v1390
        %1392 = vdwg.mxu0
        %1393 = vmatprep.subr.mxu0 %v1243
        %1394 = vmatpush1.msra.mxu0 %v1240
        %1395 = vmatprep.subr.mxu0 0.0
        %1396 = vmatpush1.msra.mxu0 0.0
        %1397 = vmatprep.subr.mxu0 0.0
        %1398 = vmatpush1.msra.mxu0 0.0
        %1399 = vmatprep.subr.mxu0 0.0
        %1400 = vmatpush1.msra.mxu0 0.0
        %1401 = vmatprep.subr.mxu0 0.0
        %1402 = vmatpush1.msra.mxu0 0.0
        %1403 = vmatprep.subr.mxu0 0.0
        %1404 = vmatpush1.msra.mxu0 0.0
        %1405 = vmatprep.subr.mxu0 0.0
        %1406 = vmatpush1.msra.mxu0 0.0
        %1407 = vmatprep.subr.mxu0 0.0
        %1408 = vmatpush1.msra.mxu0 0.0
        %1409 = vmatprep.subr.mxu0 0.0
        %1410 = vmatpush1.msra.mxu0 0.0
        %1411 = vmatprep.subr.mxu0 0.0
        %1412 = vmatpush1.msra.mxu0 0.0
        %1413 = vmatprep.subr.mxu0 0.0
        %1414 = vmatpush1.msra.mxu0 0.0
        %1415 = vmatprep.subr.mxu0 0.0
        %1416 = vmatpush1.msra.mxu0 0.0
        %1417 = vmatprep.subr.mxu0 0.0
        %1418 = vmatpush1.msra.mxu0 0.0
        %1419 = vmatprep.subr.mxu0 0.0
        %1420 = vmatpush1.msra.mxu0 0.0
        %1421 = vmatprep.subr.mxu0 0.0
        %1422 = vmatpush1.msra.mxu0 0.0
        %1423 = vmatprep.subr.mxu0 0.0
        %1424 = vmatpush1.msra.mxu0 0.0
        %1425 = vmatprep.subr.mxu0 0.0
        %1426 = vmatpush1.msra.mxu0 0.0
        %1427 = vmatprep.subr.mxu0 0.0
        %1428 = vmatpush1.msra.mxu0 0.0
        %1429 = vmatprep.subr.mxu0 0.0
        %1430 = vmatpush1.msra.mxu0 0.0
        %1431 = vmatprep.subr.mxu0 0.0
        %1432 = vmatpush1.msra.mxu0 0.0
        %1433 = vmatprep.subr.mxu0 0.0
        %1434 = vmatpush1.msra.mxu0 0.0
        %1435 = vmatprep.subr.mxu0 0.0
        %1436 = vmatpush1.msra.mxu0 0.0
        %1437 = vmatprep.subr.mxu0 0.0
        %1438 = vmatpush1.msra.mxu0 0.0
        %1439 = vmatprep.subr.mxu0 0.0
        %1440 = vmatpush1.msra.mxu0 0.0
        %1441 = vmatprep.subr.mxu0 0.0
        %1442 = vmatpush1.msra.mxu0 0.0
        %1443 = vmatprep.subr.mxu0 0.0
        %1444 = vmatpush1.msra.mxu0 0.0
        %1445 = vmatprep.subr.mxu0 0.0
        %1446 = vmatpush1.msra.mxu0 0.0
        %1447 = vmatprep.subr.mxu0 0.0
        %1448 = vmatpush1.msra.mxu0 0.0
        %1449 = vmatprep.subr.mxu0 0.0
        %1450 = vmatpush1.msra.mxu0 0.0
        %1451 = vmatprep.subr.mxu0 0.0
        %1452 = vmatpush1.msra.mxu0 0.0
        %1453 = vmatprep.subr.mxu0 0.0
        %1454 = vmatpush1.msra.mxu0 0.0
        %1455 = vmatprep.subr.mxu0 0.0
        %1456 = vmatpush1.msra.mxu0 0.0
        %1457 = vmatprep.mubr.f32.mxu0 0.0
        %1458 = vmatmul.mubr.f32.gmra.mrb[0].mxu0 %v1225
        %v1459 = vpop.f32.mrb[0].mxu0
        %v1460 = vadd.f32 %v1149, %v1459
        %v1461 = vpop.f32.mrb[0].mxu0
        %v1462 = vadd.f32 %v1151, %v1461
        %1463 = vdwg.mxu0
        %1464 = vmatprep.subr.mxu0 %v1249
        %1465 = vmatpush1.msra.mxu0 %v1246
        %1466 = vmatprep.subr.mxu0 0.0
        %1467 = vmatpush1.msra.mxu0 0.0
        %1468 = vmatprep.subr.mxu0 0.0
        %1469 = vmatpush1.msra.mxu0 0.0
        %1470 = vmatprep.subr.mxu0 0.0
        %1471 = vmatpush1.msra.mxu0 0.0
        %1472 = vmatprep.subr.mxu0 0.0
        %1473 = vmatpush1.msra.mxu0 0.0
        %1474 = vmatprep.subr.mxu0 0.0
        %1475 = vmatpush1.msra.mxu0 0.0
        %1476 = vmatprep.subr.mxu0 0.0
        %1477 = vmatpush1.msra.mxu0 0.0
        %1478 = vmatprep.subr.mxu0 0.0
        %1479 = vmatpush1.msra.mxu0 0.0
        %1480 = vmatprep.subr.mxu0 0.0
        %1481 = vmatpush1.msra.mxu0 0.0
        %1482 = vmatprep.subr.mxu0 0.0
        %1483 = vmatpush1.msra.mxu0 0.0
        %1484 = vmatprep.subr.mxu0 0.0
        %1485 = vmatpush1.msra.mxu0 0.0
        %1486 = vmatprep.subr.mxu0 0.0
        %1487 = vmatpush1.msra.mxu0 0.0
        %1488 = vmatprep.subr.mxu0 0.0
        %1489 = vmatpush1.msra.mxu0 0.0
        %1490 = vmatprep.subr.mxu0 0.0
        %1491 = vmatpush1.msra.mxu0 0.0
        %1492 = vmatprep.subr.mxu0 0.0
        %1493 = vmatpush1.msra.mxu0 0.0
        %1494 = vmatprep.subr.mxu0 0.0
        %1495 = vmatpush1.msra.mxu0 0.0
        %1496 = vmatprep.subr.mxu0 0.0
        %1497 = vmatpush1.msra.mxu0 0.0
        %1498 = vmatprep.subr.mxu0 0.0
        %1499 = vmatpush1.msra.mxu0 0.0
        %1500 = vmatprep.subr.mxu0 0.0
        %1501 = vmatpush1.msra.mxu0 0.0
        %1502 = vmatprep.subr.mxu0 0.0
        %1503 = vmatpush1.msra.mxu0 0.0
        %1504 = vmatprep.subr.mxu0 0.0
        %1505 = vmatpush1.msra.mxu0 0.0
        %1506 = vmatprep.subr.mxu0 0.0
        %1507 = vmatpush1.msra.mxu0 0.0
        %1508 = vmatprep.subr.mxu0 0.0
        %1509 = vmatpush1.msra.mxu0 0.0
        %1510 = vmatprep.subr.mxu0 0.0
        %1511 = vmatpush1.msra.mxu0 0.0
        %1512 = vmatprep.subr.mxu0 0.0
        %1513 = vmatpush1.msra.mxu0 0.0
        %1514 = vmatprep.subr.mxu0 0.0
        %1515 = vmatpush1.msra.mxu0 0.0
        %1516 = vmatprep.subr.mxu0 0.0
        %1517 = vmatpush1.msra.mxu0 0.0
        %1518 = vmatprep.subr.mxu0 0.0
        %1519 = vmatpush1.msra.mxu0 0.0
        %1520 = vmatprep.subr.mxu0 0.0
        %1521 = vmatpush1.msra.mxu0 0.0
        %1522 = vmatprep.subr.mxu0 0.0
        %1523 = vmatpush1.msra.mxu0 0.0
        %1524 = vmatprep.subr.mxu0 0.0
        %1525 = vmatpush1.msra.mxu0 0.0
        %1526 = vmatprep.subr.mxu0 0.0
        %1527 = vmatpush1.msra.mxu0 0.0
        %1528 = vmatprep.mubr.f32.mxu0 0.0
        %1529 = vmatmul.mubr.f32.gmra.mrb[0].mxu0 %v1225
        %v1530 = vpop.f32.mrb[0].mxu0
        %v1531 = vadd.f32 %v1220, %v1530
        %v1532 = vpop.f32.mrb[0].mxu0
        %v1533 = vadd.f32 %v1222, %v1532
        %1534 = vdwg.mxu0
        %1535 = vrot.lane.b32.xlu0 %v538, 31
        %v1536 = vpop.permute.xlu0 %1535
        %1537 = vrot.lane.b32.xlu0 %v540, 31
        %v1538 = vpop.permute.xlu0 %1537
        %1539 = vrot.lane.b32.xlu0 %v609, 31
        %v1540 = vpop.permute.xlu0 %1539
        %1541 = vrot.lane.b32.xlu0 %v611, 31
        %v1542 = vpop.permute.xlu0 %1541
        %1543 = vrot.lane.b32.xlu0 %v680, 31
        %v1544 = vpop.permute.xlu0 %1543
        %1545 = vrot.lane.b32.xlu0 %v682, 31
        %v1546 = vpop.permute.xlu0 %1545
        %1547 = vrot.lane.b32.xlu0 %v751, 31
        %v1548 = vpop.permute.xlu0 %1547
        %1549 = vrot.lane.b32.xlu0 %v753, 31
        %v1550 = vpop.permute.xlu0 %1549
        %vm1551 = vcmp.lt.s32.totalorder %v772, 31
        %v1552 = vsel %vm1551, %v1548, %v1550
        %v1553 = vsel %vm1551, %v1546, %v1548
        %v1554 = vsel %vm1551, %v1544, %v1546
        %v1555 = vsel %vm1551, %v1542, %v1544
        %v1556 = vsel %vm1551, %v1540, %v1542
        %v1557 = vsel %vm1551, %v1538, %v1540
        %v1558 = vsel %vm1551, %v1536, %v1538
        %v1559 = vsel %vm1551, %v1550, %v1536
        %s1560 = scalar_lea.vmem %s3, 16
        %v1561 = vld [vmem:[%s1560] sm:$0xff]
        %v1563 = vlaneseq
        %v1564 = vshrl.u32 %v1563, 7
        %v1565 = vsub.s32 0, %v1564
        %v1566 = vrot.slane %v1561, %v1565
        %v1567 = vlaneseq
        %v1568 = vshrl.u32 %v1567, 7
        %v1569 = vsub.s32 1, %v1568
        %v1570 = vrot.slane %v1561, %v1569
        %v1571 = vlaneseq
        %v1572 = vshrl.u32 %v1571, 7
        %v1573 = vsub.s32 2, %v1572
        %v1574 = vrot.slane %v1561, %v1573
        %v1575 = vlaneseq
        %v1576 = vshrl.u32 %v1575, 7
        %v1577 = vsub.s32 3, %v1576
        %v1578 = vrot.slane %v1561, %v1577
        %v1579 = vlaneseq
        %v1580 = vshrl.u32 %v1579, 7
        %v1581 = vsub.s32 4, %v1580
        %v1582 = vrot.slane %v1561, %v1581
        %v1583 = vlaneseq
        %v1584 = vshrl.u32 %v1583, 7
        %v1585 = vsub.s32 5, %v1584
        %v1586 = vrot.slane %v1561, %v1585
        %v1587 = vlaneseq
        %v1588 = vshrl.u32 %v1587, 7
        %v1589 = vsub.s32 6, %v1588
        %v1590 = vrot.slane %v1561, %v1589
        %v1591 = vlaneseq
        %v1592 = vshrl.u32 %v1591, 7
        %v1593 = vsub.s32 7, %v1592
        %v1594 = vrot.slane %v1561, %v1593
        %v1603 = vmul.f32 %v1559, %v1566
        %v1604 = vmul.f32 %v1558, %v1570
        %v1605 = vmul.f32 %v1557, %v1574
        %v1606 = vmul.f32 %v1556, %v1578
        %v1607 = vmul.f32 %v1555, %v1582
        %v1608 = vmul.f32 %v1554, %v1586
        %v1609 = vmul.f32 %v1553, %v1590
        %v1610 = vmul.f32 %v1552, %v1594
        %s1611 = scalar_lea.vmem %s2, 16
        %v1612 = vld [vmem:[%s1611] sm:$0xff]
        %v1614 = vsel %vm911, %v1612, 0
        %v1617 = vsel %vm915, %v1603, 0
        %v1620 = vsel %vm915, %v1604, 0
        %v1623 = vsel %vm915, %v1605, 0
        %v1626 = vsel %vm915, %v1606, 0
        %v1629 = vsel %vm915, %v1607, 0
        %v1632 = vsel %vm915, %v1608, 0
        %v1635 = vsel %vm915, %v1609, 0
        %v1638 = vsel %vm915, %v1610, 0
        %1640 = vmatprep.subr.mxu0 %v1620
        %1641 = vmatpush1.msra.mxu0 %v1617
        %1642 = vmatprep.subr.mxu0 0.0
        %1643 = vmatpush1.msra.mxu0 0.0
        %1644 = vmatprep.subr.mxu0 0.0
        %1645 = vmatpush1.msra.mxu0 0.0
        %1646 = vmatprep.subr.mxu0 0.0
        %1647 = vmatpush1.msra.mxu0 0.0
        %1648 = vmatprep.subr.mxu0 0.0
        %1649 = vmatpush1.msra.mxu0 0.0
        %1650 = vmatprep.subr.mxu0 0.0
        %1651 = vmatpush1.msra.mxu0 0.0
        %1652 = vmatprep.subr.mxu0 0.0
        %1653 = vmatpush1.msra.mxu0 0.0
        %1654 = vmatprep.subr.mxu0 0.0
        %1655 = vmatpush1.msra.mxu0 0.0
        %1656 = vmatprep.subr.mxu0 0.0
        %1657 = vmatpush1.msra.mxu0 0.0
        %1658 = vmatprep.subr.mxu0 0.0
        %1659 = vmatpush1.msra.mxu0 0.0
        %1660 = vmatprep.subr.mxu0 0.0
        %1661 = vmatpush1.msra.mxu0 0.0
        %1662 = vmatprep.subr.mxu0 0.0
        %1663 = vmatpush1.msra.mxu0 0.0
        %1664 = vmatprep.subr.mxu0 0.0
        %1665 = vmatpush1.msra.mxu0 0.0
        %1666 = vmatprep.subr.mxu0 0.0
        %1667 = vmatpush1.msra.mxu0 0.0
        %1668 = vmatprep.subr.mxu0 0.0
        %1669 = vmatpush1.msra.mxu0 0.0
        %1670 = vmatprep.subr.mxu0 0.0
        %1671 = vmatpush1.msra.mxu0 0.0
        %1672 = vmatprep.subr.mxu0 0.0
        %1673 = vmatpush1.msra.mxu0 0.0
        %1674 = vmatprep.subr.mxu0 0.0
        %1675 = vmatpush1.msra.mxu0 0.0
        %1676 = vmatprep.subr.mxu0 0.0
        %1677 = vmatpush1.msra.mxu0 0.0
        %1678 = vmatprep.subr.mxu0 0.0
        %1679 = vmatpush1.msra.mxu0 0.0
        %1680 = vmatprep.subr.mxu0 0.0
        %1681 = vmatpush1.msra.mxu0 0.0
        %1682 = vmatprep.subr.mxu0 0.0
        %1683 = vmatpush1.msra.mxu0 0.0
        %1684 = vmatprep.subr.mxu0 0.0
        %1685 = vmatpush1.msra.mxu0 0.0
        %1686 = vmatprep.subr.mxu0 0.0
        %1687 = vmatpush1.msra.mxu0 0.0
        %1688 = vmatprep.subr.mxu0 0.0
        %1689 = vmatpush1.msra.mxu0 0.0
        %1690 = vmatprep.subr.mxu0 0.0
        %1691 = vmatpush1.msra.mxu0 0.0
        %1692 = vmatprep.subr.mxu0 0.0
        %1693 = vmatpush1.msra.mxu0 0.0
        %1694 = vmatprep.subr.mxu0 0.0
        %1695 = vmatpush1.msra.mxu0 0.0
        %1696 = vmatprep.subr.mxu0 0.0
        %1697 = vmatpush1.msra.mxu0 0.0
        %1698 = vmatprep.subr.mxu0 0.0
        %1699 = vmatpush1.msra.mxu0 0.0
        %1700 = vmatprep.subr.mxu0 0.0
        %1701 = vmatpush1.msra.mxu0 0.0
        %1702 = vmatprep.subr.mxu0 0.0
        %1703 = vmatpush1.msra.mxu0 0.0
        %1704 = vmatprep.mubr.f32.mxu0 0.0
        %1705 = vmatmul.mubr.f32.gmra.mrb[0].mxu0 %v1614
        %v1706 = vpop.f32.mrb[0].mxu0
        %v1707 = vadd.f32 0.0, %v1706
        %v1708 = vpop.f32.mrb[0].mxu0
        %v1709 = vadd.f32 0.0, %v1708
        %1710 = vdwg.mxu0
        %1711 = vmatprep.subr.mxu0 %v1626
        %1712 = vmatpush1.msra.mxu0 %v1623
        %1713 = vmatprep.subr.mxu0 0.0
        %1714 = vmatpush1.msra.mxu0 0.0
        %1715 = vmatprep.subr.mxu0 0.0
        %1716 = vmatpush1.msra.mxu0 0.0
        %1717 = vmatprep.subr.mxu0 0.0
        %1718 = vmatpush1.msra.mxu0 0.0
        %1719 = vmatprep.subr.mxu0 0.0
        %1720 = vmatpush1.msra.mxu0 0.0
        %1721 = vmatprep.subr.mxu0 0.0
        %1722 = vmatpush1.msra.mxu0 0.0
        %1723 = vmatprep.subr.mxu0 0.0
        %1724 = vmatpush1.msra.mxu0 0.0
        %1725 = vmatprep.subr.mxu0 0.0
        %1726 = vmatpush1.msra.mxu0 0.0
        %1727 = vmatprep.subr.mxu0 0.0
        %1728 = vmatpush1.msra.mxu0 0.0
        %1729 = vmatprep.subr.mxu0 0.0
        %1730 = vmatpush1.msra.mxu0 0.0
        %1731 = vmatprep.subr.mxu0 0.0
        %1732 = vmatpush1.msra.mxu0 0.0
        %1733 = vmatprep.subr.mxu0 0.0
        %1734 = vmatpush1.msra.mxu0 0.0
        %1735 = vmatprep.subr.mxu0 0.0
        %1736 = vmatpush1.msra.mxu0 0.0
        %1737 = vmatprep.subr.mxu0 0.0
        %1738 = vmatpush1.msra.mxu0 0.0
        %1739 = vmatprep.subr.mxu0 0.0
        %1740 = vmatpush1.msra.mxu0 0.0
        %1741 = vmatprep.subr.mxu0 0.0
        %1742 = vmatpush1.msra.mxu0 0.0
        %1743 = vmatprep.subr.mxu0 0.0
        %1744 = vmatpush1.msra.mxu0 0.0
        %1745 = vmatprep.subr.mxu0 0.0
        %1746 = vmatpush1.msra.mxu0 0.0
        %1747 = vmatprep.subr.mxu0 0.0
        %1748 = vmatpush1.msra.mxu0 0.0
        %1749 = vmatprep.subr.mxu0 0.0
        %1750 = vmatpush1.msra.mxu0 0.0
        %1751 = vmatprep.subr.mxu0 0.0
        %1752 = vmatpush1.msra.mxu0 0.0
        %1753 = vmatprep.subr.mxu0 0.0
        %1754 = vmatpush1.msra.mxu0 0.0
        %1755 = vmatprep.subr.mxu0 0.0
        %1756 = vmatpush1.msra.mxu0 0.0
        %1757 = vmatprep.subr.mxu0 0.0
        %1758 = vmatpush1.msra.mxu0 0.0
        %1759 = vmatprep.subr.mxu0 0.0
        %1760 = vmatpush1.msra.mxu0 0.0
        %1761 = vmatprep.subr.mxu0 0.0
        %1762 = vmatpush1.msra.mxu0 0.0
        %1763 = vmatprep.subr.mxu0 0.0
        %1764 = vmatpush1.msra.mxu0 0.0
        %1765 = vmatprep.subr.mxu0 0.0
        %1766 = vmatpush1.msra.mxu0 0.0
        %1767 = vmatprep.subr.mxu0 0.0
        %1768 = vmatpush1.msra.mxu0 0.0
        %1769 = vmatprep.subr.mxu0 0.0
        %1770 = vmatpush1.msra.mxu0 0.0
        %1771 = vmatprep.subr.mxu0 0.0
        %1772 = vmatpush1.msra.mxu0 0.0
        %1773 = vmatprep.subr.mxu0 0.0
        %1774 = vmatpush1.msra.mxu0 0.0
        %1775 = vmatprep.mubr.f32.mxu0 0.0
        %1776 = vmatmul.mubr.f32.gmra.mrb[0].mxu0 %v1614
        %v1777 = vpop.f32.mrb[0].mxu0
        %v1778 = vadd.f32 0.0, %v1777
        %v1779 = vpop.f32.mrb[0].mxu0
        %v1780 = vadd.f32 0.0, %v1779
        %1781 = vdwg.mxu0
        %1782 = vmatprep.subr.mxu0 %v1632
        %1783 = vmatpush1.msra.mxu0 %v1629
        %1784 = vmatprep.subr.mxu0 0.0
        %1785 = vmatpush1.msra.mxu0 0.0
        %1786 = vmatprep.subr.mxu0 0.0
        %1787 = vmatpush1.msra.mxu0 0.0
        %1788 = vmatprep.subr.mxu0 0.0
        %1789 = vmatpush1.msra.mxu0 0.0
        %1790 = vmatprep.subr.mxu0 0.0
        %1791 = vmatpush1.msra.mxu0 0.0
        %1792 = vmatprep.subr.mxu0 0.0
        %1793 = vmatpush1.msra.mxu0 0.0
        %1794 = vmatprep.subr.mxu0 0.0
        %1795 = vmatpush1.msra.mxu0 0.0
        %1796 = vmatprep.subr.mxu0 0.0
        %1797 = vmatpush1.msra.mxu0 0.0
        %1798 = vmatprep.subr.mxu0 0.0
        %1799 = vmatpush1.msra.mxu0 0.0
        %1800 = vmatprep.subr.mxu0 0.0
        %1801 = vmatpush1.msra.mxu0 0.0
        %1802 = vmatprep.subr.mxu0 0.0
        %1803 = vmatpush1.msra.mxu0 0.0
        %1804 = vmatprep.subr.mxu0 0.0
        %1805 = vmatpush1.msra.mxu0 0.0
        %1806 = vmatprep.subr.mxu0 0.0
        %1807 = vmatpush1.msra.mxu0 0.0
        %1808 = vmatprep.subr.mxu0 0.0
        %1809 = vmatpush1.msra.mxu0 0.0
        %1810 = vmatprep.subr.mxu0 0.0
        %1811 = vmatpush1.msra.mxu0 0.0
        %1812 = vmatprep.subr.mxu0 0.0
        %1813 = vmatpush1.msra.mxu0 0.0
        %1814 = vmatprep.subr.mxu0 0.0
        %1815 = vmatpush1.msra.mxu0 0.0
        %1816 = vmatprep.subr.mxu0 0.0
        %1817 = vmatpush1.msra.mxu0 0.0
        %1818 = vmatprep.subr.mxu0 0.0
        %1819 = vmatpush1.msra.mxu0 0.0
        %1820 = vmatprep.subr.mxu0 0.0
        %1821 = vmatpush1.msra.mxu0 0.0
        %1822 = vmatprep.subr.mxu0 0.0
        %1823 = vmatpush1.msra.mxu0 0.0
        %1824 = vmatprep.subr.mxu0 0.0
        %1825 = vmatpush1.msra.mxu0 0.0
        %1826 = vmatprep.subr.mxu0 0.0
        %1827 = vmatpush1.msra.mxu0 0.0
        %1828 = vmatprep.subr.mxu0 0.0
        %1829 = vmatpush1.msra.mxu0 0.0
        %1830 = vmatprep.subr.mxu0 0.0
        %1831 = vmatpush1.msra.mxu0 0.0
        %1832 = vmatprep.subr.mxu0 0.0
        %1833 = vmatpush1.msra.mxu0 0.0
        %1834 = vmatprep.subr.mxu0 0.0
        %1835 = vmatpush1.msra.mxu0 0.0
        %1836 = vmatprep.subr.mxu0 0.0
        %1837 = vmatpush1.msra.mxu0 0.0
        %1838 = vmatprep.subr.mxu0 0.0
        %1839 = vmatpush1.msra.mxu0 0.0
        %1840 = vmatprep.subr.mxu0 0.0
        %1841 = vmatpush1.msra.mxu0 0.0
        %1842 = vmatprep.subr.mxu0 0.0
        %1843 = vmatpush1.msra.mxu0 0.0
        %1844 = vmatprep.subr.mxu0 0.0
        %1845 = vmatpush1.msra.mxu0 0.0
        %1846 = vmatprep.mubr.f32.mxu0 0.0
        %1847 = vmatmul.mubr.f32.gmra.mrb[0].mxu0 %v1614
        %v1848 = vpop.f32.mrb[0].mxu0
        %v1849 = vadd.f32 0.0, %v1848
        %v1850 = vpop.f32.mrb[0].mxu0
        %v1851 = vadd.f32 0.0, %v1850
        %1852 = vdwg.mxu0
        %1853 = vmatprep.subr.mxu0 %v1638
        %1854 = vmatpush1.msra.mxu0 %v1635
        %1855 = vmatprep.subr.mxu0 0.0
        %1856 = vmatpush1.msra.mxu0 0.0
        %1857 = vmatprep.subr.mxu0 0.0
        %1858 = vmatpush1.msra.mxu0 0.0
        %1859 = vmatprep.subr.mxu0 0.0
        %1860 = vmatpush1.msra.mxu0 0.0
        %1861 = vmatprep.subr.mxu0 0.0
        %1862 = vmatpush1.msra.mxu0 0.0
        %1863 = vmatprep.subr.mxu0 0.0
        %1864 = vmatpush1.msra.mxu0 0.0
        %1865 = vmatprep.subr.mxu0 0.0
        %1866 = vmatpush1.msra.mxu0 0.0
        %1867 = vmatprep.subr.mxu0 0.0
        %1868 = vmatpush1.msra.mxu0 0.0
        %1869 = vmatprep.subr.mxu0 0.0
        %1870 = vmatpush1.msra.mxu0 0.0
        %1871 = vmatprep.subr.mxu0 0.0
        %1872 = vmatpush1.msra.mxu0 0.0
        %1873 = vmatprep.subr.mxu0 0.0
        %1874 = vmatpush1.msra.mxu0 0.0
        %1875 = vmatprep.subr.mxu0 0.0
        %1876 = vmatpush1.msra.mxu0 0.0
        %1877 = vmatprep.subr.mxu0 0.0
        %1878 = vmatpush1.msra.mxu0 0.0
        %1879 = vmatprep.subr.mxu0 0.0
        %1880 = vmatpush1.msra.mxu0 0.0
        %1881 = vmatprep.subr.mxu0 0.0
        %1882 = vmatpush1.msra.mxu0 0.0
        %1883 = vmatprep.subr.mxu0 0.0
        %1884 = vmatpush1.msra.mxu0 0.0
        %1885 = vmatprep.subr.mxu0 0.0
        %1886 = vmatpush1.msra.mxu0 0.0
        %1887 = vmatprep.subr.mxu0 0.0
        %1888 = vmatpush1.msra.mxu0 0.0
        %1889 = vmatprep.subr.mxu0 0.0
        %1890 = vmatpush1.msra.mxu0 0.0
        %1891 = vmatprep.subr.mxu0 0.0
        %1892 = vmatpush1.msra.mxu0 0.0
        %1893 = vmatprep.subr.mxu0 0.0
        %1894 = vmatpush1.msra.mxu0 0.0
        %1895 = vmatprep.subr.mxu0 0.0
        %1896 = vmatpush1.msra.mxu0 0.0
        %1897 = vmatprep.subr.mxu0 0.0
        %1898 = vmatpush1.msra.mxu0 0.0
        %1899 = vmatprep.subr.mxu0 0.0
        %1900 = vmatpush1.msra.mxu0 0.0
        %1901 = vmatprep.subr.mxu0 0.0
        %1902 = vmatpush1.msra.mxu0 0.0
        %1903 = vmatprep.subr.mxu0 0.0
        %1904 = vmatpush1.msra.mxu0 0.0
        %1905 = vmatprep.subr.mxu0 0.0
        %1906 = vmatpush1.msra.mxu0 0.0
        %1907 = vmatprep.subr.mxu0 0.0
        %1908 = vmatpush1.msra.mxu0 0.0
        %1909 = vmatprep.subr.mxu0 0.0
        %1910 = vmatpush1.msra.mxu0 0.0
        %1911 = vmatprep.subr.mxu0 0.0
        %1912 = vmatpush1.msra.mxu0 0.0
        %1913 = vmatprep.subr.mxu0 0.0
        %1914 = vmatpush1.msra.mxu0 0.0
        %1915 = vmatprep.subr.mxu0 0.0
        %1916 = vmatpush1.msra.mxu0 0.0
        %1917 = vmatprep.mubr.f32.mxu0 0.0
        %1918 = vmatmul.mubr.f32.gmra.mrb[0].mxu0 %v1614
        %v1919 = vpop.f32.mrb[0].mxu0
        %v1920 = vadd.f32 0.0, %v1919
        %v1921 = vpop.f32.mrb[0].mxu0
        %v1922 = vadd.f32 0.0, %v1921
        %1923 = vdwg.mxu0
        %v1924 = vadd.f32 %v1318, %v1707
        %v1925 = vadd.f32 %v1320, %v1709
        %v1926 = vadd.f32 %v1389, %v1778
        %v1927 = vadd.f32 %v1391, %v1780
        %v1928 = vadd.f32 %v1460, %v1849
        %v1929 = vadd.f32 %v1462, %v1851
        %v1930 = vadd.f32 %v1531, %v1920
        %v1931 = vadd.f32 %v1533, %v1922
        %1932 = vrot.lane.b32.xlu0 %v538, 1
        %v1933 = vpop.permute.xlu0 %1932
        %1934 = vrot.lane.b32.xlu0 %v540, 1
        %v1935 = vpop.permute.xlu0 %1934
        %1936 = vrot.lane.b32.xlu0 %v609, 1
        %v1937 = vpop.permute.xlu0 %1936
        %1938 = vrot.lane.b32.xlu0 %v611, 1
        %v1939 = vpop.permute.xlu0 %1938
        %1940 = vrot.lane.b32.xlu0 %v680, 1
        %v1941 = vpop.permute.xlu0 %1940
        %1942 = vrot.lane.b32.xlu0 %v682, 1
        %v1943 = vpop.permute.xlu0 %1942
        %1944 = vrot.lane.b32.xlu0 %v751, 1
        %v1945 = vpop.permute.xlu0 %1944
        %1946 = vrot.lane.b32.xlu0 %v753, 1
        %v1947 = vpop.permute.xlu0 %1946
        %vm1948 = vcmp.lt.s32.totalorder %v772, 1
        %v1949 = vsel %vm1948, %v1945, %v1947
        %v1950 = vsel %vm1948, %v1943, %v1945
        %v1951 = vsel %vm1948, %v1941, %v1943
        %v1952 = vsel %vm1948, %v1939, %v1941
        %v1953 = vsel %vm1948, %v1937, %v1939
        %v1954 = vsel %vm1948, %v1935, %v1937
        %v1955 = vsel %vm1948, %v1933, %v1935
        %v1956 = vsel %vm1948, %v1947, %v1933
        %s1957 = scalar_lea.vmem %s3, 24
        %v1958 = vld [vmem:[%s1957] sm:$0xff]
        %v1960 = vlaneseq
        %v1961 = vshrl.u32 %v1960, 7
        %v1962 = vsub.s32 0, %v1961
        %v1963 = vrot.slane %v1958, %v1962
        %v1964 = vlaneseq
        %v1965 = vshrl.u32 %v1964, 7
        %v1966 = vsub.s32 1, %v1965
        %v1967 = vrot.slane %v1958, %v1966
        %v1968 = vlaneseq
        %v1969 = vshrl.u32 %v1968, 7
        %v1970 = vsub.s32 2, %v1969
        %v1971 = vrot.slane %v1958, %v1970
        %v1972 = vlaneseq
        %v1973 = vshrl.u32 %v1972, 7
        %v1974 = vsub.s32 3, %v1973
        %v1975 = vrot.slane %v1958, %v1974
        %v1976 = vlaneseq
        %v1977 = vshrl.u32 %v1976, 7
        %v1978 = vsub.s32 4, %v1977
        %v1979 = vrot.slane %v1958, %v1978
        %v1980 = vlaneseq
        %v1981 = vshrl.u32 %v1980, 7
        %v1982 = vsub.s32 5, %v1981
        %v1983 = vrot.slane %v1958, %v1982
        %v1984 = vlaneseq
        %v1985 = vshrl.u32 %v1984, 7
        %v1986 = vsub.s32 6, %v1985
        %v1987 = vrot.slane %v1958, %v1986
        %v1988 = vlaneseq
        %v1989 = vshrl.u32 %v1988, 7
        %v1990 = vsub.s32 7, %v1989
        %v1991 = vrot.slane %v1958, %v1990
        %v2000 = vmul.f32 %v1956, %v1963
        %v2001 = vmul.f32 %v1955, %v1967
        %v2002 = vmul.f32 %v1954, %v1971
        %v2003 = vmul.f32 %v1953, %v1975
        %v2004 = vmul.f32 %v1952, %v1979
        %v2005 = vmul.f32 %v1951, %v1983
        %v2006 = vmul.f32 %v1950, %v1987
        %v2007 = vmul.f32 %v1949, %v1991
        %s2008 = scalar_lea.vmem %s2, 24
        %v2009 = vld [vmem:[%s2008] sm:$0xff]
        %v2011 = vsel %vm911, %v2009, 0
        %v2014 = vsel %vm915, %v2000, 0
        %v2017 = vsel %vm915, %v2001, 0
        %v2020 = vsel %vm915, %v2002, 0
        %v2023 = vsel %vm915, %v2003, 0
        %v2026 = vsel %vm915, %v2004, 0
        %v2029 = vsel %vm915, %v2005, 0
        %v2032 = vsel %vm915, %v2006, 0
        %v2035 = vsel %vm915, %v2007, 0
        %2037 = vmatprep.subr.mxu0 %v2017
        %2038 = vmatpush1.msra.mxu0 %v2014
        %2039 = vmatprep.subr.mxu0 0.0
        %2040 = vmatpush1.msra.mxu0 0.0
        %2041 = vmatprep.subr.mxu0 0.0
        %2042 = vmatpush1.msra.mxu0 0.0
        %2043 = vmatprep.subr.mxu0 0.0
        %2044 = vmatpush1.msra.mxu0 0.0
        %2045 = vmatprep.subr.mxu0 0.0
        %2046 = vmatpush1.msra.mxu0 0.0
        %2047 = vmatprep.subr.mxu0 0.0
        %2048 = vmatpush1.msra.mxu0 0.0
        %2049 = vmatprep.subr.mxu0 0.0
        %2050 = vmatpush1.msra.mxu0 0.0
        %2051 = vmatprep.subr.mxu0 0.0
        %2052 = vmatpush1.msra.mxu0 0.0
        %2053 = vmatprep.subr.mxu0 0.0
        %2054 = vmatpush1.msra.mxu0 0.0
        %2055 = vmatprep.subr.mxu0 0.0
        %2056 = vmatpush1.msra.mxu0 0.0
        %2057 = vmatprep.subr.mxu0 0.0
        %2058 = vmatpush1.msra.mxu0 0.0
        %2059 = vmatprep.subr.mxu0 0.0
        %2060 = vmatpush1.msra.mxu0 0.0
        %2061 = vmatprep.subr.mxu0 0.0
        %2062 = vmatpush1.msra.mxu0 0.0
        %2063 = vmatprep.subr.mxu0 0.0
        %2064 = vmatpush1.msra.mxu0 0.0
        %2065 = vmatprep.subr.mxu0 0.0
        %2066 = vmatpush1.msra.mxu0 0.0
        %2067 = vmatprep.subr.mxu0 0.0
        %2068 = vmatpush1.msra.mxu0 0.0
        %2069 = vmatprep.subr.mxu0 0.0
        %2070 = vmatpush1.msra.mxu0 0.0
        %2071 = vmatprep.subr.mxu0 0.0
        %2072 = vmatpush1.msra.mxu0 0.0
        %2073 = vmatprep.subr.mxu0 0.0
        %2074 = vmatpush1.msra.mxu0 0.0
        %2075 = vmatprep.subr.mxu0 0.0
        %2076 = vmatpush1.msra.mxu0 0.0
        %2077 = vmatprep.subr.mxu0 0.0
        %2078 = vmatpush1.msra.mxu0 0.0
        %2079 = vmatprep.subr.mxu0 0.0
        %2080 = vmatpush1.msra.mxu0 0.0
        %2081 = vmatprep.subr.mxu0 0.0
        %2082 = vmatpush1.msra.mxu0 0.0
        %2083 = vmatprep.subr.mxu0 0.0
        %2084 = vmatpush1.msra.mxu0 0.0
        %2085 = vmatprep.subr.mxu0 0.0
        %2086 = vmatpush1.msra.mxu0 0.0
        %2087 = vmatprep.subr.mxu0 0.0
        %2088 = vmatpush1.msra.mxu0 0.0
        %2089 = vmatprep.subr.mxu0 0.0
        %2090 = vmatpush1.msra.mxu0 0.0
        %2091 = vmatprep.subr.mxu0 0.0
        %2092 = vmatpush1.msra.mxu0 0.0
        %2093 = vmatprep.subr.mxu0 0.0
        %2094 = vmatpush1.msra.mxu0 0.0
        %2095 = vmatprep.subr.mxu0 0.0
        %2096 = vmatpush1.msra.mxu0 0.0
        %2097 = vmatprep.subr.mxu0 0.0
        %2098 = vmatpush1.msra.mxu0 0.0
        %2099 = vmatprep.subr.mxu0 0.0
        %2100 = vmatpush1.msra.mxu0 0.0
        %2101 = vmatprep.mubr.f32.mxu0 0.0
        %2102 = vmatmul.mubr.f32.gmra.mrb[0].mxu0 %v2011
        %v2103 = vpop.f32.mrb[0].mxu0
        %v2104 = vadd.f32 0.0, %v2103
        %v2105 = vpop.f32.mrb[0].mxu0
        %v2106 = vadd.f32 0.0, %v2105
        %2107 = vdwg.mxu0
        %2108 = vmatprep.subr.mxu0 %v2023
        %2109 = vmatpush1.msra.mxu0 %v2020
        %2110 = vmatprep.subr.mxu0 0.0
        %2111 = vmatpush1.msra.mxu0 0.0
        %2112 = vmatprep.subr.mxu0 0.0
        %2113 = vmatpush1.msra.mxu0 0.0
        %2114 = vmatprep.subr.mxu0 0.0
        %2115 = vmatpush1.msra.mxu0 0.0
        %2116 = vmatprep.subr.mxu0 0.0
        %2117 = vmatpush1.msra.mxu0 0.0
        %2118 = vmatprep.subr.mxu0 0.0
        %2119 = vmatpush1.msra.mxu0 0.0
        %2120 = vmatprep.subr.mxu0 0.0
        %2121 = vmatpush1.msra.mxu0 0.0
        %2122 = vmatprep.subr.mxu0 0.0
        %2123 = vmatpush1.msra.mxu0 0.0
        %2124 = vmatprep.subr.mxu0 0.0
        %2125 = vmatpush1.msra.mxu0 0.0
        %2126 = vmatprep.subr.mxu0 0.0
        %2127 = vmatpush1.msra.mxu0 0.0
        %2128 = vmatprep.subr.mxu0 0.0
        %2129 = vmatpush1.msra.mxu0 0.0
        %2130 = vmatprep.subr.mxu0 0.0
        %2131 = vmatpush1.msra.mxu0 0.0
        %2132 = vmatprep.subr.mxu0 0.0
        %2133 = vmatpush1.msra.mxu0 0.0
        %2134 = vmatprep.subr.mxu0 0.0
        %2135 = vmatpush1.msra.mxu0 0.0
        %2136 = vmatprep.subr.mxu0 0.0
        %2137 = vmatpush1.msra.mxu0 0.0
        %2138 = vmatprep.subr.mxu0 0.0
        %2139 = vmatpush1.msra.mxu0 0.0
        %2140 = vmatprep.subr.mxu0 0.0
        %2141 = vmatpush1.msra.mxu0 0.0
        %2142 = vmatprep.subr.mxu0 0.0
        %2143 = vmatpush1.msra.mxu0 0.0
        %2144 = vmatprep.subr.mxu0 0.0
        %2145 = vmatpush1.msra.mxu0 0.0
        %2146 = vmatprep.subr.mxu0 0.0
        %2147 = vmatpush1.msra.mxu0 0.0
        %2148 = vmatprep.subr.mxu0 0.0
        %2149 = vmatpush1.msra.mxu0 0.0
        %2150 = vmatprep.subr.mxu0 0.0
        %2151 = vmatpush1.msra.mxu0 0.0
        %2152 = vmatprep.subr.mxu0 0.0
        %2153 = vmatpush1.msra.mxu0 0.0
        %2154 = vmatprep.subr.mxu0 0.0
        %2155 = vmatpush1.msra.mxu0 0.0
        %2156 = vmatprep.subr.mxu0 0.0
        %2157 = vmatpush1.msra.mxu0 0.0
        %2158 = vmatprep.subr.mxu0 0.0
        %2159 = vmatpush1.msra.mxu0 0.0
        %2160 = vmatprep.subr.mxu0 0.0
        %2161 = vmatpush1.msra.mxu0 0.0
        %2162 = vmatprep.subr.mxu0 0.0
        %2163 = vmatpush1.msra.mxu0 0.0
        %2164 = vmatprep.subr.mxu0 0.0
        %2165 = vmatpush1.msra.mxu0 0.0
        %2166 = vmatprep.subr.mxu0 0.0
        %2167 = vmatpush1.msra.mxu0 0.0
        %2168 = vmatprep.subr.mxu0 0.0
        %2169 = vmatpush1.msra.mxu0 0.0
        %2170 = vmatprep.subr.mxu0 0.0
        %2171 = vmatpush1.msra.mxu0 0.0
        %2172 = vmatprep.mubr.f32.mxu0 0.0
        %2173 = vmatmul.mubr.f32.gmra.mrb[0].mxu0 %v2011
        %v2174 = vpop.f32.mrb[0].mxu0
        %v2175 = vadd.f32 0.0, %v2174
        %v2176 = vpop.f32.mrb[0].mxu0
        %v2177 = vadd.f32 0.0, %v2176
        %2178 = vdwg.mxu0
        %2179 = vmatprep.subr.mxu0 %v2029
        %2180 = vmatpush1.msra.mxu0 %v2026
        %2181 = vmatprep.subr.mxu0 0.0
        %2182 = vmatpush1.msra.mxu0 0.0
        %2183 = vmatprep.subr.mxu0 0.0
        %2184 = vmatpush1.msra.mxu0 0.0
        %2185 = vmatprep.subr.mxu0 0.0
        %2186 = vmatpush1.msra.mxu0 0.0
        %2187 = vmatprep.subr.mxu0 0.0
        %2188 = vmatpush1.msra.mxu0 0.0
        %2189 = vmatprep.subr.mxu0 0.0
        %2190 = vmatpush1.msra.mxu0 0.0
        %2191 = vmatprep.subr.mxu0 0.0
        %2192 = vmatpush1.msra.mxu0 0.0
        %2193 = vmatprep.subr.mxu0 0.0
        %2194 = vmatpush1.msra.mxu0 0.0
        %2195 = vmatprep.subr.mxu0 0.0
        %2196 = vmatpush1.msra.mxu0 0.0
        %2197 = vmatprep.subr.mxu0 0.0
        %2198 = vmatpush1.msra.mxu0 0.0
        %2199 = vmatprep.subr.mxu0 0.0
        %2200 = vmatpush1.msra.mxu0 0.0
        %2201 = vmatprep.subr.mxu0 0.0
        %2202 = vmatpush1.msra.mxu0 0.0
        %2203 = vmatprep.subr.mxu0 0.0
        %2204 = vmatpush1.msra.mxu0 0.0
        %2205 = vmatprep.subr.mxu0 0.0
        %2206 = vmatpush1.msra.mxu0 0.0
        %2207 = vmatprep.subr.mxu0 0.0
        %2208 = vmatpush1.msra.mxu0 0.0
        %2209 = vmatprep.subr.mxu0 0.0
        %2210 = vmatpush1.msra.mxu0 0.0
        %2211 = vmatprep.subr.mxu0 0.0
        %2212 = vmatpush1.msra.mxu0 0.0
        %2213 = vmatprep.subr.mxu0 0.0
        %2214 = vmatpush1.msra.mxu0 0.0
        %2215 = vmatprep.subr.mxu0 0.0
        %2216 = vmatpush1.msra.mxu0 0.0
        %2217 = vmatprep.subr.mxu0 0.0
        %2218 = vmatpush1.msra.mxu0 0.0
        %2219 = vmatprep.subr.mxu0 0.0
        %2220 = vmatpush1.msra.mxu0 0.0
        %2221 = vmatprep.subr.mxu0 0.0
        %2222 = vmatpush1.msra.mxu0 0.0
        %2223 = vmatprep.subr.mxu0 0.0
        %2224 = vmatpush1.msra.mxu0 0.0
        %2225 = vmatprep.subr.mxu0 0.0
        %2226 = vmatpush1.msra.mxu0 0.0
        %2227 = vmatprep.subr.mxu0 0.0
        %2228 = vmatpush1.msra.mxu0 0.0
        %2229 = vmatprep.subr.mxu0 0.0
        %2230 = vmatpush1.msra.mxu0 0.0
        %2231 = vmatprep.subr.mxu0 0.0
        %2232 = vmatpush1.msra.mxu0 0.0
        %2233 = vmatprep.subr.mxu0 0.0
        %2234 = vmatpush1.msra.mxu0 0.0
        %2235 = vmatprep.subr.mxu0 0.0
        %2236 = vmatpush1.msra.mxu0 0.0
        %2237 = vmatprep.subr.mxu0 0.0
        %2238 = vmatpush1.msra.mxu0 0.0
        %2239 = vmatprep.subr.mxu0 0.0
        %2240 = vmatpush1.msra.mxu0 0.0
        %2241 = vmatprep.subr.mxu0 0.0
        %2242 = vmatpush1.msra.mxu0 0.0
        %2243 = vmatprep.mubr.f32.mxu0 0.0
        %2244 = vmatmul.mubr.f32.gmra.mrb[0].mxu0 %v2011
        %v2245 = vpop.f32.mrb[0].mxu0
        %v2246 = vadd.f32 0.0, %v2245
        %v2247 = vpop.f32.mrb[0].mxu0
        %v2248 = vadd.f32 0.0, %v2247
        %2249 = vdwg.mxu0
        %2250 = vmatprep.subr.mxu0 %v2035
        %2251 = vmatpush1.msra.mxu0 %v2032
        %2252 = vmatprep.subr.mxu0 0.0
        %2253 = vmatpush1.msra.mxu0 0.0
        %2254 = vmatprep.subr.mxu0 0.0
        %2255 = vmatpush1.msra.mxu0 0.0
        %2256 = vmatprep.subr.mxu0 0.0
        %2257 = vmatpush1.msra.mxu0 0.0
        %2258 = vmatprep.subr.mxu0 0.0
        %2259 = vmatpush1.msra.mxu0 0.0
        %2260 = vmatprep.subr.mxu0 0.0
        %2261 = vmatpush1.msra.mxu0 0.0
        %2262 = vmatprep.subr.mxu0 0.0
        %2263 = vmatpush1.msra.mxu0 0.0
        %2264 = vmatprep.subr.mxu0 0.0
        %2265 = vmatpush1.msra.mxu0 0.0
        %2266 = vmatprep.subr.mxu0 0.0
        %2267 = vmatpush1.msra.mxu0 0.0
        %2268 = vmatprep.subr.mxu0 0.0
        %2269 = vmatpush1.msra.mxu0 0.0
        %2270 = vmatprep.subr.mxu0 0.0
        %2271 = vmatpush1.msra.mxu0 0.0
        %2272 = vmatprep.subr.mxu0 0.0
        %2273 = vmatpush1.msra.mxu0 0.0
        %2274 = vmatprep.subr.mxu0 0.0
        %2275 = vmatpush1.msra.mxu0 0.0
        %2276 = vmatprep.subr.mxu0 0.0
        %2277 = vmatpush1.msra.mxu0 0.0
        %2278 = vmatprep.subr.mxu0 0.0
        %2279 = vmatpush1.msra.mxu0 0.0
        %2280 = vmatprep.subr.mxu0 0.0
        %2281 = vmatpush1.msra.mxu0 0.0
        %2282 = vmatprep.subr.mxu0 0.0
        %2283 = vmatpush1.msra.mxu0 0.0
        %2284 = vmatprep.subr.mxu0 0.0
        %2285 = vmatpush1.msra.mxu0 0.0
        %2286 = vmatprep.subr.mxu0 0.0
        %2287 = vmatpush1.msra.mxu0 0.0
        %2288 = vmatprep.subr.mxu0 0.0
        %2289 = vmatpush1.msra.mxu0 0.0
        %2290 = vmatprep.subr.mxu0 0.0
        %2291 = vmatpush1.msra.mxu0 0.0
        %2292 = vmatprep.subr.mxu0 0.0
        %2293 = vmatpush1.msra.mxu0 0.0
        %2294 = vmatprep.subr.mxu0 0.0
        %2295 = vmatpush1.msra.mxu0 0.0
        %2296 = vmatprep.subr.mxu0 0.0
        %2297 = vmatpush1.msra.mxu0 0.0
        %2298 = vmatprep.subr.mxu0 0.0
        %2299 = vmatpush1.msra.mxu0 0.0
        %2300 = vmatprep.subr.mxu0 0.0
        %2301 = vmatpush1.msra.mxu0 0.0
        %2302 = vmatprep.subr.mxu0 0.0
        %2303 = vmatpush1.msra.mxu0 0.0
        %2304 = vmatprep.subr.mxu0 0.0
        %2305 = vmatpush1.msra.mxu0 0.0
        %2306 = vmatprep.subr.mxu0 0.0
        %2307 = vmatpush1.msra.mxu0 0.0
        %2308 = vmatprep.subr.mxu0 0.0
        %2309 = vmatpush1.msra.mxu0 0.0
        %2310 = vmatprep.subr.mxu0 0.0
        %2311 = vmatpush1.msra.mxu0 0.0
        %2312 = vmatprep.subr.mxu0 0.0
        %2313 = vmatpush1.msra.mxu0 0.0
        %2314 = vmatprep.mubr.f32.mxu0 0.0
        %2315 = vmatmul.mubr.f32.gmra.mrb[0].mxu0 %v2011
        %v2316 = vpop.f32.mrb[0].mxu0
        %v2317 = vadd.f32 0.0, %v2316
        %v2318 = vpop.f32.mrb[0].mxu0
        %v2319 = vadd.f32 0.0, %v2318
        %2320 = vdwg.mxu0
        %v2321 = vadd.f32 %v1924, %v2104
        %v2322 = vadd.f32 %v1925, %v2106
        %v2323 = vadd.f32 %v1926, %v2175
        %v2324 = vadd.f32 %v1927, %v2177
        %v2325 = vadd.f32 %v1928, %v2246
        %v2326 = vadd.f32 %v1929, %v2248
        %v2327 = vadd.f32 %v1930, %v2317
        %v2328 = vadd.f32 %v1931, %v2319
        %s2329 = scalar_lea.vmem %s2, 32
        %v2330 = vld [vmem:[%s2329] sm:$0xff]
        %v2332 = vsel %vm911, %v2330, 0
        %v2335 = vsel %vm915, %v538, 0
        %v2338 = vsel %vm915, %v540, 0
        %v2341 = vsel %vm915, %v609, 0
        %v2344 = vsel %vm915, %v611, 0
        %v2347 = vsel %vm915, %v680, 0
        %v2350 = vsel %vm915, %v682, 0
        %v2353 = vsel %vm915, %v751, 0
        %v2356 = vsel %vm915, %v753, 0
        %2358 = vmatprep.subr.mxu0 %v2338
        %2359 = vmatpush1.msra.mxu0 %v2335
        %2360 = vmatprep.subr.mxu0 0.0
        %2361 = vmatpush1.msra.mxu0 0.0
        %2362 = vmatprep.subr.mxu0 0.0
        %2363 = vmatpush1.msra.mxu0 0.0
        %2364 = vmatprep.subr.mxu0 0.0
        %2365 = vmatpush1.msra.mxu0 0.0
        %2366 = vmatprep.subr.mxu0 0.0
        %2367 = vmatpush1.msra.mxu0 0.0
        %2368 = vmatprep.subr.mxu0 0.0
        %2369 = vmatpush1.msra.mxu0 0.0
        %2370 = vmatprep.subr.mxu0 0.0
        %2371 = vmatpush1.msra.mxu0 0.0
        %2372 = vmatprep.subr.mxu0 0.0
        %2373 = vmatpush1.msra.mxu0 0.0
        %2374 = vmatprep.subr.mxu0 0.0
        %2375 = vmatpush1.msra.mxu0 0.0
        %2376 = vmatprep.subr.mxu0 0.0
        %2377 = vmatpush1.msra.mxu0 0.0
        %2378 = vmatprep.subr.mxu0 0.0
        %2379 = vmatpush1.msra.mxu0 0.0
        %2380 = vmatprep.subr.mxu0 0.0
        %2381 = vmatpush1.msra.mxu0 0.0
        %2382 = vmatprep.subr.mxu0 0.0
        %2383 = vmatpush1.msra.mxu0 0.0
        %2384 = vmatprep.subr.mxu0 0.0
        %2385 = vmatpush1.msra.mxu0 0.0
        %2386 = vmatprep.subr.mxu0 0.0
        %2387 = vmatpush1.msra.mxu0 0.0
        %2388 = vmatprep.subr.mxu0 0.0
        %2389 = vmatpush1.msra.mxu0 0.0
        %2390 = vmatprep.subr.mxu0 0.0
        %2391 = vmatpush1.msra.mxu0 0.0
        %2392 = vmatprep.subr.mxu0 0.0
        %2393 = vmatpush1.msra.mxu0 0.0
        %2394 = vmatprep.subr.mxu0 0.0
        %2395 = vmatpush1.msra.mxu0 0.0
        %2396 = vmatprep.subr.mxu0 0.0
        %2397 = vmatpush1.msra.mxu0 0.0
        %2398 = vmatprep.subr.mxu0 0.0
        %2399 = vmatpush1.msra.mxu0 0.0
        %2400 = vmatprep.subr.mxu0 0.0
        %2401 = vmatpush1.msra.mxu0 0.0
        %2402 = vmatprep.subr.mxu0 0.0
        %2403 = vmatpush1.msra.mxu0 0.0
        %2404 = vmatprep.subr.mxu0 0.0
        %2405 = vmatpush1.msra.mxu0 0.0
        %2406 = vmatprep.subr.mxu0 0.0
        %2407 = vmatpush1.msra.mxu0 0.0
        %2408 = vmatprep.subr.mxu0 0.0
        %2409 = vmatpush1.msra.mxu0 0.0
        %2410 = vmatprep.subr.mxu0 0.0
        %2411 = vmatpush1.msra.mxu0 0.0
        %2412 = vmatprep.subr.mxu0 0.0
        %2413 = vmatpush1.msra.mxu0 0.0
        %2414 = vmatprep.subr.mxu0 0.0
        %2415 = vmatpush1.msra.mxu0 0.0
        %2416 = vmatprep.subr.mxu0 0.0
        %2417 = vmatpush1.msra.mxu0 0.0
        %2418 = vmatprep.subr.mxu0 0.0
        %2419 = vmatpush1.msra.mxu0 0.0
        %2420 = vmatprep.subr.mxu0 0.0
        %2421 = vmatpush1.msra.mxu0 0.0
        %2422 = vmatprep.mubr.f32.mxu0 0.0
        %2423 = vmatmul.mubr.f32.gmra.mrb[0].mxu0 %v2332
        %v2424 = vpop.f32.mrb[0].mxu0
        %v2425 = vadd.f32 0.0, %v2424
        %v2426 = vpop.f32.mrb[0].mxu0
        %v2427 = vadd.f32 0.0, %v2426
        %2428 = vdwg.mxu0
        %2429 = vmatprep.subr.mxu0 %v2344
        %2430 = vmatpush1.msra.mxu0 %v2341
        %2431 = vmatprep.subr.mxu0 0.0
        %2432 = vmatpush1.msra.mxu0 0.0
        %2433 = vmatprep.subr.mxu0 0.0
        %2434 = vmatpush1.msra.mxu0 0.0
        %2435 = vmatprep.subr.mxu0 0.0
        %2436 = vmatpush1.msra.mxu0 0.0
        %2437 = vmatprep.subr.mxu0 0.0
        %2438 = vmatpush1.msra.mxu0 0.0
        %2439 = vmatprep.subr.mxu0 0.0
        %2440 = vmatpush1.msra.mxu0 0.0
        %2441 = vmatprep.subr.mxu0 0.0
        %2442 = vmatpush1.msra.mxu0 0.0
        %2443 = vmatprep.subr.mxu0 0.0
        %2444 = vmatpush1.msra.mxu0 0.0
        %2445 = vmatprep.subr.mxu0 0.0
        %2446 = vmatpush1.msra.mxu0 0.0
        %2447 = vmatprep.subr.mxu0 0.0
        %2448 = vmatpush1.msra.mxu0 0.0
        %2449 = vmatprep.subr.mxu0 0.0
        %2450 = vmatpush1.msra.mxu0 0.0
        %2451 = vmatprep.subr.mxu0 0.0
        %2452 = vmatpush1.msra.mxu0 0.0
        %2453 = vmatprep.subr.mxu0 0.0
        %2454 = vmatpush1.msra.mxu0 0.0
        %2455 = vmatprep.subr.mxu0 0.0
        %2456 = vmatpush1.msra.mxu0 0.0
        %2457 = vmatprep.subr.mxu0 0.0
        %2458 = vmatpush1.msra.mxu0 0.0
        %2459 = vmatprep.subr.mxu0 0.0
        %2460 = vmatpush1.msra.mxu0 0.0
        %2461 = vmatprep.subr.mxu0 0.0
        %2462 = vmatpush1.msra.mxu0 0.0
        %2463 = vmatprep.subr.mxu0 0.0
        %2464 = vmatpush1.msra.mxu0 0.0
        %2465 = vmatprep.subr.mxu0 0.0
        %2466 = vmatpush1.msra.mxu0 0.0
        %2467 = vmatprep.subr.mxu0 0.0
        %2468 = vmatpush1.msra.mxu0 0.0
        %2469 = vmatprep.subr.mxu0 0.0
        %2470 = vmatpush1.msra.mxu0 0.0
        %2471 = vmatprep.subr.mxu0 0.0
        %2472 = vmatpush1.msra.mxu0 0.0
        %2473 = vmatprep.subr.mxu0 0.0
        %2474 = vmatpush1.msra.mxu0 0.0
        %2475 = vmatprep.subr.mxu0 0.0
        %2476 = vmatpush1.msra.mxu0 0.0
        %2477 = vmatprep.subr.mxu0 0.0
        %2478 = vmatpush1.msra.mxu0 0.0
        %2479 = vmatprep.subr.mxu0 0.0
        %2480 = vmatpush1.msra.mxu0 0.0
        %2481 = vmatprep.subr.mxu0 0.0
        %2482 = vmatpush1.msra.mxu0 0.0
        %2483 = vmatprep.subr.mxu0 0.0
        %2484 = vmatpush1.msra.mxu0 0.0
        %2485 = vmatprep.subr.mxu0 0.0
        %2486 = vmatpush1.msra.mxu0 0.0
        %2487 = vmatprep.subr.mxu0 0.0
        %2488 = vmatpush1.msra.mxu0 0.0
        %2489 = vmatprep.subr.mxu0 0.0
        %2490 = vmatpush1.msra.mxu0 0.0
        %2491 = vmatprep.subr.mxu0 0.0
        %2492 = vmatpush1.msra.mxu0 0.0
        %2493 = vmatprep.mubr.f32.mxu0 0.0
        %2494 = vmatmul.mubr.f32.gmra.mrb[0].mxu0 %v2332
        %v2495 = vpop.f32.mrb[0].mxu0
        %v2496 = vadd.f32 0.0, %v2495
        %v2497 = vpop.f32.mrb[0].mxu0
        %v2498 = vadd.f32 0.0, %v2497
        %2499 = vdwg.mxu0
        %2500 = vmatprep.subr.mxu0 %v2350
        %2501 = vmatpush1.msra.mxu0 %v2347
        %2502 = vmatprep.subr.mxu0 0.0
        %2503 = vmatpush1.msra.mxu0 0.0
        %2504 = vmatprep.subr.mxu0 0.0
        %2505 = vmatpush1.msra.mxu0 0.0
        %2506 = vmatprep.subr.mxu0 0.0
        %2507 = vmatpush1.msra.mxu0 0.0
        %2508 = vmatprep.subr.mxu0 0.0
        %2509 = vmatpush1.msra.mxu0 0.0
        %2510 = vmatprep.subr.mxu0 0.0
        %2511 = vmatpush1.msra.mxu0 0.0
        %2512 = vmatprep.subr.mxu0 0.0
        %2513 = vmatpush1.msra.mxu0 0.0
        %2514 = vmatprep.subr.mxu0 0.0
        %2515 = vmatpush1.msra.mxu0 0.0
        %2516 = vmatprep.subr.mxu0 0.0
        %2517 = vmatpush1.msra.mxu0 0.0
        %2518 = vmatprep.subr.mxu0 0.0
        %2519 = vmatpush1.msra.mxu0 0.0
        %2520 = vmatprep.subr.mxu0 0.0
        %2521 = vmatpush1.msra.mxu0 0.0
        %2522 = vmatprep.subr.mxu0 0.0
        %2523 = vmatpush1.msra.mxu0 0.0
        %2524 = vmatprep.subr.mxu0 0.0
        %2525 = vmatpush1.msra.mxu0 0.0
        %2526 = vmatprep.subr.mxu0 0.0
        %2527 = vmatpush1.msra.mxu0 0.0
        %2528 = vmatprep.subr.mxu0 0.0
        %2529 = vmatpush1.msra.mxu0 0.0
        %2530 = vmatprep.subr.mxu0 0.0
        %2531 = vmatpush1.msra.mxu0 0.0
        %2532 = vmatprep.subr.mxu0 0.0
        %2533 = vmatpush1.msra.mxu0 0.0
        %2534 = vmatprep.subr.mxu0 0.0
        %2535 = vmatpush1.msra.mxu0 0.0
        %2536 = vmatprep.subr.mxu0 0.0
        %2537 = vmatpush1.msra.mxu0 0.0
        %2538 = vmatprep.subr.mxu0 0.0
        %2539 = vmatpush1.msra.mxu0 0.0
        %2540 = vmatprep.subr.mxu0 0.0
        %2541 = vmatpush1.msra.mxu0 0.0
        %2542 = vmatprep.subr.mxu0 0.0
        %2543 = vmatpush1.msra.mxu0 0.0
        %2544 = vmatprep.subr.mxu0 0.0
        %2545 = vmatpush1.msra.mxu0 0.0
        %2546 = vmatprep.subr.mxu0 0.0
        %2547 = vmatpush1.msra.mxu0 0.0
        %2548 = vmatprep.subr.mxu0 0.0
        %2549 = vmatpush1.msra.mxu0 0.0
        %2550 = vmatprep.subr.mxu0 0.0
        %2551 = vmatpush1.msra.mxu0 0.0
        %2552 = vmatprep.subr.mxu0 0.0
        %2553 = vmatpush1.msra.mxu0 0.0
        %2554 = vmatprep.subr.mxu0 0.0
        %2555 = vmatpush1.msra.mxu0 0.0
        %2556 = vmatprep.subr.mxu0 0.0
        %2557 = vmatpush1.msra.mxu0 0.0
        %2558 = vmatprep.subr.mxu0 0.0
        %2559 = vmatpush1.msra.mxu0 0.0
        %2560 = vmatprep.subr.mxu0 0.0
        %2561 = vmatpush1.msra.mxu0 0.0
        %2562 = vmatprep.subr.mxu0 0.0
        %2563 = vmatpush1.msra.mxu0 0.0
        %2564 = vmatprep.mubr.f32.mxu0 0.0
        %2565 = vmatmul.mubr.f32.gmra.mrb[0].mxu0 %v2332
        %v2566 = vpop.f32.mrb[0].mxu0
        %v2567 = vadd.f32 0.0, %v2566
        %v2568 = vpop.f32.mrb[0].mxu0
        %v2569 = vadd.f32 0.0, %v2568
        %2570 = vdwg.mxu0
        %2571 = vmatprep.subr.mxu0 %v2356
        %2572 = vmatpush1.msra.mxu0 %v2353
        %2573 = vmatprep.subr.mxu0 0.0
        %2574 = vmatpush1.msra.mxu0 0.0
        %2575 = vmatprep.subr.mxu0 0.0
        %2576 = vmatpush1.msra.mxu0 0.0
        %2577 = vmatprep.subr.mxu0 0.0
        %2578 = vmatpush1.msra.mxu0 0.0
        %2579 = vmatprep.subr.mxu0 0.0
        %2580 = vmatpush1.msra.mxu0 0.0
        %2581 = vmatprep.subr.mxu0 0.0
        %2582 = vmatpush1.msra.mxu0 0.0
        %2583 = vmatprep.subr.mxu0 0.0
        %2584 = vmatpush1.msra.mxu0 0.0
        %2585 = vmatprep.subr.mxu0 0.0
        %2586 = vmatpush1.msra.mxu0 0.0
        %2587 = vmatprep.subr.mxu0 0.0
        %2588 = vmatpush1.msra.mxu0 0.0
        %2589 = vmatprep.subr.mxu0 0.0
        %2590 = vmatpush1.msra.mxu0 0.0
        %2591 = vmatprep.subr.mxu0 0.0
        %2592 = vmatpush1.msra.mxu0 0.0
        %2593 = vmatprep.subr.mxu0 0.0
        %2594 = vmatpush1.msra.mxu0 0.0
        %2595 = vmatprep.subr.mxu0 0.0
        %2596 = vmatpush1.msra.mxu0 0.0
        %2597 = vmatprep.subr.mxu0 0.0
        %2598 = vmatpush1.msra.mxu0 0.0
        %2599 = vmatprep.subr.mxu0 0.0
        %2600 = vmatpush1.msra.mxu0 0.0
        %2601 = vmatprep.subr.mxu0 0.0
        %2602 = vmatpush1.msra.mxu0 0.0
        %2603 = vmatprep.subr.mxu0 0.0
        %2604 = vmatpush1.msra.mxu0 0.0
        %2605 = vmatprep.subr.mxu0 0.0
        %2606 = vmatpush1.msra.mxu0 0.0
        %2607 = vmatprep.subr.mxu0 0.0
        %2608 = vmatpush1.msra.mxu0 0.0
        %2609 = vmatprep.subr.mxu0 0.0
        %2610 = vmatpush1.msra.mxu0 0.0
        %2611 = vmatprep.subr.mxu0 0.0
        %2612 = vmatpush1.msra.mxu0 0.0
        %2613 = vmatprep.subr.mxu0 0.0
        %2614 = vmatpush1.msra.mxu0 0.0
        %2615 = vmatprep.subr.mxu0 0.0
        %2616 = vmatpush1.msra.mxu0 0.0
        %2617 = vmatprep.subr.mxu0 0.0
        %2618 = vmatpush1.msra.mxu0 0.0
        %2619 = vmatprep.subr.mxu0 0.0
        %2620 = vmatpush1.msra.mxu0 0.0
        %2621 = vmatprep.subr.mxu0 0.0
        %2622 = vmatpush1.msra.mxu0 0.0
        %2623 = vmatprep.subr.mxu0 0.0
        %2624 = vmatpush1.msra.mxu0 0.0
        %2625 = vmatprep.subr.mxu0 0.0
        %2626 = vmatpush1.msra.mxu0 0.0
        %2627 = vmatprep.subr.mxu0 0.0
        %2628 = vmatpush1.msra.mxu0 0.0
        %2629 = vmatprep.subr.mxu0 0.0
        %2630 = vmatpush1.msra.mxu0 0.0
        %2631 = vmatprep.subr.mxu0 0.0
        %2632 = vmatpush1.msra.mxu0 0.0
        %2633 = vmatprep.subr.mxu0 0.0
        %2634 = vmatpush1.msra.mxu0 0.0
        %2635 = vmatprep.mubr.f32.mxu0 0.0
        %2636 = vmatmul.mubr.f32.gmra.mrb[0].mxu0 %v2332
        %v2637 = vpop.f32.mrb[0].mxu0
        %v2638 = vadd.f32 0.0, %v2637
        %v2639 = vpop.f32.mrb[0].mxu0
        %v2640 = vadd.f32 0.0, %v2639
        %2641 = vdwg.mxu0
        %v2642 = vadd.f32 %v2321, %v2425
        %v2643 = vadd.f32 %v2322, %v2427
        %v2644 = vadd.f32 %v2323, %v2496
        %v2645 = vadd.f32 %v2324, %v2498
        %v2646 = vadd.f32 %v2325, %v2567
        %v2647 = vadd.f32 %v2326, %v2569
        %v2648 = vadd.f32 %v2327, %v2638
        %v2649 = vadd.f32 %v2328, %v2640
        %2650 = vrot.lane.b32.xlu0 %v538, 127
        %v2651 = vpop.permute.xlu0 %2650
        %2652 = vrot.lane.b32.xlu0 %v540, 127
        %v2653 = vpop.permute.xlu0 %2652
        %2654 = vrot.lane.b32.xlu0 %v609, 127
        %v2655 = vpop.permute.xlu0 %2654
        %2656 = vrot.lane.b32.xlu0 %v611, 127
        %v2657 = vpop.permute.xlu0 %2656
        %2658 = vrot.lane.b32.xlu0 %v680, 127
        %v2659 = vpop.permute.xlu0 %2658
        %2660 = vrot.lane.b32.xlu0 %v682, 127
        %v2661 = vpop.permute.xlu0 %2660
        %2662 = vrot.lane.b32.xlu0 %v751, 127
        %v2663 = vpop.permute.xlu0 %2662
        %2664 = vrot.lane.b32.xlu0 %v753, 127
        %v2665 = vpop.permute.xlu0 %2664
        %vm2666 = vcmp.lt.s32.totalorder %v772, 127
        %v2667 = vsel %vm2666, %v2663, %v2665
        %v2668 = vsel %vm2666, %v2661, %v2663
        %v2669 = vsel %vm2666, %v2659, %v2661
        %v2670 = vsel %vm2666, %v2657, %v2659
        %v2671 = vsel %vm2666, %v2655, %v2657
        %v2672 = vsel %vm2666, %v2653, %v2655
        %v2673 = vsel %vm2666, %v2651, %v2653
        %v2674 = vsel %vm2666, %v2665, %v2651
        %s2675 = scalar_lea.vmem %s3, 40
        %v2676 = vld [vmem:[%s2675] sm:$0xff]
        %v2678 = vlaneseq
        %v2679 = vshrl.u32 %v2678, 7
        %v2680 = vsub.s32 0, %v2679
        %v2681 = vrot.slane %v2676, %v2680
        %v2682 = vlaneseq
        %v2683 = vshrl.u32 %v2682, 7
        %v2684 = vsub.s32 1, %v2683
        %v2685 = vrot.slane %v2676, %v2684
        %v2686 = vlaneseq
        %v2687 = vshrl.u32 %v2686, 7
        %v2688 = vsub.s32 2, %v2687
        %v2689 = vrot.slane %v2676, %v2688
        %v2690 = vlaneseq
        %v2691 = vshrl.u32 %v2690, 7
        %v2692 = vsub.s32 3, %v2691
        %v2693 = vrot.slane %v2676, %v2692
        %v2694 = vlaneseq
        %v2695 = vshrl.u32 %v2694, 7
        %v2696 = vsub.s32 4, %v2695
        %v2697 = vrot.slane %v2676, %v2696
        %v2698 = vlaneseq
        %v2699 = vshrl.u32 %v2698, 7
        %v2700 = vsub.s32 5, %v2699
        %v2701 = vrot.slane %v2676, %v2700
        %v2702 = vlaneseq
        %v2703 = vshrl.u32 %v2702, 7
        %v2704 = vsub.s32 6, %v2703
        %v2705 = vrot.slane %v2676, %v2704
        %v2706 = vlaneseq
        %v2707 = vshrl.u32 %v2706, 7
        %v2708 = vsub.s32 7, %v2707
        %v2709 = vrot.slane %v2676, %v2708
        %v2718 = vmul.f32 %v2673, %v2681
        %v2719 = vmul.f32 %v2672, %v2685
        %v2720 = vmul.f32 %v2671, %v2689
        %v2721 = vmul.f32 %v2670, %v2693
        %v2722 = vmul.f32 %v2669, %v2697
        %v2723 = vmul.f32 %v2668, %v2701
        %v2724 = vmul.f32 %v2667, %v2705
        %v2725 = vmul.f32 %v2674, %v2709
        %s2726 = scalar_lea.vmem %s2, 40
        %v2727 = vld [vmem:[%s2726] sm:$0xff]
        %v2729 = vsel %vm911, %v2727, 0
        %v2732 = vsel %vm915, %v2718, 0
        %v2735 = vsel %vm915, %v2719, 0
        %v2738 = vsel %vm915, %v2720, 0
        %v2741 = vsel %vm915, %v2721, 0
        %v2744 = vsel %vm915, %v2722, 0
        %v2747 = vsel %vm915, %v2723, 0
        %v2750 = vsel %vm915, %v2724, 0
        %v2753 = vsel %vm915, %v2725, 0
        %2755 = vmatprep.subr.mxu0 %v2735
        %2756 = vmatpush1.msra.mxu0 %v2732
        %2757 = vmatprep.subr.mxu0 0.0
        %2758 = vmatpush1.msra.mxu0 0.0
        %2759 = vmatprep.subr.mxu0 0.0
        %2760 = vmatpush1.msra.mxu0 0.0
        %2761 = vmatprep.subr.mxu0 0.0
        %2762 = vmatpush1.msra.mxu0 0.0
        %2763 = vmatprep.subr.mxu0 0.0
        %2764 = vmatpush1.msra.mxu0 0.0
        %2765 = vmatprep.subr.mxu0 0.0
        %2766 = vmatpush1.msra.mxu0 0.0
        %2767 = vmatprep.subr.mxu0 0.0
        %2768 = vmatpush1.msra.mxu0 0.0
        %2769 = vmatprep.subr.mxu0 0.0
        %2770 = vmatpush1.msra.mxu0 0.0
        %2771 = vmatprep.subr.mxu0 0.0
        %2772 = vmatpush1.msra.mxu0 0.0
        %2773 = vmatprep.subr.mxu0 0.0
        %2774 = vmatpush1.msra.mxu0 0.0
        %2775 = vmatprep.subr.mxu0 0.0
        %2776 = vmatpush1.msra.mxu0 0.0
        %2777 = vmatprep.subr.mxu0 0.0
        %2778 = vmatpush1.msra.mxu0 0.0
        %2779 = vmatprep.subr.mxu0 0.0
        %2780 = vmatpush1.msra.mxu0 0.0
        %2781 = vmatprep.subr.mxu0 0.0
        %2782 = vmatpush1.msra.mxu0 0.0
        %2783 = vmatprep.subr.mxu0 0.0
        %2784 = vmatpush1.msra.mxu0 0.0
        %2785 = vmatprep.subr.mxu0 0.0
        %2786 = vmatpush1.msra.mxu0 0.0
        %2787 = vmatprep.subr.mxu0 0.0
        %2788 = vmatpush1.msra.mxu0 0.0
        %2789 = vmatprep.subr.mxu0 0.0
        %2790 = vmatpush1.msra.mxu0 0.0
        %2791 = vmatprep.subr.mxu0 0.0
        %2792 = vmatpush1.msra.mxu0 0.0
        %2793 = vmatprep.subr.mxu0 0.0
        %2794 = vmatpush1.msra.mxu0 0.0
        %2795 = vmatprep.subr.mxu0 0.0
        %2796 = vmatpush1.msra.mxu0 0.0
        %2797 = vmatprep.subr.mxu0 0.0
        %2798 = vmatpush1.msra.mxu0 0.0
        %2799 = vmatprep.subr.mxu0 0.0
        %2800 = vmatpush1.msra.mxu0 0.0
        %2801 = vmatprep.subr.mxu0 0.0
        %2802 = vmatpush1.msra.mxu0 0.0
        %2803 = vmatprep.subr.mxu0 0.0
        %2804 = vmatpush1.msra.mxu0 0.0
        %2805 = vmatprep.subr.mxu0 0.0
        %2806 = vmatpush1.msra.mxu0 0.0
        %2807 = vmatprep.subr.mxu0 0.0
        %2808 = vmatpush1.msra.mxu0 0.0
        %2809 = vmatprep.subr.mxu0 0.0
        %2810 = vmatpush1.msra.mxu0 0.0
        %2811 = vmatprep.subr.mxu0 0.0
        %2812 = vmatpush1.msra.mxu0 0.0
        %2813 = vmatprep.subr.mxu0 0.0
        %2814 = vmatpush1.msra.mxu0 0.0
        %2815 = vmatprep.subr.mxu0 0.0
        %2816 = vmatpush1.msra.mxu0 0.0
        %2817 = vmatprep.subr.mxu0 0.0
        %2818 = vmatpush1.msra.mxu0 0.0
        %2819 = vmatprep.mubr.f32.mxu0 0.0
        %2820 = vmatmul.mubr.f32.gmra.mrb[0].mxu0 %v2729
        %v2821 = vpop.f32.mrb[0].mxu0
        %v2822 = vadd.f32 0.0, %v2821
        %v2823 = vpop.f32.mrb[0].mxu0
        %v2824 = vadd.f32 0.0, %v2823
        %2825 = vdwg.mxu0
        %2826 = vmatprep.subr.mxu0 %v2741
        %2827 = vmatpush1.msra.mxu0 %v2738
        %2828 = vmatprep.subr.mxu0 0.0
        %2829 = vmatpush1.msra.mxu0 0.0
        %2830 = vmatprep.subr.mxu0 0.0
        %2831 = vmatpush1.msra.mxu0 0.0
        %2832 = vmatprep.subr.mxu0 0.0
        %2833 = vmatpush1.msra.mxu0 0.0
        %2834 = vmatprep.subr.mxu0 0.0
        %2835 = vmatpush1.msra.mxu0 0.0
        %2836 = vmatprep.subr.mxu0 0.0
        %2837 = vmatpush1.msra.mxu0 0.0
        %2838 = vmatprep.subr.mxu0 0.0
        %2839 = vmatpush1.msra.mxu0 0.0
        %2840 = vmatprep.subr.mxu0 0.0
        %2841 = vmatpush1.msra.mxu0 0.0
        %2842 = vmatprep.subr.mxu0 0.0
        %2843 = vmatpush1.msra.mxu0 0.0
        %2844 = vmatprep.subr.mxu0 0.0
        %2845 = vmatpush1.msra.mxu0 0.0
        %2846 = vmatprep.subr.mxu0 0.0
        %2847 = vmatpush1.msra.mxu0 0.0
        %2848 = vmatprep.subr.mxu0 0.0
        %2849 = vmatpush1.msra.mxu0 0.0
        %2850 = vmatprep.subr.mxu0 0.0
        %2851 = vmatpush1.msra.mxu0 0.0
        %2852 = vmatprep.subr.mxu0 0.0
        %2853 = vmatpush1.msra.mxu0 0.0
        %2854 = vmatprep.subr.mxu0 0.0
        %2855 = vmatpush1.msra.mxu0 0.0
        %2856 = vmatprep.subr.mxu0 0.0
        %2857 = vmatpush1.msra.mxu0 0.0
        %2858 = vmatprep.subr.mxu0 0.0
        %2859 = vmatpush1.msra.mxu0 0.0
        %2860 = vmatprep.subr.mxu0 0.0
        %2861 = vmatpush1.msra.mxu0 0.0
        %2862 = vmatprep.subr.mxu0 0.0
        %2863 = vmatpush1.msra.mxu0 0.0
        %2864 = vmatprep.subr.mxu0 0.0
        %2865 = vmatpush1.msra.mxu0 0.0
        %2866 = vmatprep.subr.mxu0 0.0
        %2867 = vmatpush1.msra.mxu0 0.0
        %2868 = vmatprep.subr.mxu0 0.0
        %2869 = vmatpush1.msra.mxu0 0.0
        %2870 = vmatprep.subr.mxu0 0.0
        %2871 = vmatpush1.msra.mxu0 0.0
        %2872 = vmatprep.subr.mxu0 0.0
        %2873 = vmatpush1.msra.mxu0 0.0
        %2874 = vmatprep.subr.mxu0 0.0
        %2875 = vmatpush1.msra.mxu0 0.0
        %2876 = vmatprep.subr.mxu0 0.0
        %2877 = vmatpush1.msra.mxu0 0.0
        %2878 = vmatprep.subr.mxu0 0.0
        %2879 = vmatpush1.msra.mxu0 0.0
        %2880 = vmatprep.subr.mxu0 0.0
        %2881 = vmatpush1.msra.mxu0 0.0
        %2882 = vmatprep.subr.mxu0 0.0
        %2883 = vmatpush1.msra.mxu0 0.0
        %2884 = vmatprep.subr.mxu0 0.0
        %2885 = vmatpush1.msra.mxu0 0.0
        %2886 = vmatprep.subr.mxu0 0.0
        %2887 = vmatpush1.msra.mxu0 0.0
        %2888 = vmatprep.subr.mxu0 0.0
        %2889 = vmatpush1.msra.mxu0 0.0
        %2890 = vmatprep.mubr.f32.mxu0 0.0
        %2891 = vmatmul.mubr.f32.gmra.mrb[0].mxu0 %v2729
        %v2892 = vpop.f32.mrb[0].mxu0
        %v2893 = vadd.f32 0.0, %v2892
        %v2894 = vpop.f32.mrb[0].mxu0
        %v2895 = vadd.f32 0.0, %v2894
        %2896 = vdwg.mxu0
        %2897 = vmatprep.subr.mxu0 %v2747
        %2898 = vmatpush1.msra.mxu0 %v2744
        %2899 = vmatprep.subr.mxu0 0.0
        %2900 = vmatpush1.msra.mxu0 0.0
        %2901 = vmatprep.subr.mxu0 0.0
        %2902 = vmatpush1.msra.mxu0 0.0
        %2903 = vmatprep.subr.mxu0 0.0
        %2904 = vmatpush1.msra.mxu0 0.0
        %2905 = vmatprep.subr.mxu0 0.0
        %2906 = vmatpush1.msra.mxu0 0.0
        %2907 = vmatprep.subr.mxu0 0.0
        %2908 = vmatpush1.msra.mxu0 0.0
        %2909 = vmatprep.subr.mxu0 0.0
        %2910 = vmatpush1.msra.mxu0 0.0
        %2911 = vmatprep.subr.mxu0 0.0
        %2912 = vmatpush1.msra.mxu0 0.0
        %2913 = vmatprep.subr.mxu0 0.0
        %2914 = vmatpush1.msra.mxu0 0.0
        %2915 = vmatprep.subr.mxu0 0.0
        %2916 = vmatpush1.msra.mxu0 0.0
        %2917 = vmatprep.subr.mxu0 0.0
        %2918 = vmatpush1.msra.mxu0 0.0
        %2919 = vmatprep.subr.mxu0 0.0
        %2920 = vmatpush1.msra.mxu0 0.0
        %2921 = vmatprep.subr.mxu0 0.0
        %2922 = vmatpush1.msra.mxu0 0.0
        %2923 = vmatprep.subr.mxu0 0.0
        %2924 = vmatpush1.msra.mxu0 0.0
        %2925 = vmatprep.subr.mxu0 0.0
        %2926 = vmatpush1.msra.mxu0 0.0
        %2927 = vmatprep.subr.mxu0 0.0
        %2928 = vmatpush1.msra.mxu0 0.0
        %2929 = vmatprep.subr.mxu0 0.0
        %2930 = vmatpush1.msra.mxu0 0.0
        %2931 = vmatprep.subr.mxu0 0.0
        %2932 = vmatpush1.msra.mxu0 0.0
        %2933 = vmatprep.subr.mxu0 0.0
        %2934 = vmatpush1.msra.mxu0 0.0
        %2935 = vmatprep.subr.mxu0 0.0
        %2936 = vmatpush1.msra.mxu0 0.0
        %2937 = vmatprep.subr.mxu0 0.0
        %2938 = vmatpush1.msra.mxu0 0.0
        %2939 = vmatprep.subr.mxu0 0.0
        %2940 = vmatpush1.msra.mxu0 0.0
        %2941 = vmatprep.subr.mxu0 0.0
        %2942 = vmatpush1.msra.mxu0 0.0
        %2943 = vmatprep.subr.mxu0 0.0
        %2944 = vmatpush1.msra.mxu0 0.0
        %2945 = vmatprep.subr.mxu0 0.0
        %2946 = vmatpush1.msra.mxu0 0.0
        %2947 = vmatprep.subr.mxu0 0.0
        %2948 = vmatpush1.msra.mxu0 0.0
        %2949 = vmatprep.subr.mxu0 0.0
        %2950 = vmatpush1.msra.mxu0 0.0
        %2951 = vmatprep.subr.mxu0 0.0
        %2952 = vmatpush1.msra.mxu0 0.0
        %2953 = vmatprep.subr.mxu0 0.0
        %2954 = vmatpush1.msra.mxu0 0.0
        %2955 = vmatprep.subr.mxu0 0.0
        %2956 = vmatpush1.msra.mxu0 0.0
        %2957 = vmatprep.subr.mxu0 0.0
        %2958 = vmatpush1.msra.mxu0 0.0
        %2959 = vmatprep.subr.mxu0 0.0
        %2960 = vmatpush1.msra.mxu0 0.0
        %2961 = vmatprep.mubr.f32.mxu0 0.0
        %2962 = vmatmul.mubr.f32.gmra.mrb[0].mxu0 %v2729
        %v2963 = vpop.f32.mrb[0].mxu0
        %v2964 = vadd.f32 0.0, %v2963
        %v2965 = vpop.f32.mrb[0].mxu0
        %v2966 = vadd.f32 0.0, %v2965
        %2967 = vdwg.mxu0
        %2968 = vmatprep.subr.mxu0 %v2753
        %2969 = vmatpush1.msra.mxu0 %v2750
        %2970 = vmatprep.subr.mxu0 0.0
        %2971 = vmatpush1.msra.mxu0 0.0
        %2972 = vmatprep.subr.mxu0 0.0
        %2973 = vmatpush1.msra.mxu0 0.0
        %2974 = vmatprep.subr.mxu0 0.0
        %2975 = vmatpush1.msra.mxu0 0.0
        %2976 = vmatprep.subr.mxu0 0.0
        %2977 = vmatpush1.msra.mxu0 0.0
        %2978 = vmatprep.subr.mxu0 0.0
        %2979 = vmatpush1.msra.mxu0 0.0
        %2980 = vmatprep.subr.mxu0 0.0
        %2981 = vmatpush1.msra.mxu0 0.0
        %2982 = vmatprep.subr.mxu0 0.0
        %2983 = vmatpush1.msra.mxu0 0.0
        %2984 = vmatprep.subr.mxu0 0.0
        %2985 = vmatpush1.msra.mxu0 0.0
        %2986 = vmatprep.subr.mxu0 0.0
        %2987 = vmatpush1.msra.mxu0 0.0
        %2988 = vmatprep.subr.mxu0 0.0
        %2989 = vmatpush1.msra.mxu0 0.0
        %2990 = vmatprep.subr.mxu0 0.0
        %2991 = vmatpush1.msra.mxu0 0.0
        %2992 = vmatprep.subr.mxu0 0.0
        %2993 = vmatpush1.msra.mxu0 0.0
        %2994 = vmatprep.subr.mxu0 0.0
        %2995 = vmatpush1.msra.mxu0 0.0
        %2996 = vmatprep.subr.mxu0 0.0
        %2997 = vmatpush1.msra.mxu0 0.0
        %2998 = vmatprep.subr.mxu0 0.0
        %2999 = vmatpush1.msra.mxu0 0.0
        %3000 = vmatprep.subr.mxu0 0.0
        %3001 = vmatpush1.msra.mxu0 0.0
        %3002 = vmatprep.subr.mxu0 0.0
        %3003 = vmatpush1.msra.mxu0 0.0
        %3004 = vmatprep.subr.mxu0 0.0
        %3005 = vmatpush1.msra.mxu0 0.0
        %3006 = vmatprep.subr.mxu0 0.0
        %3007 = vmatpush1.msra.mxu0 0.0
        %3008 = vmatprep.subr.mxu0 0.0
        %3009 = vmatpush1.msra.mxu0 0.0
        %3010 = vmatprep.subr.mxu0 0.0
        %3011 = vmatpush1.msra.mxu0 0.0
        %3012 = vmatprep.subr.mxu0 0.0
        %3013 = vmatpush1.msra.mxu0 0.0
        %3014 = vmatprep.subr.mxu0 0.0
        %3015 = vmatpush1.msra.mxu0 0.0
        %3016 = vmatprep.subr.mxu0 0.0
        %3017 = vmatpush1.msra.mxu0 0.0
        %3018 = vmatprep.subr.mxu0 0.0
        %3019 = vmatpush1.msra.mxu0 0.0
        %3020 = vmatprep.subr.mxu0 0.0
        %3021 = vmatpush1.msra.mxu0 0.0
        %3022 = vmatprep.subr.mxu0 0.0
        %3023 = vmatpush1.msra.mxu0 0.0
        %3024 = vmatprep.subr.mxu0 0.0
        %3025 = vmatpush1.msra.mxu0 0.0
        %3026 = vmatprep.subr.mxu0 0.0
        %3027 = vmatpush1.msra.mxu0 0.0
        %3028 = vmatprep.subr.mxu0 0.0
        %3029 = vmatpush1.msra.mxu0 0.0
        %3030 = vmatprep.subr.mxu0 0.0
        %3031 = vmatpush1.msra.mxu0 0.0
        %3032 = vmatprep.mubr.f32.mxu0 0.0
        %3033 = vmatmul.mubr.f32.gmra.mrb[0].mxu0 %v2729
        %v3034 = vpop.f32.mrb[0].mxu0
        %v3035 = vadd.f32 0.0, %v3034
        %v3036 = vpop.f32.mrb[0].mxu0
        %v3037 = vadd.f32 0.0, %v3036
        %3038 = vdwg.mxu0
        %v3039 = vadd.f32 %v2642, %v2822
        %v3040 = vadd.f32 %v2643, %v2824
        %v3041 = vadd.f32 %v2644, %v2893
        %v3042 = vadd.f32 %v2645, %v2895
        %v3043 = vadd.f32 %v2646, %v2964
        %v3044 = vadd.f32 %v2647, %v2966
        %v3045 = vadd.f32 %v2648, %v3035
        %v3046 = vadd.f32 %v2649, %v3037
        %3047 = vrot.lane.b32.xlu0 %v538, 97
        %v3048 = vpop.permute.xlu0 %3047
        %3049 = vrot.lane.b32.xlu0 %v540, 97
        %v3050 = vpop.permute.xlu0 %3049
        %3051 = vrot.lane.b32.xlu0 %v609, 97
        %v3052 = vpop.permute.xlu0 %3051
        %3053 = vrot.lane.b32.xlu0 %v611, 97
        %v3054 = vpop.permute.xlu0 %3053
        %3055 = vrot.lane.b32.xlu0 %v680, 97
        %v3056 = vpop.permute.xlu0 %3055
        %3057 = vrot.lane.b32.xlu0 %v682, 97
        %v3058 = vpop.permute.xlu0 %3057
        %3059 = vrot.lane.b32.xlu0 %v751, 97
        %v3060 = vpop.permute.xlu0 %3059
        %3061 = vrot.lane.b32.xlu0 %v753, 97
        %v3062 = vpop.permute.xlu0 %3061
        %vm3063 = vcmp.lt.s32.totalorder %v772, 97
        %v3064 = vsel %vm3063, %v3060, %v3062
        %v3065 = vsel %vm3063, %v3058, %v3060
        %v3066 = vsel %vm3063, %v3056, %v3058
        %v3067 = vsel %vm3063, %v3054, %v3056
        %v3068 = vsel %vm3063, %v3052, %v3054
        %v3069 = vsel %vm3063, %v3050, %v3052
        %v3070 = vsel %vm3063, %v3048, %v3050
        %v3071 = vsel %vm3063, %v3062, %v3048
        %s3072 = scalar_lea.vmem %s3, 48
        %v3073 = vld [vmem:[%s3072] sm:$0xff]
        %v3075 = vlaneseq
        %v3076 = vshrl.u32 %v3075, 7
        %v3077 = vsub.s32 0, %v3076
        %v3078 = vrot.slane %v3073, %v3077
        %v3079 = vlaneseq
        %v3080 = vshrl.u32 %v3079, 7
        %v3081 = vsub.s32 1, %v3080
        %v3082 = vrot.slane %v3073, %v3081
        %v3083 = vlaneseq
        %v3084 = vshrl.u32 %v3083, 7
        %v3085 = vsub.s32 2, %v3084
        %v3086 = vrot.slane %v3073, %v3085
        %v3087 = vlaneseq
        %v3088 = vshrl.u32 %v3087, 7
        %v3089 = vsub.s32 3, %v3088
        %v3090 = vrot.slane %v3073, %v3089
        %v3091 = vlaneseq
        %v3092 = vshrl.u32 %v3091, 7
        %v3093 = vsub.s32 4, %v3092
        %v3094 = vrot.slane %v3073, %v3093
        %v3095 = vlaneseq
        %v3096 = vshrl.u32 %v3095, 7
        %v3097 = vsub.s32 5, %v3096
        %v3098 = vrot.slane %v3073, %v3097
        %v3099 = vlaneseq
        %v3100 = vshrl.u32 %v3099, 7
        %v3101 = vsub.s32 6, %v3100
        %v3102 = vrot.slane %v3073, %v3101
        %v3103 = vlaneseq
        %v3104 = vshrl.u32 %v3103, 7
        %v3105 = vsub.s32 7, %v3104
        %v3106 = vrot.slane %v3073, %v3105
        %v3115 = vmul.f32 %v3070, %v3078
        %v3116 = vmul.f32 %v3069, %v3082
        %v3117 = vmul.f32 %v3068, %v3086
        %v3118 = vmul.f32 %v3067, %v3090
        %v3119 = vmul.f32 %v3066, %v3094
        %v3120 = vmul.f32 %v3065, %v3098
        %v3121 = vmul.f32 %v3064, %v3102
        %v3122 = vmul.f32 %v3071, %v3106
        %s3123 = scalar_lea.vmem %s2, 48
        %v3124 = vld [vmem:[%s3123] sm:$0xff]
        %v3126 = vsel %vm911, %v3124, 0
        %v3129 = vsel %vm915, %v3115, 0
        %v3132 = vsel %vm915, %v3116, 0
        %v3135 = vsel %vm915, %v3117, 0
        %v3138 = vsel %vm915, %v3118, 0
        %v3141 = vsel %vm915, %v3119, 0
        %v3144 = vsel %vm915, %v3120, 0
        %v3147 = vsel %vm915, %v3121, 0
        %v3150 = vsel %vm915, %v3122, 0
        %3152 = vmatprep.subr.mxu0 %v3132
        %3153 = vmatpush1.msra.mxu0 %v3129
        %3154 = vmatprep.subr.mxu0 0.0
        %3155 = vmatpush1.msra.mxu0 0.0
        %3156 = vmatprep.subr.mxu0 0.0
        %3157 = vmatpush1.msra.mxu0 0.0
        %3158 = vmatprep.subr.mxu0 0.0
        %3159 = vmatpush1.msra.mxu0 0.0
        %3160 = vmatprep.subr.mxu0 0.0
        %3161 = vmatpush1.msra.mxu0 0.0
        %3162 = vmatprep.subr.mxu0 0.0
        %3163 = vmatpush1.msra.mxu0 0.0
        %3164 = vmatprep.subr.mxu0 0.0
        %3165 = vmatpush1.msra.mxu0 0.0
        %3166 = vmatprep.subr.mxu0 0.0
        %3167 = vmatpush1.msra.mxu0 0.0
        %3168 = vmatprep.subr.mxu0 0.0
        %3169 = vmatpush1.msra.mxu0 0.0
        %3170 = vmatprep.subr.mxu0 0.0
        %3171 = vmatpush1.msra.mxu0 0.0
        %3172 = vmatprep.subr.mxu0 0.0
        %3173 = vmatpush1.msra.mxu0 0.0
        %3174 = vmatprep.subr.mxu0 0.0
        %3175 = vmatpush1.msra.mxu0 0.0
        %3176 = vmatprep.subr.mxu0 0.0
        %3177 = vmatpush1.msra.mxu0 0.0
        %3178 = vmatprep.subr.mxu0 0.0
        %3179 = vmatpush1.msra.mxu0 0.0
        %3180 = vmatprep.subr.mxu0 0.0
        %3181 = vmatpush1.msra.mxu0 0.0
        %3182 = vmatprep.subr.mxu0 0.0
        %3183 = vmatpush1.msra.mxu0 0.0
        %3184 = vmatprep.subr.mxu0 0.0
        %3185 = vmatpush1.msra.mxu0 0.0
        %3186 = vmatprep.subr.mxu0 0.0
        %3187 = vmatpush1.msra.mxu0 0.0
        %3188 = vmatprep.subr.mxu0 0.0
        %3189 = vmatpush1.msra.mxu0 0.0
        %3190 = vmatprep.subr.mxu0 0.0
        %3191 = vmatpush1.msra.mxu0 0.0
        %3192 = vmatprep.subr.mxu0 0.0
        %3193 = vmatpush1.msra.mxu0 0.0
        %3194 = vmatprep.subr.mxu0 0.0
        %3195 = vmatpush1.msra.mxu0 0.0
        %3196 = vmatprep.subr.mxu0 0.0
        %3197 = vmatpush1.msra.mxu0 0.0
        %3198 = vmatprep.subr.mxu0 0.0
        %3199 = vmatpush1.msra.mxu0 0.0
        %3200 = vmatprep.subr.mxu0 0.0
        %3201 = vmatpush1.msra.mxu0 0.0
        %3202 = vmatprep.subr.mxu0 0.0
        %3203 = vmatpush1.msra.mxu0 0.0
        %3204 = vmatprep.subr.mxu0 0.0
        %3205 = vmatpush1.msra.mxu0 0.0
        %3206 = vmatprep.subr.mxu0 0.0
        %3207 = vmatpush1.msra.mxu0 0.0
        %3208 = vmatprep.subr.mxu0 0.0
        %3209 = vmatpush1.msra.mxu0 0.0
        %3210 = vmatprep.subr.mxu0 0.0
        %3211 = vmatpush1.msra.mxu0 0.0
        %3212 = vmatprep.subr.mxu0 0.0
        %3213 = vmatpush1.msra.mxu0 0.0
        %3214 = vmatprep.subr.mxu0 0.0
        %3215 = vmatpush1.msra.mxu0 0.0
        %3216 = vmatprep.mubr.f32.mxu0 0.0
        %3217 = vmatmul.mubr.f32.gmra.mrb[0].mxu0 %v3126
        %v3218 = vpop.f32.mrb[0].mxu0
        %v3219 = vadd.f32 0.0, %v3218
        %v3220 = vpop.f32.mrb[0].mxu0
        %v3221 = vadd.f32 0.0, %v3220
        %3222 = vdwg.mxu0
        %3223 = vmatprep.subr.mxu0 %v3138
        %3224 = vmatpush1.msra.mxu0 %v3135
        %3225 = vmatprep.subr.mxu0 0.0
        %3226 = vmatpush1.msra.mxu0 0.0
        %3227 = vmatprep.subr.mxu0 0.0
        %3228 = vmatpush1.msra.mxu0 0.0
        %3229 = vmatprep.subr.mxu0 0.0
        %3230 = vmatpush1.msra.mxu0 0.0
        %3231 = vmatprep.subr.mxu0 0.0
        %3232 = vmatpush1.msra.mxu0 0.0
        %3233 = vmatprep.subr.mxu0 0.0
        %3234 = vmatpush1.msra.mxu0 0.0
        %3235 = vmatprep.subr.mxu0 0.0
        %3236 = vmatpush1.msra.mxu0 0.0
        %3237 = vmatprep.subr.mxu0 0.0
        %3238 = vmatpush1.msra.mxu0 0.0
        %3239 = vmatprep.subr.mxu0 0.0
        %3240 = vmatpush1.msra.mxu0 0.0
        %3241 = vmatprep.subr.mxu0 0.0
        %3242 = vmatpush1.msra.mxu0 0.0
        %3243 = vmatprep.subr.mxu0 0.0
        %3244 = vmatpush1.msra.mxu0 0.0
        %3245 = vmatprep.subr.mxu0 0.0
        %3246 = vmatpush1.msra.mxu0 0.0
        %3247 = vmatprep.subr.mxu0 0.0
        %3248 = vmatpush1.msra.mxu0 0.0
        %3249 = vmatprep.subr.mxu0 0.0
        %3250 = vmatpush1.msra.mxu0 0.0
        %3251 = vmatprep.subr.mxu0 0.0
        %3252 = vmatpush1.msra.mxu0 0.0
        %3253 = vmatprep.subr.mxu0 0.0
        %3254 = vmatpush1.msra.mxu0 0.0
        %3255 = vmatprep.subr.mxu0 0.0
        %3256 = vmatpush1.msra.mxu0 0.0
        %3257 = vmatprep.subr.mxu0 0.0
        %3258 = vmatpush1.msra.mxu0 0.0
        %3259 = vmatprep.subr.mxu0 0.0
        %3260 = vmatpush1.msra.mxu0 0.0
        %3261 = vmatprep.subr.mxu0 0.0
        %3262 = vmatpush1.msra.mxu0 0.0
        %3263 = vmatprep.subr.mxu0 0.0
        %3264 = vmatpush1.msra.mxu0 0.0
        %3265 = vmatprep.subr.mxu0 0.0
        %3266 = vmatpush1.msra.mxu0 0.0
        %3267 = vmatprep.subr.mxu0 0.0
        %3268 = vmatpush1.msra.mxu0 0.0
        %3269 = vmatprep.subr.mxu0 0.0
        %3270 = vmatpush1.msra.mxu0 0.0
        %3271 = vmatprep.subr.mxu0 0.0
        %3272 = vmatpush1.msra.mxu0 0.0
        %3273 = vmatprep.subr.mxu0 0.0
        %3274 = vmatpush1.msra.mxu0 0.0
        %3275 = vmatprep.subr.mxu0 0.0
        %3276 = vmatpush1.msra.mxu0 0.0
        %3277 = vmatprep.subr.mxu0 0.0
        %3278 = vmatpush1.msra.mxu0 0.0
        %3279 = vmatprep.subr.mxu0 0.0
        %3280 = vmatpush1.msra.mxu0 0.0
        %3281 = vmatprep.subr.mxu0 0.0
        %3282 = vmatpush1.msra.mxu0 0.0
        %3283 = vmatprep.subr.mxu0 0.0
        %3284 = vmatpush1.msra.mxu0 0.0
        %3285 = vmatprep.subr.mxu0 0.0
        %3286 = vmatpush1.msra.mxu0 0.0
        %3287 = vmatprep.mubr.f32.mxu0 0.0
        %3288 = vmatmul.mubr.f32.gmra.mrb[0].mxu0 %v3126
        %v3289 = vpop.f32.mrb[0].mxu0
        %v3290 = vadd.f32 0.0, %v3289
        %v3291 = vpop.f32.mrb[0].mxu0
        %v3292 = vadd.f32 0.0, %v3291
        %3293 = vdwg.mxu0
        %3294 = vmatprep.subr.mxu0 %v3144
        %3295 = vmatpush1.msra.mxu0 %v3141
        %3296 = vmatprep.subr.mxu0 0.0
        %3297 = vmatpush1.msra.mxu0 0.0
        %3298 = vmatprep.subr.mxu0 0.0
        %3299 = vmatpush1.msra.mxu0 0.0
        %3300 = vmatprep.subr.mxu0 0.0
        %3301 = vmatpush1.msra.mxu0 0.0
        %3302 = vmatprep.subr.mxu0 0.0
        %3303 = vmatpush1.msra.mxu0 0.0
        %3304 = vmatprep.subr.mxu0 0.0
        %3305 = vmatpush1.msra.mxu0 0.0
        %3306 = vmatprep.subr.mxu0 0.0
        %3307 = vmatpush1.msra.mxu0 0.0
        %3308 = vmatprep.subr.mxu0 0.0
        %3309 = vmatpush1.msra.mxu0 0.0
        %3310 = vmatprep.subr.mxu0 0.0
        %3311 = vmatpush1.msra.mxu0 0.0
        %3312 = vmatprep.subr.mxu0 0.0
        %3313 = vmatpush1.msra.mxu0 0.0
        %3314 = vmatprep.subr.mxu0 0.0
        %3315 = vmatpush1.msra.mxu0 0.0
        %3316 = vmatprep.subr.mxu0 0.0
        %3317 = vmatpush1.msra.mxu0 0.0
        %3318 = vmatprep.subr.mxu0 0.0
        %3319 = vmatpush1.msra.mxu0 0.0
        %3320 = vmatprep.subr.mxu0 0.0
        %3321 = vmatpush1.msra.mxu0 0.0
        %3322 = vmatprep.subr.mxu0 0.0
        %3323 = vmatpush1.msra.mxu0 0.0
        %3324 = vmatprep.subr.mxu0 0.0
        %3325 = vmatpush1.msra.mxu0 0.0
        %3326 = vmatprep.subr.mxu0 0.0
        %3327 = vmatpush1.msra.mxu0 0.0
        %3328 = vmatprep.subr.mxu0 0.0
        %3329 = vmatpush1.msra.mxu0 0.0
        %3330 = vmatprep.subr.mxu0 0.0
        %3331 = vmatpush1.msra.mxu0 0.0
        %3332 = vmatprep.subr.mxu0 0.0
        %3333 = vmatpush1.msra.mxu0 0.0
        %3334 = vmatprep.subr.mxu0 0.0
        %3335 = vmatpush1.msra.mxu0 0.0
        %3336 = vmatprep.subr.mxu0 0.0
        %3337 = vmatpush1.msra.mxu0 0.0
        %3338 = vmatprep.subr.mxu0 0.0
        %3339 = vmatpush1.msra.mxu0 0.0
        %3340 = vmatprep.subr.mxu0 0.0
        %3341 = vmatpush1.msra.mxu0 0.0
        %3342 = vmatprep.subr.mxu0 0.0
        %3343 = vmatpush1.msra.mxu0 0.0
        %3344 = vmatprep.subr.mxu0 0.0
        %3345 = vmatpush1.msra.mxu0 0.0
        %3346 = vmatprep.subr.mxu0 0.0
        %3347 = vmatpush1.msra.mxu0 0.0
        %3348 = vmatprep.subr.mxu0 0.0
        %3349 = vmatpush1.msra.mxu0 0.0
        %3350 = vmatprep.subr.mxu0 0.0
        %3351 = vmatpush1.msra.mxu0 0.0
        %3352 = vmatprep.subr.mxu0 0.0
        %3353 = vmatpush1.msra.mxu0 0.0
        %3354 = vmatprep.subr.mxu0 0.0
        %3355 = vmatpush1.msra.mxu0 0.0
        %3356 = vmatprep.subr.mxu0 0.0
        %3357 = vmatpush1.msra.mxu0 0.0
        %3358 = vmatprep.mubr.f32.mxu0 0.0
        %3359 = vmatmul.mubr.f32.gmra.mrb[0].mxu0 %v3126
        %v3360 = vpop.f32.mrb[0].mxu0
        %v3361 = vadd.f32 0.0, %v3360
        %v3362 = vpop.f32.mrb[0].mxu0
        %v3363 = vadd.f32 0.0, %v3362
        %3364 = vdwg.mxu0
        %3365 = vmatprep.subr.mxu0 %v3150
        %3366 = vmatpush1.msra.mxu0 %v3147
        %3367 = vmatprep.subr.mxu0 0.0
        %3368 = vmatpush1.msra.mxu0 0.0
        %3369 = vmatprep.subr.mxu0 0.0
        %3370 = vmatpush1.msra.mxu0 0.0
        %3371 = vmatprep.subr.mxu0 0.0
        %3372 = vmatpush1.msra.mxu0 0.0
        %3373 = vmatprep.subr.mxu0 0.0
        %3374 = vmatpush1.msra.mxu0 0.0
        %3375 = vmatprep.subr.mxu0 0.0
        %3376 = vmatpush1.msra.mxu0 0.0
        %3377 = vmatprep.subr.mxu0 0.0
        %3378 = vmatpush1.msra.mxu0 0.0
        %3379 = vmatprep.subr.mxu0 0.0
        %3380 = vmatpush1.msra.mxu0 0.0
        %3381 = vmatprep.subr.mxu0 0.0
        %3382 = vmatpush1.msra.mxu0 0.0
        %3383 = vmatprep.subr.mxu0 0.0
        %3384 = vmatpush1.msra.mxu0 0.0
        %3385 = vmatprep.subr.mxu0 0.0
        %3386 = vmatpush1.msra.mxu0 0.0
        %3387 = vmatprep.subr.mxu0 0.0
        %3388 = vmatpush1.msra.mxu0 0.0
        %3389 = vmatprep.subr.mxu0 0.0
        %3390 = vmatpush1.msra.mxu0 0.0
        %3391 = vmatprep.subr.mxu0 0.0
        %3392 = vmatpush1.msra.mxu0 0.0
        %3393 = vmatprep.subr.mxu0 0.0
        %3394 = vmatpush1.msra.mxu0 0.0
        %3395 = vmatprep.subr.mxu0 0.0
        %3396 = vmatpush1.msra.mxu0 0.0
        %3397 = vmatprep.subr.mxu0 0.0
        %3398 = vmatpush1.msra.mxu0 0.0
        %3399 = vmatprep.subr.mxu0 0.0
        %3400 = vmatpush1.msra.mxu0 0.0
        %3401 = vmatprep.subr.mxu0 0.0
        %3402 = vmatpush1.msra.mxu0 0.0
        %3403 = vmatprep.subr.mxu0 0.0
        %3404 = vmatpush1.msra.mxu0 0.0
        %3405 = vmatprep.subr.mxu0 0.0
        %3406 = vmatpush1.msra.mxu0 0.0
        %3407 = vmatprep.subr.mxu0 0.0
        %3408 = vmatpush1.msra.mxu0 0.0
        %3409 = vmatprep.subr.mxu0 0.0
        %3410 = vmatpush1.msra.mxu0 0.0
        %3411 = vmatprep.subr.mxu0 0.0
        %3412 = vmatpush1.msra.mxu0 0.0
        %3413 = vmatprep.subr.mxu0 0.0
        %3414 = vmatpush1.msra.mxu0 0.0
        %3415 = vmatprep.subr.mxu0 0.0
        %3416 = vmatpush1.msra.mxu0 0.0
        %3417 = vmatprep.subr.mxu0 0.0
        %3418 = vmatpush1.msra.mxu0 0.0
        %3419 = vmatprep.subr.mxu0 0.0
        %3420 = vmatpush1.msra.mxu0 0.0
        %3421 = vmatprep.subr.mxu0 0.0
        %3422 = vmatpush1.msra.mxu0 0.0
        %3423 = vmatprep.subr.mxu0 0.0
        %3424 = vmatpush1.msra.mxu0 0.0
        %3425 = vmatprep.subr.mxu0 0.0
        %3426 = vmatpush1.msra.mxu0 0.0
        %3427 = vmatprep.subr.mxu0 0.0
        %3428 = vmatpush1.msra.mxu0 0.0
        %3429 = vmatprep.mubr.f32.mxu0 0.0
        %3430 = vmatmul.mubr.f32.gmra.mrb[0].mxu0 %v3126
        %v3431 = vpop.f32.mrb[0].mxu0
        %v3432 = vadd.f32 0.0, %v3431
        %v3433 = vpop.f32.mrb[0].mxu0
        %v3434 = vadd.f32 0.0, %v3433
        %3435 = vdwg.mxu0
        %v3436 = vadd.f32 %v3039, %v3219
        %v3437 = vadd.f32 %v3040, %v3221
        %v3438 = vadd.f32 %v3041, %v3290
        %v3439 = vadd.f32 %v3042, %v3292
        %v3440 = vadd.f32 %v3043, %v3361
        %v3441 = vadd.f32 %v3044, %v3363
        %v3442 = vadd.f32 %v3045, %v3432
        %v3443 = vadd.f32 %v3046, %v3434
        %3444 = vrot.lane.b32.xlu0 %v538, 96
        %v3445 = vpop.permute.xlu0 %3444
        %3446 = vrot.lane.b32.xlu0 %v540, 96
        %v3447 = vpop.permute.xlu0 %3446
        %3448 = vrot.lane.b32.xlu0 %v609, 96
        %v3449 = vpop.permute.xlu0 %3448
        %3450 = vrot.lane.b32.xlu0 %v611, 96
        %v3451 = vpop.permute.xlu0 %3450
        %3452 = vrot.lane.b32.xlu0 %v680, 96
        %v3453 = vpop.permute.xlu0 %3452
        %3454 = vrot.lane.b32.xlu0 %v682, 96
        %v3455 = vpop.permute.xlu0 %3454
        %3456 = vrot.lane.b32.xlu0 %v751, 96
        %v3457 = vpop.permute.xlu0 %3456
        %3458 = vrot.lane.b32.xlu0 %v753, 96
        %v3459 = vpop.permute.xlu0 %3458
        %vm3460 = vcmp.lt.s32.totalorder %v772, 96
        %v3461 = vsel %vm3460, %v3457, %v3459
        %v3462 = vsel %vm3460, %v3455, %v3457
        %v3463 = vsel %vm3460, %v3453, %v3455
        %v3464 = vsel %vm3460, %v3451, %v3453
        %v3465 = vsel %vm3460, %v3449, %v3451
        %v3466 = vsel %vm3460, %v3447, %v3449
        %v3467 = vsel %vm3460, %v3445, %v3447
        %v3468 = vsel %vm3460, %v3459, %v3445
        %s3469 = scalar_lea.vmem %s3, 56
        %v3470 = vld [vmem:[%s3469] sm:$0xff]
        %v3472 = vlaneseq
        %v3473 = vshrl.u32 %v3472, 7
        %v3474 = vsub.s32 0, %v3473
        %v3475 = vrot.slane %v3470, %v3474
        %v3476 = vlaneseq
        %v3477 = vshrl.u32 %v3476, 7
        %v3478 = vsub.s32 1, %v3477
        %v3479 = vrot.slane %v3470, %v3478
        %v3480 = vlaneseq
        %v3481 = vshrl.u32 %v3480, 7
        %v3482 = vsub.s32 2, %v3481
        %v3483 = vrot.slane %v3470, %v3482
        %v3484 = vlaneseq
        %v3485 = vshrl.u32 %v3484, 7
        %v3486 = vsub.s32 3, %v3485
        %v3487 = vrot.slane %v3470, %v3486
        %v3488 = vlaneseq
        %v3489 = vshrl.u32 %v3488, 7
        %v3490 = vsub.s32 4, %v3489
        %v3491 = vrot.slane %v3470, %v3490
        %v3492 = vlaneseq
        %v3493 = vshrl.u32 %v3492, 7
        %v3494 = vsub.s32 5, %v3493
        %v3495 = vrot.slane %v3470, %v3494
        %v3496 = vlaneseq
        %v3497 = vshrl.u32 %v3496, 7
        %v3498 = vsub.s32 6, %v3497
        %v3499 = vrot.slane %v3470, %v3498
        %v3500 = vlaneseq
        %v3501 = vshrl.u32 %v3500, 7
        %v3502 = vsub.s32 7, %v3501
        %v3503 = vrot.slane %v3470, %v3502
        %v3512 = vmul.f32 %v3467, %v3475
        %v3513 = vmul.f32 %v3466, %v3479
        %v3514 = vmul.f32 %v3465, %v3483
        %v3515 = vmul.f32 %v3464, %v3487
        %v3516 = vmul.f32 %v3463, %v3491
        %v3517 = vmul.f32 %v3462, %v3495
        %v3518 = vmul.f32 %v3461, %v3499
        %v3519 = vmul.f32 %v3468, %v3503
        %s3520 = scalar_lea.vmem %s2, 56
        %v3521 = vld [vmem:[%s3520] sm:$0xff]
        %v3523 = vsel %vm911, %v3521, 0
        %v3526 = vsel %vm915, %v3512, 0
        %v3529 = vsel %vm915, %v3513, 0
        %v3532 = vsel %vm915, %v3514, 0
        %v3535 = vsel %vm915, %v3515, 0
        %v3538 = vsel %vm915, %v3516, 0
        %v3541 = vsel %vm915, %v3517, 0
        %v3544 = vsel %vm915, %v3518, 0
        %v3547 = vsel %vm915, %v3519, 0
        %3549 = vmatprep.subr.mxu0 %v3529
        %3550 = vmatpush1.msra.mxu0 %v3526
        %3551 = vmatprep.subr.mxu0 0.0
        %3552 = vmatpush1.msra.mxu0 0.0
        %3553 = vmatprep.subr.mxu0 0.0
        %3554 = vmatpush1.msra.mxu0 0.0
        %3555 = vmatprep.subr.mxu0 0.0
        %3556 = vmatpush1.msra.mxu0 0.0
        %3557 = vmatprep.subr.mxu0 0.0
        %3558 = vmatpush1.msra.mxu0 0.0
        %3559 = vmatprep.subr.mxu0 0.0
        %3560 = vmatpush1.msra.mxu0 0.0
        %3561 = vmatprep.subr.mxu0 0.0
        %3562 = vmatpush1.msra.mxu0 0.0
        %3563 = vmatprep.subr.mxu0 0.0
        %3564 = vmatpush1.msra.mxu0 0.0
        %3565 = vmatprep.subr.mxu0 0.0
        %3566 = vmatpush1.msra.mxu0 0.0
        %3567 = vmatprep.subr.mxu0 0.0
        %3568 = vmatpush1.msra.mxu0 0.0
        %3569 = vmatprep.subr.mxu0 0.0
        %3570 = vmatpush1.msra.mxu0 0.0
        %3571 = vmatprep.subr.mxu0 0.0
        %3572 = vmatpush1.msra.mxu0 0.0
        %3573 = vmatprep.subr.mxu0 0.0
        %3574 = vmatpush1.msra.mxu0 0.0
        %3575 = vmatprep.subr.mxu0 0.0
        %3576 = vmatpush1.msra.mxu0 0.0
        %3577 = vmatprep.subr.mxu0 0.0
        %3578 = vmatpush1.msra.mxu0 0.0
        %3579 = vmatprep.subr.mxu0 0.0
        %3580 = vmatpush1.msra.mxu0 0.0
        %3581 = vmatprep.subr.mxu0 0.0
        %3582 = vmatpush1.msra.mxu0 0.0
        %3583 = vmatprep.subr.mxu0 0.0
        %3584 = vmatpush1.msra.mxu0 0.0
        %3585 = vmatprep.subr.mxu0 0.0
        %3586 = vmatpush1.msra.mxu0 0.0
        %3587 = vmatprep.subr.mxu0 0.0
        %3588 = vmatpush1.msra.mxu0 0.0
        %3589 = vmatprep.subr.mxu0 0.0
        %3590 = vmatpush1.msra.mxu0 0.0
        %3591 = vmatprep.subr.mxu0 0.0
        %3592 = vmatpush1.msra.mxu0 0.0
        %3593 = vmatprep.subr.mxu0 0.0
        %3594 = vmatpush1.msra.mxu0 0.0
        %3595 = vmatprep.subr.mxu0 0.0
        %3596 = vmatpush1.msra.mxu0 0.0
        %3597 = vmatprep.subr.mxu0 0.0
        %3598 = vmatpush1.msra.mxu0 0.0
        %3599 = vmatprep.subr.mxu0 0.0
        %3600 = vmatpush1.msra.mxu0 0.0
        %3601 = vmatprep.subr.mxu0 0.0
        %3602 = vmatpush1.msra.mxu0 0.0
        %3603 = vmatprep.subr.mxu0 0.0
        %3604 = vmatpush1.msra.mxu0 0.0
        %3605 = vmatprep.subr.mxu0 0.0
        %3606 = vmatpush1.msra.mxu0 0.0
        %3607 = vmatprep.subr.mxu0 0.0
        %3608 = vmatpush1.msra.mxu0 0.0
        %3609 = vmatprep.subr.mxu0 0.0
        %3610 = vmatpush1.msra.mxu0 0.0
        %3611 = vmatprep.subr.mxu0 0.0
        %3612 = vmatpush1.msra.mxu0 0.0
        %3613 = vmatprep.mubr.f32.mxu0 0.0
        %3614 = vmatmul.mubr.f32.gmra.mrb[0].mxu0 %v3523
        %v3615 = vpop.f32.mrb[0].mxu0
        %v3616 = vadd.f32 0.0, %v3615
        %v3617 = vpop.f32.mrb[0].mxu0
        %v3618 = vadd.f32 0.0, %v3617
        %3619 = vdwg.mxu0
        %3620 = vmatprep.subr.mxu0 %v3535
        %3621 = vmatpush1.msra.mxu0 %v3532
        %3622 = vmatprep.subr.mxu0 0.0
        %3623 = vmatpush1.msra.mxu0 0.0
        %3624 = vmatprep.subr.mxu0 0.0
        %3625 = vmatpush1.msra.mxu0 0.0
        %3626 = vmatprep.subr.mxu0 0.0
        %3627 = vmatpush1.msra.mxu0 0.0
        %3628 = vmatprep.subr.mxu0 0.0
        %3629 = vmatpush1.msra.mxu0 0.0
        %3630 = vmatprep.subr.mxu0 0.0
        %3631 = vmatpush1.msra.mxu0 0.0
        %3632 = vmatprep.subr.mxu0 0.0
        %3633 = vmatpush1.msra.mxu0 0.0
        %3634 = vmatprep.subr.mxu0 0.0
        %3635 = vmatpush1.msra.mxu0 0.0
        %3636 = vmatprep.subr.mxu0 0.0
        %3637 = vmatpush1.msra.mxu0 0.0
        %3638 = vmatprep.subr.mxu0 0.0
        %3639 = vmatpush1.msra.mxu0 0.0
        %3640 = vmatprep.subr.mxu0 0.0
        %3641 = vmatpush1.msra.mxu0 0.0
        %3642 = vmatprep.subr.mxu0 0.0
        %3643 = vmatpush1.msra.mxu0 0.0
        %3644 = vmatprep.subr.mxu0 0.0
        %3645 = vmatpush1.msra.mxu0 0.0
        %3646 = vmatprep.subr.mxu0 0.0
        %3647 = vmatpush1.msra.mxu0 0.0
        %3648 = vmatprep.subr.mxu0 0.0
        %3649 = vmatpush1.msra.mxu0 0.0
        %3650 = vmatprep.subr.mxu0 0.0
        %3651 = vmatpush1.msra.mxu0 0.0
        %3652 = vmatprep.subr.mxu0 0.0
        %3653 = vmatpush1.msra.mxu0 0.0
        %3654 = vmatprep.subr.mxu0 0.0
        %3655 = vmatpush1.msra.mxu0 0.0
        %3656 = vmatprep.subr.mxu0 0.0
        %3657 = vmatpush1.msra.mxu0 0.0
        %3658 = vmatprep.subr.mxu0 0.0
        %3659 = vmatpush1.msra.mxu0 0.0
        %3660 = vmatprep.subr.mxu0 0.0
        %3661 = vmatpush1.msra.mxu0 0.0
        %3662 = vmatprep.subr.mxu0 0.0
        %3663 = vmatpush1.msra.mxu0 0.0
        %3664 = vmatprep.subr.mxu0 0.0
        %3665 = vmatpush1.msra.mxu0 0.0
        %3666 = vmatprep.subr.mxu0 0.0
        %3667 = vmatpush1.msra.mxu0 0.0
        %3668 = vmatprep.subr.mxu0 0.0
        %3669 = vmatpush1.msra.mxu0 0.0
        %3670 = vmatprep.subr.mxu0 0.0
        %3671 = vmatpush1.msra.mxu0 0.0
        %3672 = vmatprep.subr.mxu0 0.0
        %3673 = vmatpush1.msra.mxu0 0.0
        %3674 = vmatprep.subr.mxu0 0.0
        %3675 = vmatpush1.msra.mxu0 0.0
        %3676 = vmatprep.subr.mxu0 0.0
        %3677 = vmatpush1.msra.mxu0 0.0
        %3678 = vmatprep.subr.mxu0 0.0
        %3679 = vmatpush1.msra.mxu0 0.0
        %3680 = vmatprep.subr.mxu0 0.0
        %3681 = vmatpush1.msra.mxu0 0.0
        %3682 = vmatprep.subr.mxu0 0.0
        %3683 = vmatpush1.msra.mxu0 0.0
        %3684 = vmatprep.mubr.f32.mxu0 0.0
        %3685 = vmatmul.mubr.f32.gmra.mrb[0].mxu0 %v3523
        %v3686 = vpop.f32.mrb[0].mxu0
        %v3687 = vadd.f32 0.0, %v3686
        %v3688 = vpop.f32.mrb[0].mxu0
        %v3689 = vadd.f32 0.0, %v3688
        %3690 = vdwg.mxu0
        %3691 = vmatprep.subr.mxu0 %v3541
        %3692 = vmatpush1.msra.mxu0 %v3538
        %3693 = vmatprep.subr.mxu0 0.0
        %3694 = vmatpush1.msra.mxu0 0.0
        %3695 = vmatprep.subr.mxu0 0.0
        %3696 = vmatpush1.msra.mxu0 0.0
        %3697 = vmatprep.subr.mxu0 0.0
        %3698 = vmatpush1.msra.mxu0 0.0
        %3699 = vmatprep.subr.mxu0 0.0
        %3700 = vmatpush1.msra.mxu0 0.0
        %3701 = vmatprep.subr.mxu0 0.0
        %3702 = vmatpush1.msra.mxu0 0.0
        %3703 = vmatprep.subr.mxu0 0.0
        %3704 = vmatpush1.msra.mxu0 0.0
        %3705 = vmatprep.subr.mxu0 0.0
        %3706 = vmatpush1.msra.mxu0 0.0
        %3707 = vmatprep.subr.mxu0 0.0
        %3708 = vmatpush1.msra.mxu0 0.0
        %3709 = vmatprep.subr.mxu0 0.0
        %3710 = vmatpush1.msra.mxu0 0.0
        %3711 = vmatprep.subr.mxu0 0.0
        %3712 = vmatpush1.msra.mxu0 0.0
        %3713 = vmatprep.subr.mxu0 0.0
        %3714 = vmatpush1.msra.mxu0 0.0
        %3715 = vmatprep.subr.mxu0 0.0
        %3716 = vmatpush1.msra.mxu0 0.0
        %3717 = vmatprep.subr.mxu0 0.0
        %3718 = vmatpush1.msra.mxu0 0.0
        %3719 = vmatprep.subr.mxu0 0.0
        %3720 = vmatpush1.msra.mxu0 0.0
        %3721 = vmatprep.subr.mxu0 0.0
        %3722 = vmatpush1.msra.mxu0 0.0
        %3723 = vmatprep.subr.mxu0 0.0
        %3724 = vmatpush1.msra.mxu0 0.0
        %3725 = vmatprep.subr.mxu0 0.0
        %3726 = vmatpush1.msra.mxu0 0.0
        %3727 = vmatprep.subr.mxu0 0.0
        %3728 = vmatpush1.msra.mxu0 0.0
        %3729 = vmatprep.subr.mxu0 0.0
        %3730 = vmatpush1.msra.mxu0 0.0
        %3731 = vmatprep.subr.mxu0 0.0
        %3732 = vmatpush1.msra.mxu0 0.0
        %3733 = vmatprep.subr.mxu0 0.0
        %3734 = vmatpush1.msra.mxu0 0.0
        %3735 = vmatprep.subr.mxu0 0.0
        %3736 = vmatpush1.msra.mxu0 0.0
        %3737 = vmatprep.subr.mxu0 0.0
        %3738 = vmatpush1.msra.mxu0 0.0
        %3739 = vmatprep.subr.mxu0 0.0
        %3740 = vmatpush1.msra.mxu0 0.0
        %3741 = vmatprep.subr.mxu0 0.0
        %3742 = vmatpush1.msra.mxu0 0.0
        %3743 = vmatprep.subr.mxu0 0.0
        %3744 = vmatpush1.msra.mxu0 0.0
        %3745 = vmatprep.subr.mxu0 0.0
        %3746 = vmatpush1.msra.mxu0 0.0
        %3747 = vmatprep.subr.mxu0 0.0
        %3748 = vmatpush1.msra.mxu0 0.0
        %3749 = vmatprep.subr.mxu0 0.0
        %3750 = vmatpush1.msra.mxu0 0.0
        %3751 = vmatprep.subr.mxu0 0.0
        %3752 = vmatpush1.msra.mxu0 0.0
        %3753 = vmatprep.subr.mxu0 0.0
        %3754 = vmatpush1.msra.mxu0 0.0
        %3755 = vmatprep.mubr.f32.mxu0 0.0
        %3756 = vmatmul.mubr.f32.gmra.mrb[0].mxu0 %v3523
        %v3757 = vpop.f32.mrb[0].mxu0
        %v3758 = vadd.f32 0.0, %v3757
        %v3759 = vpop.f32.mrb[0].mxu0
        %v3760 = vadd.f32 0.0, %v3759
        %3761 = vdwg.mxu0
        %3762 = vmatprep.subr.mxu0 %v3547
        %3763 = vmatpush1.msra.mxu0 %v3544
        %3764 = vmatprep.subr.mxu0 0.0
        %3765 = vmatpush1.msra.mxu0 0.0
        %3766 = vmatprep.subr.mxu0 0.0
        %3767 = vmatpush1.msra.mxu0 0.0
        %3768 = vmatprep.subr.mxu0 0.0
        %3769 = vmatpush1.msra.mxu0 0.0
        %3770 = vmatprep.subr.mxu0 0.0
        %3771 = vmatpush1.msra.mxu0 0.0
        %3772 = vmatprep.subr.mxu0 0.0
        %3773 = vmatpush1.msra.mxu0 0.0
        %3774 = vmatprep.subr.mxu0 0.0
        %3775 = vmatpush1.msra.mxu0 0.0
        %3776 = vmatprep.subr.mxu0 0.0
        %3777 = vmatpush1.msra.mxu0 0.0
        %3778 = vmatprep.subr.mxu0 0.0
        %3779 = vmatpush1.msra.mxu0 0.0
        %3780 = vmatprep.subr.mxu0 0.0
        %3781 = vmatpush1.msra.mxu0 0.0
        %3782 = vmatprep.subr.mxu0 0.0
        %3783 = vmatpush1.msra.mxu0 0.0
        %3784 = vmatprep.subr.mxu0 0.0
        %3785 = vmatpush1.msra.mxu0 0.0
        %3786 = vmatprep.subr.mxu0 0.0
        %3787 = vmatpush1.msra.mxu0 0.0
        %3788 = vmatprep.subr.mxu0 0.0
        %3789 = vmatpush1.msra.mxu0 0.0
        %3790 = vmatprep.subr.mxu0 0.0
        %3791 = vmatpush1.msra.mxu0 0.0
        %3792 = vmatprep.subr.mxu0 0.0
        %3793 = vmatpush1.msra.mxu0 0.0
        %3794 = vmatprep.subr.mxu0 0.0
        %3795 = vmatpush1.msra.mxu0 0.0
        %3796 = vmatprep.subr.mxu0 0.0
        %3797 = vmatpush1.msra.mxu0 0.0
        %3798 = vmatprep.subr.mxu0 0.0
        %3799 = vmatpush1.msra.mxu0 0.0
        %3800 = vmatprep.subr.mxu0 0.0
        %3801 = vmatpush1.msra.mxu0 0.0
        %3802 = vmatprep.subr.mxu0 0.0
        %3803 = vmatpush1.msra.mxu0 0.0
        %3804 = vmatprep.subr.mxu0 0.0
        %3805 = vmatpush1.msra.mxu0 0.0
        %3806 = vmatprep.subr.mxu0 0.0
        %3807 = vmatpush1.msra.mxu0 0.0
        %3808 = vmatprep.subr.mxu0 0.0
        %3809 = vmatpush1.msra.mxu0 0.0
        %3810 = vmatprep.subr.mxu0 0.0
        %3811 = vmatpush1.msra.mxu0 0.0
        %3812 = vmatprep.subr.mxu0 0.0
        %3813 = vmatpush1.msra.mxu0 0.0
        %3814 = vmatprep.subr.mxu0 0.0
        %3815 = vmatpush1.msra.mxu0 0.0
        %3816 = vmatprep.subr.mxu0 0.0
        %3817 = vmatpush1.msra.mxu0 0.0
        %3818 = vmatprep.subr.mxu0 0.0
        %3819 = vmatpush1.msra.mxu0 0.0
        %3820 = vmatprep.subr.mxu0 0.0
        %3821 = vmatpush1.msra.mxu0 0.0
        %3822 = vmatprep.subr.mxu0 0.0
        %3823 = vmatpush1.msra.mxu0 0.0
        %3824 = vmatprep.subr.mxu0 0.0
        %3825 = vmatpush1.msra.mxu0 0.0
        %3826 = vmatprep.mubr.f32.mxu0 0.0
        %3827 = vmatmul.mubr.f32.gmra.mrb[0].mxu0 %v3523
        %v3828 = vpop.f32.mrb[0].mxu0
        %v3829 = vadd.f32 0.0, %v3828
        %v3830 = vpop.f32.mrb[0].mxu0
        %v3831 = vadd.f32 0.0, %v3830
        %3832 = vdwg.mxu0
        %v3833 = vadd.f32 %v3436, %v3616
        %v3834 = vadd.f32 %v3437, %v3618
        %v3835 = vadd.f32 %v3438, %v3687
        %v3836 = vadd.f32 %v3439, %v3689
        %v3837 = vadd.f32 %v3440, %v3758
        %v3838 = vadd.f32 %v3441, %v3760
        %v3839 = vadd.f32 %v3442, %v3829
        %v3840 = vadd.f32 %v3443, %v3831
        %3841 = vrot.lane.b32.xlu0 %v538, 95
        %v3842 = vpop.permute.xlu0 %3841
        %3843 = vrot.lane.b32.xlu0 %v540, 95
        %v3844 = vpop.permute.xlu0 %3843
        %3845 = vrot.lane.b32.xlu0 %v609, 95
        %v3846 = vpop.permute.xlu0 %3845
        %3847 = vrot.lane.b32.xlu0 %v611, 95
        %v3848 = vpop.permute.xlu0 %3847
        %3849 = vrot.lane.b32.xlu0 %v680, 95
        %v3850 = vpop.permute.xlu0 %3849
        %3851 = vrot.lane.b32.xlu0 %v682, 95
        %v3852 = vpop.permute.xlu0 %3851
        %3853 = vrot.lane.b32.xlu0 %v751, 95
        %v3854 = vpop.permute.xlu0 %3853
        %3855 = vrot.lane.b32.xlu0 %v753, 95
        %v3856 = vpop.permute.xlu0 %3855
        %vm3857 = vcmp.lt.s32.totalorder %v772, 95
        %v3858 = vsel %vm3857, %v3854, %v3856
        %v3859 = vsel %vm3857, %v3852, %v3854
        %v3860 = vsel %vm3857, %v3850, %v3852
        %v3861 = vsel %vm3857, %v3848, %v3850
        %v3862 = vsel %vm3857, %v3846, %v3848
        %v3863 = vsel %vm3857, %v3844, %v3846
        %v3864 = vsel %vm3857, %v3842, %v3844
        %v3865 = vsel %vm3857, %v3856, %v3842
        %s3866 = scalar_lea.vmem %s3, 64
        %v3867 = vld [vmem:[%s3866] sm:$0xff]
        %v3869 = vlaneseq
        %v3870 = vshrl.u32 %v3869, 7
        %v3871 = vsub.s32 0, %v3870
        %v3872 = vrot.slane %v3867, %v3871
        %v3873 = vlaneseq
        %v3874 = vshrl.u32 %v3873, 7
        %v3875 = vsub.s32 1, %v3874
        %v3876 = vrot.slane %v3867, %v3875
        %v3877 = vlaneseq
        %v3878 = vshrl.u32 %v3877, 7
        %v3879 = vsub.s32 2, %v3878
        %v3880 = vrot.slane %v3867, %v3879
        %v3881 = vlaneseq
        %v3882 = vshrl.u32 %v3881, 7
        %v3883 = vsub.s32 3, %v3882
        %v3884 = vrot.slane %v3867, %v3883
        %v3885 = vlaneseq
        %v3886 = vshrl.u32 %v3885, 7
        %v3887 = vsub.s32 4, %v3886
        %v3888 = vrot.slane %v3867, %v3887
        %v3889 = vlaneseq
        %v3890 = vshrl.u32 %v3889, 7
        %v3891 = vsub.s32 5, %v3890
        %v3892 = vrot.slane %v3867, %v3891
        %v3893 = vlaneseq
        %v3894 = vshrl.u32 %v3893, 7
        %v3895 = vsub.s32 6, %v3894
        %v3896 = vrot.slane %v3867, %v3895
        %v3897 = vlaneseq
        %v3898 = vshrl.u32 %v3897, 7
        %v3899 = vsub.s32 7, %v3898
        %v3900 = vrot.slane %v3867, %v3899
        %v3909 = vmul.f32 %v3864, %v3872
        %v3910 = vmul.f32 %v3863, %v3876
        %v3911 = vmul.f32 %v3862, %v3880
        %v3912 = vmul.f32 %v3861, %v3884
        %v3913 = vmul.f32 %v3860, %v3888
        %v3914 = vmul.f32 %v3859, %v3892
        %v3915 = vmul.f32 %v3858, %v3896
        %v3916 = vmul.f32 %v3865, %v3900
        %s3917 = scalar_lea.vmem %s2, 64
        %v3918 = vld [vmem:[%s3917] sm:$0xff]
        %v3920 = vsel %vm911, %v3918, 0
        %v3923 = vsel %vm915, %v3909, 0
        %v3926 = vsel %vm915, %v3910, 0
        %v3929 = vsel %vm915, %v3911, 0
        %v3932 = vsel %vm915, %v3912, 0
        %v3935 = vsel %vm915, %v3913, 0
        %v3938 = vsel %vm915, %v3914, 0
        %v3941 = vsel %vm915, %v3915, 0
        %v3944 = vsel %vm915, %v3916, 0
        %3946 = vmatprep.subr.mxu0 %v3926
        %3947 = vmatpush1.msra.mxu0 %v3923
        %3948 = vmatprep.subr.mxu0 0.0
        %3949 = vmatpush1.msra.mxu0 0.0
        %3950 = vmatprep.subr.mxu0 0.0
        %3951 = vmatpush1.msra.mxu0 0.0
        %3952 = vmatprep.subr.mxu0 0.0
        %3953 = vmatpush1.msra.mxu0 0.0
        %3954 = vmatprep.subr.mxu0 0.0
        %3955 = vmatpush1.msra.mxu0 0.0
        %3956 = vmatprep.subr.mxu0 0.0
        %3957 = vmatpush1.msra.mxu0 0.0
        %3958 = vmatprep.subr.mxu0 0.0
        %3959 = vmatpush1.msra.mxu0 0.0
        %3960 = vmatprep.subr.mxu0 0.0
        %3961 = vmatpush1.msra.mxu0 0.0
        %3962 = vmatprep.subr.mxu0 0.0
        %3963 = vmatpush1.msra.mxu0 0.0
        %3964 = vmatprep.subr.mxu0 0.0
        %3965 = vmatpush1.msra.mxu0 0.0
        %3966 = vmatprep.subr.mxu0 0.0
        %3967 = vmatpush1.msra.mxu0 0.0
        %3968 = vmatprep.subr.mxu0 0.0
        %3969 = vmatpush1.msra.mxu0 0.0
        %3970 = vmatprep.subr.mxu0 0.0
        %3971 = vmatpush1.msra.mxu0 0.0
        %3972 = vmatprep.subr.mxu0 0.0
        %3973 = vmatpush1.msra.mxu0 0.0
        %3974 = vmatprep.subr.mxu0 0.0
        %3975 = vmatpush1.msra.mxu0 0.0
        %3976 = vmatprep.subr.mxu0 0.0
        %3977 = vmatpush1.msra.mxu0 0.0
        %3978 = vmatprep.subr.mxu0 0.0
        %3979 = vmatpush1.msra.mxu0 0.0
        %3980 = vmatprep.subr.mxu0 0.0
        %3981 = vmatpush1.msra.mxu0 0.0
        %3982 = vmatprep.subr.mxu0 0.0
        %3983 = vmatpush1.msra.mxu0 0.0
        %3984 = vmatprep.subr.mxu0 0.0
        %3985 = vmatpush1.msra.mxu0 0.0
        %3986 = vmatprep.subr.mxu0 0.0
        %3987 = vmatpush1.msra.mxu0 0.0
        %3988 = vmatprep.subr.mxu0 0.0
        %3989 = vmatpush1.msra.mxu0 0.0
        %3990 = vmatprep.subr.mxu0 0.0
        %3991 = vmatpush1.msra.mxu0 0.0
        %3992 = vmatprep.subr.mxu0 0.0
        %3993 = vmatpush1.msra.mxu0 0.0
        %3994 = vmatprep.subr.mxu0 0.0
        %3995 = vmatpush1.msra.mxu0 0.0
        %3996 = vmatprep.subr.mxu0 0.0
        %3997 = vmatpush1.msra.mxu0 0.0
        %3998 = vmatprep.subr.mxu0 0.0
        %3999 = vmatpush1.msra.mxu0 0.0
        %4000 = vmatprep.subr.mxu0 0.0
        %4001 = vmatpush1.msra.mxu0 0.0
        %4002 = vmatprep.subr.mxu0 0.0
        %4003 = vmatpush1.msra.mxu0 0.0
        %4004 = vmatprep.subr.mxu0 0.0
        %4005 = vmatpush1.msra.mxu0 0.0
        %4006 = vmatprep.subr.mxu0 0.0
        %4007 = vmatpush1.msra.mxu0 0.0
        %4008 = vmatprep.subr.mxu0 0.0
        %4009 = vmatpush1.msra.mxu0 0.0
        %4010 = vmatprep.mubr.f32.mxu0 0.0
        %4011 = vmatmul.mubr.f32.gmra.mrb[0].mxu0 %v3920
        %v4012 = vpop.f32.mrb[0].mxu0
        %v4013 = vadd.f32 0.0, %v4012
        %v4014 = vpop.f32.mrb[0].mxu0
        %v4015 = vadd.f32 0.0, %v4014
        %4016 = vdwg.mxu0
        %4017 = vmatprep.subr.mxu0 %v3932
        %4018 = vmatpush1.msra.mxu0 %v3929
        %4019 = vmatprep.subr.mxu0 0.0
        %4020 = vmatpush1.msra.mxu0 0.0
        %4021 = vmatprep.subr.mxu0 0.0
        %4022 = vmatpush1.msra.mxu0 0.0
        %4023 = vmatprep.subr.mxu0 0.0
        %4024 = vmatpush1.msra.mxu0 0.0
        %4025 = vmatprep.subr.mxu0 0.0
        %4026 = vmatpush1.msra.mxu0 0.0
        %4027 = vmatprep.subr.mxu0 0.0
        %4028 = vmatpush1.msra.mxu0 0.0
        %4029 = vmatprep.subr.mxu0 0.0
        %4030 = vmatpush1.msra.mxu0 0.0
        %4031 = vmatprep.subr.mxu0 0.0
        %4032 = vmatpush1.msra.mxu0 0.0
        %4033 = vmatprep.subr.mxu0 0.0
        %4034 = vmatpush1.msra.mxu0 0.0
        %4035 = vmatprep.subr.mxu0 0.0
        %4036 = vmatpush1.msra.mxu0 0.0
        %4037 = vmatprep.subr.mxu0 0.0
        %4038 = vmatpush1.msra.mxu0 0.0
        %4039 = vmatprep.subr.mxu0 0.0
        %4040 = vmatpush1.msra.mxu0 0.0
        %4041 = vmatprep.subr.mxu0 0.0
        %4042 = vmatpush1.msra.mxu0 0.0
        %4043 = vmatprep.subr.mxu0 0.0
        %4044 = vmatpush1.msra.mxu0 0.0
        %4045 = vmatprep.subr.mxu0 0.0
        %4046 = vmatpush1.msra.mxu0 0.0
        %4047 = vmatprep.subr.mxu0 0.0
        %4048 = vmatpush1.msra.mxu0 0.0
        %4049 = vmatprep.subr.mxu0 0.0
        %4050 = vmatpush1.msra.mxu0 0.0
        %4051 = vmatprep.subr.mxu0 0.0
        %4052 = vmatpush1.msra.mxu0 0.0
        %4053 = vmatprep.subr.mxu0 0.0
        %4054 = vmatpush1.msra.mxu0 0.0
        %4055 = vmatprep.subr.mxu0 0.0
        %4056 = vmatpush1.msra.mxu0 0.0
        %4057 = vmatprep.subr.mxu0 0.0
        %4058 = vmatpush1.msra.mxu0 0.0
        %4059 = vmatprep.subr.mxu0 0.0
        %4060 = vmatpush1.msra.mxu0 0.0
        %4061 = vmatprep.subr.mxu0 0.0
        %4062 = vmatpush1.msra.mxu0 0.0
        %4063 = vmatprep.subr.mxu0 0.0
        %4064 = vmatpush1.msra.mxu0 0.0
        %4065 = vmatprep.subr.mxu0 0.0
        %4066 = vmatpush1.msra.mxu0 0.0
        %4067 = vmatprep.subr.mxu0 0.0
        %4068 = vmatpush1.msra.mxu0 0.0
        %4069 = vmatprep.subr.mxu0 0.0
        %4070 = vmatpush1.msra.mxu0 0.0
        %4071 = vmatprep.subr.mxu0 0.0
        %4072 = vmatpush1.msra.mxu0 0.0
        %4073 = vmatprep.subr.mxu0 0.0
        %4074 = vmatpush1.msra.mxu0 0.0
        %4075 = vmatprep.subr.mxu0 0.0
        %4076 = vmatpush1.msra.mxu0 0.0
        %4077 = vmatprep.subr.mxu0 0.0
        %4078 = vmatpush1.msra.mxu0 0.0
        %4079 = vmatprep.subr.mxu0 0.0
        %4080 = vmatpush1.msra.mxu0 0.0
        %4081 = vmatprep.mubr.f32.mxu0 0.0
        %4082 = vmatmul.mubr.f32.gmra.mrb[0].mxu0 %v3920
        %v4083 = vpop.f32.mrb[0].mxu0
        %v4084 = vadd.f32 0.0, %v4083
        %v4085 = vpop.f32.mrb[0].mxu0
        %v4086 = vadd.f32 0.0, %v4085
        %4087 = vdwg.mxu0
        %4088 = vmatprep.subr.mxu0 %v3938
        %4089 = vmatpush1.msra.mxu0 %v3935
        %4090 = vmatprep.subr.mxu0 0.0
        %4091 = vmatpush1.msra.mxu0 0.0
        %4092 = vmatprep.subr.mxu0 0.0
        %4093 = vmatpush1.msra.mxu0 0.0
        %4094 = vmatprep.subr.mxu0 0.0
        %4095 = vmatpush1.msra.mxu0 0.0
        %4096 = vmatprep.subr.mxu0 0.0
        %4097 = vmatpush1.msra.mxu0 0.0
        %4098 = vmatprep.subr.mxu0 0.0
        %4099 = vmatpush1.msra.mxu0 0.0
        %4100 = vmatprep.subr.mxu0 0.0
        %4101 = vmatpush1.msra.mxu0 0.0
        %4102 = vmatprep.subr.mxu0 0.0
        %4103 = vmatpush1.msra.mxu0 0.0
        %4104 = vmatprep.subr.mxu0 0.0
        %4105 = vmatpush1.msra.mxu0 0.0
        %4106 = vmatprep.subr.mxu0 0.0
        %4107 = vmatpush1.msra.mxu0 0.0
        %4108 = vmatprep.subr.mxu0 0.0
        %4109 = vmatpush1.msra.mxu0 0.0
        %4110 = vmatprep.subr.mxu0 0.0
        %4111 = vmatpush1.msra.mxu0 0.0
        %4112 = vmatprep.subr.mxu0 0.0
        %4113 = vmatpush1.msra.mxu0 0.0
        %4114 = vmatprep.subr.mxu0 0.0
        %4115 = vmatpush1.msra.mxu0 0.0
        %4116 = vmatprep.subr.mxu0 0.0
        %4117 = vmatpush1.msra.mxu0 0.0
        %4118 = vmatprep.subr.mxu0 0.0
        %4119 = vmatpush1.msra.mxu0 0.0
        %4120 = vmatprep.subr.mxu0 0.0
        %4121 = vmatpush1.msra.mxu0 0.0
        %4122 = vmatprep.subr.mxu0 0.0
        %4123 = vmatpush1.msra.mxu0 0.0
        %4124 = vmatprep.subr.mxu0 0.0
        %4125 = vmatpush1.msra.mxu0 0.0
        %4126 = vmatprep.subr.mxu0 0.0
        %4127 = vmatpush1.msra.mxu0 0.0
        %4128 = vmatprep.subr.mxu0 0.0
        %4129 = vmatpush1.msra.mxu0 0.0
        %4130 = vmatprep.subr.mxu0 0.0
        %4131 = vmatpush1.msra.mxu0 0.0
        %4132 = vmatprep.subr.mxu0 0.0
        %4133 = vmatpush1.msra.mxu0 0.0
        %4134 = vmatprep.subr.mxu0 0.0
        %4135 = vmatpush1.msra.mxu0 0.0
        %4136 = vmatprep.subr.mxu0 0.0
        %4137 = vmatpush1.msra.mxu0 0.0
        %4138 = vmatprep.subr.mxu0 0.0
        %4139 = vmatpush1.msra.mxu0 0.0
        %4140 = vmatprep.subr.mxu0 0.0
        %4141 = vmatpush1.msra.mxu0 0.0
        %4142 = vmatprep.subr.mxu0 0.0
        %4143 = vmatpush1.msra.mxu0 0.0
        %4144 = vmatprep.subr.mxu0 0.0
        %4145 = vmatpush1.msra.mxu0 0.0
        %4146 = vmatprep.subr.mxu0 0.0
        %4147 = vmatpush1.msra.mxu0 0.0
        %4148 = vmatprep.subr.mxu0 0.0
        %4149 = vmatpush1.msra.mxu0 0.0
        %4150 = vmatprep.subr.mxu0 0.0
        %4151 = vmatpush1.msra.mxu0 0.0
        %4152 = vmatprep.mubr.f32.mxu0 0.0
        %4153 = vmatmul.mubr.f32.gmra.mrb[0].mxu0 %v3920
        %v4154 = vpop.f32.mrb[0].mxu0
        %v4155 = vadd.f32 0.0, %v4154
        %v4156 = vpop.f32.mrb[0].mxu0
        %v4157 = vadd.f32 0.0, %v4156
        %4158 = vdwg.mxu0
        %4159 = vmatprep.subr.mxu0 %v3944
        %4160 = vmatpush1.msra.mxu0 %v3941
        %4161 = vmatprep.subr.mxu0 0.0
        %4162 = vmatpush1.msra.mxu0 0.0
        %4163 = vmatprep.subr.mxu0 0.0
        %4164 = vmatpush1.msra.mxu0 0.0
        %4165 = vmatprep.subr.mxu0 0.0
        %4166 = vmatpush1.msra.mxu0 0.0
        %4167 = vmatprep.subr.mxu0 0.0
        %4168 = vmatpush1.msra.mxu0 0.0
        %4169 = vmatprep.subr.mxu0 0.0
        %4170 = vmatpush1.msra.mxu0 0.0
        %4171 = vmatprep.subr.mxu0 0.0
        %4172 = vmatpush1.msra.mxu0 0.0
        %4173 = vmatprep.subr.mxu0 0.0
        %4174 = vmatpush1.msra.mxu0 0.0
        %4175 = vmatprep.subr.mxu0 0.0
        %4176 = vmatpush1.msra.mxu0 0.0
        %4177 = vmatprep.subr.mxu0 0.0
        %4178 = vmatpush1.msra.mxu0 0.0
        %4179 = vmatprep.subr.mxu0 0.0
        %4180 = vmatpush1.msra.mxu0 0.0
        %4181 = vmatprep.subr.mxu0 0.0
        %4182 = vmatpush1.msra.mxu0 0.0
        %4183 = vmatprep.subr.mxu0 0.0
        %4184 = vmatpush1.msra.mxu0 0.0
        %4185 = vmatprep.subr.mxu0 0.0
        %4186 = vmatpush1.msra.mxu0 0.0
        %4187 = vmatprep.subr.mxu0 0.0
        %4188 = vmatpush1.msra.mxu0 0.0
        %4189 = vmatprep.subr.mxu0 0.0
        %4190 = vmatpush1.msra.mxu0 0.0
        %4191 = vmatprep.subr.mxu0 0.0
        %4192 = vmatpush1.msra.mxu0 0.0
        %4193 = vmatprep.subr.mxu0 0.0
        %4194 = vmatpush1.msra.mxu0 0.0
        %4195 = vmatprep.subr.mxu0 0.0
        %4196 = vmatpush1.msra.mxu0 0.0
        %4197 = vmatprep.subr.mxu0 0.0
        %4198 = vmatpush1.msra.mxu0 0.0
        %4199 = vmatprep.subr.mxu0 0.0
        %4200 = vmatpush1.msra.mxu0 0.0
        %4201 = vmatprep.subr.mxu0 0.0
        %4202 = vmatpush1.msra.mxu0 0.0
        %4203 = vmatprep.subr.mxu0 0.0
        %4204 = vmatpush1.msra.mxu0 0.0
        %4205 = vmatprep.subr.mxu0 0.0
        %4206 = vmatpush1.msra.mxu0 0.0
        %4207 = vmatprep.subr.mxu0 0.0
        %4208 = vmatpush1.msra.mxu0 0.0
        %4209 = vmatprep.subr.mxu0 0.0
        %4210 = vmatpush1.msra.mxu0 0.0
        %4211 = vmatprep.subr.mxu0 0.0
        %4212 = vmatpush1.msra.mxu0 0.0
        %4213 = vmatprep.subr.mxu0 0.0
        %4214 = vmatpush1.msra.mxu0 0.0
        %4215 = vmatprep.subr.mxu0 0.0
        %4216 = vmatpush1.msra.mxu0 0.0
        %4217 = vmatprep.subr.mxu0 0.0
        %4218 = vmatpush1.msra.mxu0 0.0
        %4219 = vmatprep.subr.mxu0 0.0
        %4220 = vmatpush1.msra.mxu0 0.0
        %4221 = vmatprep.subr.mxu0 0.0
        %4222 = vmatpush1.msra.mxu0 0.0
        %4223 = vmatprep.mubr.f32.mxu0 0.0
        %4224 = vmatmul.mubr.f32.gmra.mrb[0].mxu0 %v3920
        %v4225 = vpop.f32.mrb[0].mxu0
        %v4226 = vadd.f32 0.0, %v4225
        %v4227 = vpop.f32.mrb[0].mxu0
        %v4228 = vadd.f32 0.0, %v4227
        %4229 = vdwg.mxu0
        %v4230 = vadd.f32 %v3833, %v4013
        %v4231 = vadd.f32 %v3834, %v4015
        %v4232 = vadd.f32 %v3835, %v4084
        %v4233 = vadd.f32 %v3836, %v4086
        %v4234 = vadd.f32 %v3837, %v4155
        %v4235 = vadd.f32 %v3838, %v4157
        %v4236 = vadd.f32 %v3839, %v4226
        %v4237 = vadd.f32 %v3840, %v4228
        %4238 = vst [vmem:[%s205] sm:$0xff] %v4230
        %4239 = vst [vmem:[%s205 + $0x8] sm:$0xff] %v4231
        %4240 = vst [vmem:[%s205 + $0x10] sm:$0xff] %v4232
        %4241 = vst [vmem:[%s205 + $0x18] sm:$0xff] %v4233
        %4242 = vst [vmem:[%s205 + $0x20] sm:$0xff] %v4234
        %4243 = vst [vmem:[%s205 + $0x28] sm:$0xff] %v4235
        %4244 = vst [vmem:[%s205 + $0x30] sm:$0xff] %v4236
        %4245 = vst [vmem:[%s205 + $0x38] sm:$0xff] %v4237
        %s4246 = sand.u32 %s116, 1
        %s4247 = scalar_lea.sflag [#allocation4], %s4246
        %s4248 = sand.u32 %s116, 1
        %s4249 = smul.addr %s4248, 64
        %s4250 = scalar_lea.vmem [#allocation5], %s4249
        // Predicated region
        $region41: #{tpu_custom_call.1} parent=35 // pred_check
          %p4251 = pneg %p126
        $region42: #{tpu_custom_call.1} parent=35 // pred_check_branch
          %4253 = sbr.rel (%p4251) target = $region44
        $region43: #{tpu_custom_call.1} parent=35 // pred_region
          %s4255 = ssub.s32 1024, 1024
          %4256 = vsyncadd %s4247, %s4255
          %s4257 = smul.addr %s19, 8
          %s4258 = smul.addr %s4257, 128
          %s4259 = scalar_lea.hbm %s4, %s4258
          %s4261 = sshll.u32 %s4250, 4
          %s4262 = int_to_ptr.vmem [resolvable:$true] %s4261
          %4264 = dma.vmem_to_hbm [thread:$0]  %s4262, 1024, %s4259, %s4247
        $region44: #{tpu_custom_call.1} parent=35 // pred_fallthru
          _
      $region36: #{tpu_custom_call.1} parent=5 // pred_fallthru
        _
      %p4265 = scmp.le.s32.totalorder 2, %s14
      // Predicated region
      $region45: #{tpu_custom_call.1} parent=5 // pred_check
        %p4266 = pneg %p4265
      $region46: #{tpu_custom_call.1} parent=5 // pred_check_branch
        %4268 = sbr.rel (%p4266) target = $region48
      $region47: #{tpu_custom_call.1} parent=5 // pred_region
        %s4269 = ssub.s32 %s14, 2
        // Predicated region
        $region49: #{tpu_custom_call.1} parent=47 // pred_check
          %p4270 = pneg %p132
        $region50: #{tpu_custom_call.1} parent=47 // pred_check_branch
          %4272 = sbr.rel (%p4270) target = $region52
        $region51: #{tpu_custom_call.1} parent=47 // pred_region
          %s4273 = sand.u32 %s117, 1
          %s4274 = scalar_lea.sflag [#allocation4], %s4273
          %s4275 = sand.u32 %s117, 1
          %s4276 = smul.addr %s4275, 64
          %s4277 = scalar_lea.vmem [#allocation5], %s4276
          %4278 = dma.done %s4274, 1024
        $region52: #{tpu_custom_call.1} parent=47 // pred_fallthru
          _
      $region48: #{tpu_custom_call.1} parent=5 // pred_fallthru
        _
    $region6: #{tpu_custom_call.1} parent=1 // loop_footer
      %s18 = sadd.s32 1, %s14
    $region7: #{tpu_custom_call.1} parent=1 // loop_footer_branch
      %13 = sbr.rel target = $region3
    $region8: #{tpu_custom_call.1} parent=1 // loop_exit
      _
    %4279 = vsyncpa [#allocation3], 1
    %s4280 = scalar_lea.sflag [#allocation3], 1
    %4281 = vsyncpa %s4280, 1
    %4282 = vsyncpa [#allocation4], 1
    %s4283 = scalar_lea.sflag [#allocation4], 1
    %4284 = vsyncpa %s4283, 1

</llo_original>
